<compile_context>
chip_gen: v5e
topology: v5e:2x2
jax: 0.10.0
libtpu: 0.0.40
codegen_flags: <defaults>
</compile_context>

<pallas_src>
import math

import jax
import jax.numpy as jnp
from jax.experimental import pallas as pl
from jax.experimental.pallas import tpu as pltpu

D_MODEL = 32
NHEAD = 4
DIM_FF = 64
EPS = 1e-5


def _layernorm(x, gamma, beta, eps):
    mu = jnp.mean(x, axis=-1, keepdims=True)
    var = jnp.mean(jnp.square(x - mu), axis=-1, keepdims=True)
    return (x - mu) * jax.lax.rsqrt(var + eps) * gamma + beta


def _gelu_exact(x):
    # torch.nn.functional.gelu default = exact erf-based GELU
    return 0.5 * x * (1.0 + jax.lax.erf(x * 0.7071067811865476))


def mab_kernel(tgt_ref, mem_ref,
               wq_ref, wkv_ref, bq_ref, bkv_ref,
               wo_ref, bo_ref,
               w1_ref, w2_ref,
               g1_ref, be1_ref, g2_ref, be2_ref,
               out_ref,
               attn_sc):
    NB, L, E = tgt_ref.shape
    S = mem_ref.shape[1]
    H = NHEAD
    Dh = E // H
    scale = 1.0 / math.sqrt(Dh)

    # Flatten the batch tile: projections / FFN / LayerNorms run as single
    # (NB*L, E) matmuls, filling the MXU sublane dimension instead of issuing
    # 8-row dots per batch element.
    x = tgt_ref[...].astype(jnp.float32).reshape(NB * L, E)
    mem = mem_ref[...].astype(jnp.float32).reshape(NB * S, E)

    # Q projection (one dot) + fused [K|V] projection (one dot, 2E output lanes).
    q = jnp.dot(x, wq_ref[...], preferred_element_type=jnp.float32) + bq_ref[...]
    kv = jnp.dot(mem, wkv_ref[...], preferred_element_type=jnp.float32) + bkv_ref[...]

    # Attention: per-head dots batched over NB via 3-D einsum (single
    # dot_general per head with batch dim NB).  Head outputs are stored to
    # VMEM scratch at static lane offsets -> no lane-axis concatenate.
    for h in range(H):
        qh = q[:, h * Dh:(h + 1) * Dh].reshape(NB, L, Dh)
        kh = kv[:, h * Dh:(h + 1) * Dh].reshape(NB, S, Dh)
        vh = kv[:, E + h * Dh:E + (h + 1) * Dh].reshape(NB, S, Dh)
        s = jnp.einsum('bld,bsd->bls', qh, kh,
                       preferred_element_type=jnp.float32) * scale
        s = s - jnp.max(s, axis=-1, keepdims=True)
        p = jnp.exp(s)
        # EUP approximate reciprocal instead of a VALU divide chain.
        p = p * pl.reciprocal(jnp.sum(p, axis=-1, keepdims=True), approx=True)
        ah = jnp.einsum('bls,bsd->bld', p, vh,
                        preferred_element_type=jnp.float32)
        attn_sc[:, h * Dh:(h + 1) * Dh] = ah.reshape(NB * L, Dh)

    # MHA output projection.
    attn = jnp.dot(attn_sc[...], wo_ref[...],
                   preferred_element_type=jnp.float32) + bo_ref[...]

    # residual + norm1  (dropout2 = identity)
    y = _layernorm(x + attn, g1_ref[...], be1_ref[...], EPS)

    # feed-forward: linear1 (no bias) -> exact GELU -> linear2 (no bias)
    hdn = _gelu_exact(jnp.dot(y, w1_ref[...], preferred_element_type=jnp.float32))
    ff = jnp.dot(hdn, w2_ref[...], preferred_element_type=jnp.float32)

    # residual + norm2  (dropout1/3 = identity)
    z = _layernorm(y + ff, g2_ref[...], be2_ref[...], EPS)

    out_ref[...] = z.reshape(NB, L, E).astype(out_ref.dtype)


def _choose_batch_tile(n, target=16):
    """Batch elements per grid step.  Keeps >= 2 grid steps whenever N >= 2 so
    both TensorCores on v7x get work; target*L rows fills the MXU for large N."""
    if n <= 1:
        return 1
    return max(1, min(target, n // 2))


def mab_forward(tgt, memory, params, nb_target=16):
    """tgt: (L, N, E), memory: (S, N, E)  ->  (L, N, E)"""
    L, N, E = tgt.shape
    S = memory.shape[0]
    dim_ff = params[6].shape[1]          # w1_t is (E, F)

    nb = _choose_batch_tile(N, nb_target)
    n_pad = pl.cdiv(N, nb) * nb

    tgt_b = jnp.transpose(tgt, (1, 0, 2))       # (N, L, E)
    mem_b = jnp.transpose(memory, (1, 0, 2))    # (N, S, E)
    if n_pad != N:
        tgt_b = jnp.pad(tgt_b, ((0, n_pad - N), (0, 0), (0, 0)))
        mem_b = jnp.pad(mem_b, ((0, n_pad - N), (0, 0), (0, 0)))

    def full(shape):
        return pl.BlockSpec(shape, lambda b: (0,) * len(shape))

    grid_spec = pltpu.PrefetchScalarGridSpec(
        num_scalar_prefetch=0,
        grid=(n_pad // nb,),
        in_specs=[
            pl.BlockSpec((nb, L, E), lambda b: (b, 0, 0)),   # tgt tile
            pl.BlockSpec((nb, S, E), lambda b: (b, 0, 0)),   # memory tile
            full((E, E)),            # Wq^T
            full((E, 2 * E)),        # [Wk|Wv]^T fused
            full((1, E)),            # bq
            full((1, 2 * E)),        # [bk|bv] fused
            full((E, E)), full((1, E)),          # Wo^T, bo
            full((E, dim_ff)), full((dim_ff, E)),  # W1^T, W2^T
            full((1, E)), full((1, E)),          # norm1 gamma/beta
            full((1, E)), full((1, E)),          # norm2 gamma/beta
        ],
        out_specs=pl.BlockSpec((nb, L, E), lambda b: (b, 0, 0)),
        scratch_shapes=[pltpu.VMEM((nb * L, E), jnp.float32)],   # head outputs
    )
    out = pl.pallas_call(
        mab_kernel,
        out_shape=jax.ShapeDtypeStruct((n_pad, L, E), tgt.dtype),
        grid_spec=grid_spec,
        compiler_params=pltpu.CompilerParams(dimension_semantics=("parallel",)),
    )(tgt_b, mem_b, *params)
    return jnp.transpose(out[:N], (1, 0, 2))


def mab_reference(tgt, memory, params):
    """Pure-JAX reference with identical semantics (unfused weights)."""
    (wq, wk, wv, bq, bk, bv, wo, bo, w1, w2, g1, be1, g2, be2) = params
    x = jnp.transpose(tgt, (1, 0, 2)).astype(jnp.float32)     # (N, L, E)
    mem = jnp.transpose(memory, (1, 0, 2)).astype(jnp.float32)
    N, L, E = x.shape
    S = mem.shape[1]
    H, Dh = NHEAD, E // NHEAD
    q = x @ wq + bq
    k = mem @ wk + bk
    v = mem @ wv + bv
    qh = q.reshape(N, L, H, Dh).transpose(0, 2, 1, 3)
    kh = k.reshape(N, S, H, Dh).transpose(0, 2, 1, 3)
    vh = v.reshape(N, S, H, Dh).transpose(0, 2, 1, 3)
    s = jnp.einsum('nhld,nhsd->nhls', qh, kh) / math.sqrt(Dh)
    p = jax.nn.softmax(s, axis=-1)
    a = jnp.einsum('nhls,nhsd->nhld', p, vh).transpose(0, 2, 1, 3).reshape(N, L, E)
    a = a @ wo + bo
    y = _layernorm(x + a, g1, be1, EPS)
    ff = _gelu_exact(y @ w1) @ w2
    z = _layernorm(y + ff, g2, be2, EPS)
    return jnp.transpose(z, (1, 0, 2))


if __name__ == "__main__":
    L, N, S, E, F = 8, 16, 16, D_MODEL, DIM_FF   # small shapes; N=16 exercises batch tiling

    key = jax.random.PRNGKey(0)
    keys = jax.random.split(key, 12)

    tgt = jax.random.normal(keys[0], (L, N, E), jnp.float32)
    memory = jax.random.normal(keys[1], (S, N, E), jnp.float32)

    sc = 0.1
    # nn.MultiheadAttention parameters (PyTorch shapes), deterministic synthetic init
    in_proj_w = sc * jax.random.normal(keys[2], (3 * E, E), jnp.float32)   # (3E, E)
    in_proj_b = sc * jax.random.normal(keys[3], (3 * E,), jnp.float32)     # (3E,)
    wo = sc * jax.random.normal(keys[4], (E, E), jnp.float32)              # out_proj.weight
    bo = sc * jax.random.normal(keys[5], (E,), jnp.float32)                # out_proj.bias
    # feed-forward (bias=False in MAB)
    w1 = sc * jax.random.normal(keys[6], (F, E), jnp.float32)              # linear1.weight
    w2 = sc * jax.random.normal(keys[7], (E, F), jnp.float32)              # linear2.weight
    # LayerNorm affine params (perturbed from default 1/0 to exercise the math)
    g1 = jnp.ones((E,), jnp.float32) + 0.05 * jax.random.normal(keys[8], (E,), jnp.float32)
    be1 = 0.05 * jax.random.normal(keys[9], (E,), jnp.float32)
    g2 = jnp.ones((E,), jnp.float32) + 0.05 * jax.random.normal(keys[10], (E,), jnp.float32)
    be2 = 0.05 * jax.random.normal(keys[11], (E,), jnp.float32)

    wq, wk, wv = in_proj_w[:E], in_proj_w[E:2 * E], in_proj_w[2 * E:]
    bq, bk, bv = in_proj_b[:E], in_proj_b[E:2 * E], in_proj_b[2 * E:]

    # Kernel params: weights pre-transposed for right-multiplication; K/V fused.
    kernel_params = (
        wq.T,
        jnp.concatenate([wk.T, wv.T], axis=1),           # (E, 2E)
        bq.reshape(1, E),
        jnp.concatenate([bk, bv]).reshape(1, 2 * E),     # (1, 2E)
        wo.T, bo.reshape(1, E),
        w1.T, w2.T,
        g1.reshape(1, E), be1.reshape(1, E),
        g2.reshape(1, E), be2.reshape(1, E),
    )
    # Reference params: unfused, same pre-transposed layout.
    ref_params = (
        wq.T, wk.T, wv.T,
        bq.reshape(1, E), bk.reshape(1, E), bv.reshape(1, E),
        wo.T, bo.reshape(1, E),
        w1.T, w2.T,
        g1.reshape(1, E), be1.reshape(1, E),
        g2.reshape(1, E), be2.reshape(1, E),
    )

    out = jax.block_until_ready(mab_forward(tgt, memory, kernel_params))
    ref = mab_reference(tgt, memory, ref_params)

    assert out.shape == (L, N, E)
    # Tolerance 1e-3 (vs 1e-4 previously) accommodates the EUP approximate
    # reciprocal in the softmax normalization; all other math is f32.
    assert jnp.allclose(out, ref, atol=1e-3, rtol=1e-3), "Pallas output mismatch vs reference"

    print("KERNEL_OK")
</pallas_src>

<mosaic_0001>
module attributes {stable_mosaic.version = 11 : i64} {
  func.func @mab_kernel(%arg0: i32, %arg1: memref<8x8x32xf32, #tpu.memory_space<vmem>>, %arg2: memref<8x16x32xf32, #tpu.memory_space<vmem>>, %arg3: memref<32x32xf32, #tpu.memory_space<vmem>>, %arg4: memref<32x64xf32, #tpu.memory_space<vmem>>, %arg5: memref<1x32xf32, #tpu.memory_space<vmem>>, %arg6: memref<1x64xf32, #tpu.memory_space<vmem>>, %arg7: memref<32x32xf32, #tpu.memory_space<vmem>>, %arg8: memref<1x32xf32, #tpu.memory_space<vmem>>, %arg9: memref<32x64xf32, #tpu.memory_space<vmem>>, %arg10: memref<64x32xf32, #tpu.memory_space<vmem>>, %arg11: memref<1x32xf32, #tpu.memory_space<vmem>>, %arg12: memref<1x32xf32, #tpu.memory_space<vmem>>, %arg13: memref<1x32xf32, #tpu.memory_space<vmem>>, %arg14: memref<1x32xf32, #tpu.memory_space<vmem>>, %arg15: memref<8x8x32xf32, #tpu.memory_space<vmem>>, %arg16: memref<64x32xf32, #tpu.memory_space<vmem>>) attributes {dimension_semantics = [#tpu.dimension_semantics<parallel>], iteration_bounds = array<i64: 2>, scalar_prefetch = 0 : i64, scratch_operands = 1 : i64, tpu.core_type = #tpu.core_type<tc>, window_params = [{transform_indices = @transform_0, window_bounds = array<i64: 8, 8, 32>}, {transform_indices = @transform_1, window_bounds = array<i64: 8, 16, 32>}, {pipeline_mode = #tpu.pipeline_mode<synchronous>, transform_indices = @transform_2, window_bounds = array<i64: 32, 32>}, {pipeline_mode = #tpu.pipeline_mode<synchronous>, transform_indices = @transform_3, window_bounds = array<i64: 32, 64>}, {pipeline_mode = #tpu.pipeline_mode<synchronous>, transform_indices = @transform_4, window_bounds = array<i64: 1, 32>}, {pipeline_mode = #tpu.pipeline_mode<synchronous>, transform_indices = @transform_5, window_bounds = array<i64: 1, 64>}, {pipeline_mode = #tpu.pipeline_mode<synchronous>, transform_indices = @transform_6, window_bounds = array<i64: 32, 32>}, {pipeline_mode = #tpu.pipeline_mode<synchronous>, transform_indices = @transform_7, window_bounds = array<i64: 1, 32>}, {pipeline_mode = #tpu.pipeline_mode<synchronous>, transform_indices = @transform_8, window_bounds = array<i64: 32, 64>}, {pipeline_mode = #tpu.pipeline_mode<synchronous>, transform_indices = @transform_9, window_bounds = array<i64: 64, 32>}, {pipeline_mode = #tpu.pipeline_mode<synchronous>, transform_indices = @transform_10, window_bounds = array<i64: 1, 32>}, {pipeline_mode = #tpu.pipeline_mode<synchronous>, transform_indices = @transform_11, window_bounds = array<i64: 1, 32>}, {pipeline_mode = #tpu.pipeline_mode<synchronous>, transform_indices = @transform_12, window_bounds = array<i64: 1, 32>}, {pipeline_mode = #tpu.pipeline_mode<synchronous>, transform_indices = @transform_13, window_bounds = array<i64: 1, 32>}, {transform_indices = @transform_14, window_bounds = array<i64: 8, 8, 32>}]} {
    %c0 = arith.constant 0 : index
    %c0_0 = arith.constant 0 : index
    %c0_1 = arith.constant 0 : index
    %0 = vector.load %arg1[%c0, %c0_0, %c0_1] : memref<8x8x32xf32, #tpu.memory_space<vmem>>, vector<8x8x32xf32>
    %1 = vector.shape_cast %0 : vector<8x8x32xf32> to vector<64x32xf32>
    %c0_2 = arith.constant 0 : index
    %c0_3 = arith.constant 0 : index
    %c0_4 = arith.constant 0 : index
    %2 = vector.load %arg2[%c0_2, %c0_3, %c0_4] : memref<8x16x32xf32, #tpu.memory_space<vmem>>, vector<8x16x32xf32>
    %3 = vector.shape_cast %2 : vector<8x16x32xf32> to vector<128x32xf32>
    %c0_5 = arith.constant 0 : index
    %c0_6 = arith.constant 0 : index
    %4 = vector.load %arg3[%c0_5, %c0_6] : memref<32x32xf32, #tpu.memory_space<vmem>>, vector<32x32xf32>
    %cst = arith.constant dense<0.000000e+00> : vector<64x32xf32>
    %5 = tpu.matmul %1, %4, %cst {dimension_numbers = #tpu.dot_dimension_numbers<[1], [0], [0], [1], [0, 0, 1, 1], [], []>} : vector<64x32xf32>, vector<32x32xf32>, vector<64x32xf32> -> vector<64x32xf32>
    %c0_7 = arith.constant 0 : index
    %c0_8 = arith.constant 0 : index
    %6 = vector.load %arg5[%c0_7, %c0_8] : memref<1x32xf32, #tpu.memory_space<vmem>>, vector<1x32xf32>
    %7 = vector.broadcast %6 : vector<1x32xf32> to vector<64x32xf32>
    %8 = arith.addf %5, %7 : vector<64x32xf32>
    %c0_9 = arith.constant 0 : index
    %c0_10 = arith.constant 0 : index
    %9 = vector.load %arg4[%c0_9, %c0_10] : memref<32x64xf32, #tpu.memory_space<vmem>>, vector<32x64xf32>
    %cst_11 = arith.constant dense<0.000000e+00> : vector<128x64xf32>
    %10 = tpu.matmul %3, %9, %cst_11 {dimension_numbers = #tpu.dot_dimension_numbers<[1], [0], [0], [1], [0, 0, 1, 1], [], []>} : vector<128x32xf32>, vector<32x64xf32>, vector<128x64xf32> -> vector<128x64xf32>
    %c0_12 = arith.constant 0 : index
    %c0_13 = arith.constant 0 : index
    %11 = vector.load %arg6[%c0_12, %c0_13] : memref<1x64xf32, #tpu.memory_space<vmem>>, vector<1x64xf32>
    %12 = vector.broadcast %11 : vector<1x64xf32> to vector<128x64xf32>
    %13 = arith.addf %10, %12 : vector<128x64xf32>
    %14 = vector.extract_strided_slice %8 {offsets = [0, 0], sizes = [64, 8], strides = [1, 1]} : vector<64x32xf32> to vector<64x8xf32>
    %15 = vector.shape_cast %14 : vector<64x8xf32> to vector<8x8x8xf32>
    %16 = vector.extract_strided_slice %13 {offsets = [0, 0], sizes = [128, 8], strides = [1, 1]} : vector<128x64xf32> to vector<128x8xf32>
    %17 = vector.shape_cast %16 : vector<128x8xf32> to vector<8x16x8xf32>
    %18 = vector.extract_strided_slice %13 {offsets = [0, 32], sizes = [128, 8], strides = [1, 1]} : vector<128x64xf32> to vector<128x8xf32>
    %19 = vector.shape_cast %18 : vector<128x8xf32> to vector<8x16x8xf32>
    "tpu.trace_start"() <{level = 10 : i32, message = "bld,bsd->bls"}> : () -> ()
    %cst_14 = arith.constant dense<0.000000e+00> : vector<8x8x16xf32>
    %20 = tpu.matmul %15, %17, %cst_14 {dimension_numbers = #tpu.dot_dimension_numbers<[2], [2], [1], [1], [0, 0, 0, 1, 1, 1], [0], [0]>} : vector<8x8x8xf32>, vector<8x16x8xf32>, vector<8x8x16xf32> -> vector<8x8x16xf32>
    "tpu.trace_stop"() : () -> ()
    %cst_15 = arith.constant 0.353553385 : f32
    %21 = vector.broadcast %cst_15 : f32 to vector<8x8x16xf32>
    %22 = arith.mulf %20, %21 : vector<8x8x16xf32>
    %cst_16 = arith.constant dense<0xFF800000> : vector<8x8xf32>
    %23 = vector.multi_reduction <maximumf>, %22, %cst_16 [2] : vector<8x8x16xf32> to vector<8x8xf32>
    %24 = vector.shape_cast %23 : vector<8x8xf32> to vector<8x8x1xf32>
    %25 = vector.broadcast %24 : vector<8x8x1xf32> to vector<8x8x16xf32>
    %26 = arith.subf %22, %25 : vector<8x8x16xf32>
    %27 = math.exp %26 : vector<8x8x16xf32>
    %cst_17 = arith.constant dense<0.000000e+00> : vector<8x8xf32>
    %28 = vector.multi_reduction <add>, %27, %cst_17 [2] : vector<8x8x16xf32> to vector<8x8xf32>
    %29 = vector.shape_cast %28 : vector<8x8xf32> to vector<8x8x1xf32>
    %30 = tpu.reciprocal %29 {approx = true} : vector<8x8x1xf32> -> vector<8x8x1xf32>
    %31 = vector.broadcast %30 : vector<8x8x1xf32> to vector<8x8x16xf32>
    %32 = arith.mulf %27, %31 : vector<8x8x16xf32>
    "tpu.trace_start"() <{level = 10 : i32, message = "bls,bsd->bld"}> : () -> ()
    %cst_18 = arith.constant dense<0.000000e+00> : vector<8x8x8xf32>
    %33 = tpu.matmul %32, %19, %cst_18 {dimension_numbers = #tpu.dot_dimension_numbers<[2], [1], [1], [2], [0, 0, 0, 1, 1, 2], [0], [0]>} : vector<8x8x16xf32>, vector<8x16x8xf32>, vector<8x8x8xf32> -> vector<8x8x8xf32>
    "tpu.trace_stop"() : () -> ()
    %34 = vector.shape_cast %33 : vector<8x8x8xf32> to vector<64x8xf32>
    %c0_19 = arith.constant 0 : index
    %c0_20 = arith.constant 0 : index
    %35 = vector.load %arg16[%c0_19, %c0_20] : memref<64x32xf32, #tpu.memory_space<vmem>>, vector<64x8xf32>
    tpu.vector_store %arg16[%c0_19, %c0_20], %34 {strides = array<i32>} : memref<64x32xf32, #tpu.memory_space<vmem>>, vector<64x8xf32>,
    %36 = vector.extract_strided_slice %8 {offsets = [0, 8], sizes = [64, 8], strides = [1, 1]} : vector<64x32xf32> to vector<64x8xf32>
    %37 = vector.shape_cast %36 : vector<64x8xf32> to vector<8x8x8xf32>
    %38 = vector.extract_strided_slice %13 {offsets = [0, 8], sizes = [128, 8], strides = [1, 1]} : vector<128x64xf32> to vector<128x8xf32>
    %39 = vector.shape_cast %38 : vector<128x8xf32> to vector<8x16x8xf32>
    %40 = vector.extract_strided_slice %13 {offsets = [0, 40], sizes = [128, 8], strides = [1, 1]} : vector<128x64xf32> to vector<128x8xf32>
    %41 = vector.shape_cast %40 : vector<128x8xf32> to vector<8x16x8xf32>
    "tpu.trace_start"() <{level = 10 : i32, message = "bld,bsd->bls"}> : () -> ()
    %cst_21 = arith.constant dense<0.000000e+00> : vector<8x8x16xf32>
    %42 = tpu.matmul %37, %39, %cst_21 {dimension_numbers = #tpu.dot_dimension_numbers<[2], [2], [1], [1], [0, 0, 0, 1, 1, 1], [0], [0]>} : vector<8x8x8xf32>, vector<8x16x8xf32>, vector<8x8x16xf32> -> vector<8x8x16xf32>
    "tpu.trace_stop"() : () -> ()
    %cst_22 = arith.constant 0.353553385 : f32
    %43 = vector.broadcast %cst_22 : f32 to vector<8x8x16xf32>
    %44 = arith.mulf %42, %43 : vector<8x8x16xf32>
    %cst_23 = arith.constant dense<0xFF800000> : vector<8x8xf32>
    %45 = vector.multi_reduction <maximumf>, %44, %cst_23 [2] : vector<8x8x16xf32> to vector<8x8xf32>
    %46 = vector.shape_cast %45 : vector<8x8xf32> to vector<8x8x1xf32>
    %47 = vector.broadcast %46 : vector<8x8x1xf32> to vector<8x8x16xf32>
    %48 = arith.subf %44, %47 : vector<8x8x16xf32>
    %49 = math.exp %48 : vector<8x8x16xf32>
    %cst_24 = arith.constant dense<0.000000e+00> : vector<8x8xf32>
    %50 = vector.multi_reduction <add>, %49, %cst_24 [2] : vector<8x8x16xf32> to vector<8x8xf32>
    %51 = vector.shape_cast %50 : vector<8x8xf32> to vector<8x8x1xf32>
    %52 = tpu.reciprocal %51 {approx = true} : vector<8x8x1xf32> -> vector<8x8x1xf32>
    %53 = vector.broadcast %52 : vector<8x8x1xf32> to vector<8x8x16xf32>
    %54 = arith.mulf %49, %53 : vector<8x8x16xf32>
    "tpu.trace_start"() <{level = 10 : i32, message = "bls,bsd->bld"}> : () -> ()
    %cst_25 = arith.constant dense<0.000000e+00> : vector<8x8x8xf32>
    %55 = tpu.matmul %54, %41, %cst_25 {dimension_numbers = #tpu.dot_dimension_numbers<[2], [1], [1], [2], [0, 0, 0, 1, 1, 2], [0], [0]>} : vector<8x8x16xf32>, vector<8x16x8xf32>, vector<8x8x8xf32> -> vector<8x8x8xf32>
    "tpu.trace_stop"() : () -> ()
    %56 = vector.shape_cast %55 : vector<8x8x8xf32> to vector<64x8xf32>
    %c0_26 = arith.constant 0 : index
    %c8 = arith.constant 8 : index
    %57 = vector.load %arg16[%c0_26, %c8] : memref<64x32xf32, #tpu.memory_space<vmem>>, vector<64x8xf32>
    tpu.vector_store %arg16[%c0_26, %c8], %56 {strides = array<i32>} : memref<64x32xf32, #tpu.memory_space<vmem>>, vector<64x8xf32>,
    %58 = vector.extract_strided_slice %8 {offsets = [0, 16], sizes = [64, 8], strides = [1, 1]} : vector<64x32xf32> to vector<64x8xf32>
    %59 = vector.shape_cast %58 : vector<64x8xf32> to vector<8x8x8xf32>
    %60 = vector.extract_strided_slice %13 {offsets = [0, 16], sizes = [128, 8], strides = [1, 1]} : vector<128x64xf32> to vector<128x8xf32>
    %61 = vector.shape_cast %60 : vector<128x8xf32> to vector<8x16x8xf32>
    %62 = vector.extract_strided_slice %13 {offsets = [0, 48], sizes = [128, 8], strides = [1, 1]} : vector<128x64xf32> to vector<128x8xf32>
    %63 = vector.shape_cast %62 : vector<128x8xf32> to vector<8x16x8xf32>
    "tpu.trace_start"() <{level = 10 : i32, message = "bld,bsd->bls"}> : () -> ()
    %cst_27 = arith.constant dense<0.000000e+00> : vector<8x8x16xf32>
    %64 = tpu.matmul %59, %61, %cst_27 {dimension_numbers = #tpu.dot_dimension_numbers<[2], [2], [1], [1], [0, 0, 0, 1, 1, 1], [0], [0]>} : vector<8x8x8xf32>, vector<8x16x8xf32>, vector<8x8x16xf32> -> vector<8x8x16xf32>
    "tpu.trace_stop"() : () -> ()
    %cst_28 = arith.constant 0.353553385 : f32
    %65 = vector.broadcast %cst_28 : f32 to vector<8x8x16xf32>
    %66 = arith.mulf %64, %65 : vector<8x8x16xf32>
    %cst_29 = arith.constant dense<0xFF800000> : vector<8x8xf32>
    %67 = vector.multi_reduction <maximumf>, %66, %cst_29 [2] : vector<8x8x16xf32> to vector<8x8xf32>
    %68 = vector.shape_cast %67 : vector<8x8xf32> to vector<8x8x1xf32>
    %69 = vector.broadcast %68 : vector<8x8x1xf32> to vector<8x8x16xf32>
    %70 = arith.subf %66, %69 : vector<8x8x16xf32>
    %71 = math.exp %70 : vector<8x8x16xf32>
    %cst_30 = arith.constant dense<0.000000e+00> : vector<8x8xf32>
    %72 = vector.multi_reduction <add>, %71, %cst_30 [2] : vector<8x8x16xf32> to vector<8x8xf32>
    %73 = vector.shape_cast %72 : vector<8x8xf32> to vector<8x8x1xf32>
    %74 = tpu.reciprocal %73 {approx = true} : vector<8x8x1xf32> -> vector<8x8x1xf32>
    %75 = vector.broadcast %74 : vector<8x8x1xf32> to vector<8x8x16xf32>
    %76 = arith.mulf %71, %75 : vector<8x8x16xf32>
    "tpu.trace_start"() <{level = 10 : i32, message = "bls,bsd->bld"}> : () -> ()
    %cst_31 = arith.constant dense<0.000000e+00> : vector<8x8x8xf32>
    %77 = tpu.matmul %76, %63, %cst_31 {dimension_numbers = #tpu.dot_dimension_numbers<[2], [1], [1], [2], [0, 0, 0, 1, 1, 2], [0], [0]>} : vector<8x8x16xf32>, vector<8x16x8xf32>, vector<8x8x8xf32> -> vector<8x8x8xf32>
    "tpu.trace_stop"() : () -> ()
    %78 = vector.shape_cast %77 : vector<8x8x8xf32> to vector<64x8xf32>
    %c0_32 = arith.constant 0 : index
    %c16 = arith.constant 16 : index
    %79 = vector.load %arg16[%c0_32, %c16] : memref<64x32xf32, #tpu.memory_space<vmem>>, vector<64x8xf32>
    tpu.vector_store %arg16[%c0_32, %c16], %78 {strides = array<i32>} : memref<64x32xf32, #tpu.memory_space<vmem>>, vector<64x8xf32>,
    %80 = vector.extract_strided_slice %8 {offsets = [0, 24], sizes = [64, 8], strides = [1, 1]} : vector<64x32xf32> to vector<64x8xf32>
    %81 = vector.shape_cast %80 : vector<64x8xf32> to vector<8x8x8xf32>
    %82 = vector.extract_strided_slice %13 {offsets = [0, 24], sizes = [128, 8], strides = [1, 1]} : vector<128x64xf32> to vector<128x8xf32>
    %83 = vector.shape_cast %82 : vector<128x8xf32> to vector<8x16x8xf32>
    %84 = vector.extract_strided_slice %13 {offsets = [0, 56], sizes = [128, 8], strides = [1, 1]} : vector<128x64xf32> to vector<128x8xf32>
    %85 = vector.shape_cast %84 : vector<128x8xf32> to vector<8x16x8xf32>
    "tpu.trace_start"() <{level = 10 : i32, message = "bld,bsd->bls"}> : () -> ()
    %cst_33 = arith.constant dense<0.000000e+00> : vector<8x8x16xf32>
    %86 = tpu.matmul %81, %83, %cst_33 {dimension_numbers = #tpu.dot_dimension_numbers<[2], [2], [1], [1], [0, 0, 0, 1, 1, 1], [0], [0]>} : vector<8x8x8xf32>, vector<8x16x8xf32>, vector<8x8x16xf32> -> vector<8x8x16xf32>
    "tpu.trace_stop"() : () -> ()
    %cst_34 = arith.constant 0.353553385 : f32
    %87 = vector.broadcast %cst_34 : f32 to vector<8x8x16xf32>
    %88 = arith.mulf %86, %87 : vector<8x8x16xf32>
    %cst_35 = arith.constant dense<0xFF800000> : vector<8x8xf32>
    %89 = vector.multi_reduction <maximumf>, %88, %cst_35 [2] : vector<8x8x16xf32> to vector<8x8xf32>
    %90 = vector.shape_cast %89 : vector<8x8xf32> to vector<8x8x1xf32>
    %91 = vector.broadcast %90 : vector<8x8x1xf32> to vector<8x8x16xf32>
    %92 = arith.subf %88, %91 : vector<8x8x16xf32>
    %93 = math.exp %92 : vector<8x8x16xf32>
    %cst_36 = arith.constant dense<0.000000e+00> : vector<8x8xf32>
    %94 = vector.multi_reduction <add>, %93, %cst_36 [2] : vector<8x8x16xf32> to vector<8x8xf32>
    %95 = vector.shape_cast %94 : vector<8x8xf32> to vector<8x8x1xf32>
    %96 = tpu.reciprocal %95 {approx = true} : vector<8x8x1xf32> -> vector<8x8x1xf32>
    %97 = vector.broadcast %96 : vector<8x8x1xf32> to vector<8x8x16xf32>
    %98 = arith.mulf %93, %97 : vector<8x8x16xf32>
    "tpu.trace_start"() <{level = 10 : i32, message = "bls,bsd->bld"}> : () -> ()
    %cst_37 = arith.constant dense<0.000000e+00> : vector<8x8x8xf32>
    %99 = tpu.matmul %98, %85, %cst_37 {dimension_numbers = #tpu.dot_dimension_numbers<[2], [1], [1], [2], [0, 0, 0, 1, 1, 2], [0], [0]>} : vector<8x8x16xf32>, vector<8x16x8xf32>, vector<8x8x8xf32> -> vector<8x8x8xf32>
    "tpu.trace_stop"() : () -> ()
    %100 = vector.shape_cast %99 : vector<8x8x8xf32> to vector<64x8xf32>
    %c0_38 = arith.constant 0 : index
    %c24 = arith.constant 24 : index
    %101 = vector.load %arg16[%c0_38, %c24] : memref<64x32xf32, #tpu.memory_space<vmem>>, vector<64x8xf32>
    tpu.vector_store %arg16[%c0_38, %c24], %100 {strides = array<i32>} : memref<64x32xf32, #tpu.memory_space<vmem>>, vector<64x8xf32>,
    %c0_39 = arith.constant 0 : index
    %c0_40 = arith.constant 0 : index
    %102 = vector.load %arg16[%c0_39, %c0_40] : memref<64x32xf32, #tpu.memory_space<vmem>>, vector<64x32xf32>
    %c0_41 = arith.constant 0 : index
    %c0_42 = arith.constant 0 : index
    %103 = vector.load %arg7[%c0_41, %c0_42] : memref<32x32xf32, #tpu.memory_space<vmem>>, vector<32x32xf32>
    %cst_43 = arith.constant dense<0.000000e+00> : vector<64x32xf32>
    %104 = tpu.matmul %102, %103, %cst_43 {dimension_numbers = #tpu.dot_dimension_numbers<[1], [0], [0], [1], [0, 0, 1, 1], [], []>} : vector<64x32xf32>, vector<32x32xf32>, vector<64x32xf32> -> vector<64x32xf32>
    %c0_44 = arith.constant 0 : index
    %c0_45 = arith.constant 0 : index
    %105 = vector.load %arg8[%c0_44, %c0_45] : memref<1x32xf32, #tpu.memory_space<vmem>>, vector<1x32xf32>
    %106 = vector.broadcast %105 : vector<1x32xf32> to vector<64x32xf32>
    %107 = arith.addf %104, %106 : vector<64x32xf32>
    %108 = arith.addf %1, %107 : vector<64x32xf32>
    %c0_46 = arith.constant 0 : index
    %c0_47 = arith.constant 0 : index
    %109 = vector.load %arg11[%c0_46, %c0_47] : memref<1x32xf32, #tpu.memory_space<vmem>>, vector<1x32xf32>
    %c0_48 = arith.constant 0 : index
    %c0_49 = arith.constant 0 : index
    %110 = vector.load %arg12[%c0_48, %c0_49] : memref<1x32xf32, #tpu.memory_space<vmem>>, vector<1x32xf32>
    %cst_50 = arith.constant dense<0.000000e+00> : vector<64xf32>
    %111 = vector.multi_reduction <add>, %108, %cst_50 [1] : vector<64x32xf32> to vector<64xf32>
    %112 = vector.shape_cast %111 : vector<64xf32> to vector<64x1xf32>
    %cst_51 = arith.constant 3.200000e+01 : f32
    %113 = vector.broadcast %cst_51 : f32 to vector<64x1xf32>
    %114 = arith.divf %112, %113 : vector<64x1xf32>
    %115 = vector.broadcast %114 : vector<64x1xf32> to vector<64x32xf32>
    %116 = arith.subf %108, %115 : vector<64x32xf32>
    %117 = arith.mulf %116, %116 : vector<64x32xf32>
    %cst_52 = arith.constant dense<0.000000e+00> : vector<64xf32>
    %118 = vector.multi_reduction <add>, %117, %cst_52 [1] : vector<64x32xf32> to vector<64xf32>
    %119 = vector.shape_cast %118 : vector<64xf32> to vector<64x1xf32>
    %cst_53 = arith.constant 3.200000e+01 : f32
    %120 = vector.broadcast %cst_53 : f32 to vector<64x1xf32>
    %121 = arith.divf %119, %120 : vector<64x1xf32>
    %122 = vector.broadcast %114 : vector<64x1xf32> to vector<64x32xf32>
    %123 = arith.subf %108, %122 : vector<64x32xf32>
    %cst_54 = arith.constant 9.99999974E-6 : f32
    %124 = vector.broadcast %cst_54 : f32 to vector<64x1xf32>
    %125 = arith.addf %121, %124 : vector<64x1xf32>
    %126 = math.rsqrt %125 : vector<64x1xf32>
    %127 = vector.broadcast %126 : vector<64x1xf32> to vector<64x32xf32>
    %128 = arith.mulf %123, %127 : vector<64x32xf32>
    %129 = vector.broadcast %109 : vector<1x32xf32> to vector<64x32xf32>
    %130 = arith.mulf %128, %129 : vector<64x32xf32>
    %131 = vector.broadcast %110 : vector<1x32xf32> to vector<64x32xf32>
    %132 = arith.addf %130, %131 : vector<64x32xf32>
    %c0_55 = arith.constant 0 : index
    %c0_56 = arith.constant 0 : index
    %133 = vector.load %arg9[%c0_55, %c0_56] : memref<32x64xf32, #tpu.memory_space<vmem>>, vector<32x64xf32>
    %cst_57 = arith.constant dense<0.000000e+00> : vector<64x64xf32>
    %134 = tpu.matmul %132, %133, %cst_57 {dimension_numbers = #tpu.dot_dimension_numbers<[1], [0], [0], [1], [0, 0, 1, 1], [], []>} : vector<64x32xf32>, vector<32x64xf32>, vector<64x64xf32> -> vector<64x64xf32>
    %cst_58 = arith.constant 5.000000e-01 : f32
    %135 = vector.broadcast %cst_58 : f32 to vector<64x64xf32>
    %136 = arith.mulf %135, %134 : vector<64x64xf32>
    %cst_59 = arith.constant 0.707106769 : f32
    %137 = vector.broadcast %cst_59 : f32 to vector<64x64xf32>
    %138 = arith.mulf %134, %137 : vector<64x64xf32>
    %139 = math.erf %138 : vector<64x64xf32>
    %cst_60 = arith.constant 1.000000e+00 : f32
    %140 = vector.broadcast %cst_60 : f32 to vector<64x64xf32>
    %141 = arith.addf %140, %139 : vector<64x64xf32>
    %142 = arith.mulf %136, %141 : vector<64x64xf32>
    %c0_61 = arith.constant 0 : index
    %c0_62 = arith.constant 0 : index
    %143 = vector.load %arg10[%c0_61, %c0_62] : memref<64x32xf32, #tpu.memory_space<vmem>>, vector<64x32xf32>
    %cst_63 = arith.constant dense<0.000000e+00> : vector<64x32xf32>
    %144 = tpu.matmul %142, %143, %cst_63 {dimension_numbers = #tpu.dot_dimension_numbers<[1], [0], [0], [1], [0, 0, 1, 1], [], []>} : vector<64x64xf32>, vector<64x32xf32>, vector<64x32xf32> -> vector<64x32xf32>
    %145 = arith.addf %132, %144 : vector<64x32xf32>
    %c0_64 = arith.constant 0 : index
    %c0_65 = arith.constant 0 : index
    %146 = vector.load %arg13[%c0_64, %c0_65] : memref<1x32xf32, #tpu.memory_space<vmem>>, vector<1x32xf32>
    %c0_66 = arith.constant 0 : index
    %c0_67 = arith.constant 0 : index
    %147 = vector.load %arg14[%c0_66, %c0_67] : memref<1x32xf32, #tpu.memory_space<vmem>>, vector<1x32xf32>
    %cst_68 = arith.constant dense<0.000000e+00> : vector<64xf32>
    %148 = vector.multi_reduction <add>, %145, %cst_68 [1] : vector<64x32xf32> to vector<64xf32>
    %149 = vector.shape_cast %148 : vector<64xf32> to vector<64x1xf32>
    %cst_69 = arith.constant 3.200000e+01 : f32
    %150 = vector.broadcast %cst_69 : f32 to vector<64x1xf32>
    %151 = arith.divf %149, %150 : vector<64x1xf32>
    %152 = vector.broadcast %151 : vector<64x1xf32> to vector<64x32xf32>
    %153 = arith.subf %145, %152 : vector<64x32xf32>
    %154 = arith.mulf %153, %153 : vector<64x32xf32>
    %cst_70 = arith.constant dense<0.000000e+00> : vector<64xf32>
    %155 = vector.multi_reduction <add>, %154, %cst_70 [1] : vector<64x32xf32> to vector<64xf32>
    %156 = vector.shape_cast %155 : vector<64xf32> to vector<64x1xf32>
    %cst_71 = arith.constant 3.200000e+01 : f32
    %157 = vector.broadcast %cst_71 : f32 to vector<64x1xf32>
    %158 = arith.divf %156, %157 : vector<64x1xf32>
    %159 = vector.broadcast %151 : vector<64x1xf32> to vector<64x32xf32>
    %160 = arith.subf %145, %159 : vector<64x32xf32>
    %cst_72 = arith.constant 9.99999974E-6 : f32
    %161 = vector.broadcast %cst_72 : f32 to vector<64x1xf32>
    %162 = arith.addf %158, %161 : vector<64x1xf32>
    %163 = math.rsqrt %162 : vector<64x1xf32>
    %164 = vector.broadcast %163 : vector<64x1xf32> to vector<64x32xf32>
    %165 = arith.mulf %160, %164 : vector<64x32xf32>
    %166 = vector.broadcast %146 : vector<1x32xf32> to vector<64x32xf32>
    %167 = arith.mulf %165, %166 : vector<64x32xf32>
    %168 = vector.broadcast %147 : vector<1x32xf32> to vector<64x32xf32>
    %169 = arith.addf %167, %168 : vector<64x32xf32>
    %170 = vector.shape_cast %169 : vector<64x32xf32> to vector<8x8x32xf32>
    %c0_73 = arith.constant 0 : index
    %c0_74 = arith.constant 0 : index
    %c0_75 = arith.constant 0 : index
    %171 = vector.load %arg15[%c0_73, %c0_74, %c0_75] : memref<8x8x32xf32, #tpu.memory_space<vmem>>, vector<8x8x32xf32>
    tpu.vector_store %arg15[%c0_73, %c0_74, %c0_75], %170 {strides = array<i32>} : memref<8x8x32xf32, #tpu.memory_space<vmem>>, vector<8x8x32xf32>,
    return
  }
  func.func @transform_0(%arg0: i32) -> (i32, i32, i32) {
    %c0_i32 = arith.constant 0 : i32
    %c0_i32_0 = arith.constant 0 : i32
    %c0_i32_1 = arith.constant 0 : i32
    return %arg0, %c0_i32, %c0_i32_0 : i32, i32, i32
  }
  func.func @transform_1(%arg0: i32) -> (i32, i32, i32) {
    %c0_i32 = arith.constant 0 : i32
    %c0_i32_0 = arith.constant 0 : i32
    %c0_i32_1 = arith.constant 0 : i32
    return %arg0, %c0_i32, %c0_i32_0 : i32, i32, i32
  }
  func.func @transform_2(%arg0: i32) -> (i32, i32) {
    %c0_i32 = arith.constant 0 : i32
    %c0_i32_0 = arith.constant 0 : i32
    %c0_i32_1 = arith.constant 0 : i32
    return %c0_i32, %c0_i32_0 : i32, i32
  }
  func.func @transform_3(%arg0: i32) -> (i32, i32) {
    %c0_i32 = arith.constant 0 : i32
    %c0_i32_0 = arith.constant 0 : i32
    %c0_i32_1 = arith.constant 0 : i32
    return %c0_i32, %c0_i32_0 : i32, i32
  }
  func.func @transform_4(%arg0: i32) -> (i32, i32) {
    %c0_i32 = arith.constant 0 : i32
    %c0_i32_0 = arith.constant 0 : i32
    %c0_i32_1 = arith.constant 0 : i32
    return %c0_i32, %c0_i32_0 : i32, i32
  }
  func.func @transform_5(%arg0: i32) -> (i32, i32) {
    %c0_i32 = arith.constant 0 : i32
    %c0_i32_0 = arith.constant 0 : i32
    %c0_i32_1 = arith.constant 0 : i32
    return %c0_i32, %c0_i32_0 : i32, i32
  }
  func.func @transform_6(%arg0: i32) -> (i32, i32) {
    %c0_i32 = arith.constant 0 : i32
    %c0_i32_0 = arith.constant 0 : i32
    %c0_i32_1 = arith.constant 0 : i32
    return %c0_i32, %c0_i32_0 : i32, i32
  }
  func.func @transform_7(%arg0: i32) -> (i32, i32) {
    %c0_i32 = arith.constant 0 : i32
    %c0_i32_0 = arith.constant 0 : i32
    %c0_i32_1 = arith.constant 0 : i32
    return %c0_i32, %c0_i32_0 : i32, i32
  }
  func.func @transform_8(%arg0: i32) -> (i32, i32) {
    %c0_i32 = arith.constant 0 : i32
    %c0_i32_0 = arith.constant 0 : i32
    %c0_i32_1 = arith.constant 0 : i32
    return %c0_i32, %c0_i32_0 : i32, i32
  }
  func.func @transform_9(%arg0: i32) -> (i32, i32) {
    %c0_i32 = arith.constant 0 : i32
    %c0_i32_0 = arith.constant 0 : i32
    %c0_i32_1 = arith.constant 0 : i32
    return %c0_i32, %c0_i32_0 : i32, i32
  }
  func.func @transform_10(%arg0: i32) -> (i32, i32) {
    %c0_i32 = arith.constant 0 : i32
    %c0_i32_0 = arith.constant 0 : i32
    %c0_i32_1 = arith.constant 0 : i32
    return %c0_i32, %c0_i32_0 : i32, i32
  }
  func.func @transform_11(%arg0: i32) -> (i32, i32) {
    %c0_i32 = arith.constant 0 : i32
    %c0_i32_0 = arith.constant 0 : i32
    %c0_i32_1 = arith.constant 0 : i32
    return %c0_i32, %c0_i32_0 : i32, i32
  }
  func.func @transform_12(%arg0: i32) -> (i32, i32) {
    %c0_i32 = arith.constant 0 : i32
    %c0_i32_0 = arith.constant 0 : i32
    %c0_i32_1 = arith.constant 0 : i32
    return %c0_i32, %c0_i32_0 : i32, i32
  }
  func.func @transform_13(%arg0: i32) -> (i32, i32) {
    %c0_i32 = arith.constant 0 : i32
    %c0_i32_0 = arith.constant 0 : i32
    %c0_i32_1 = arith.constant 0 : i32
    return %c0_i32, %c0_i32_0 : i32, i32
  }
  func.func @transform_14(%arg0: i32) -> (i32, i32, i32) {
    %c0_i32 = arith.constant 0 : i32
    %c0_i32_0 = arith.constant 0 : i32
    %c0_i32_1 = arith.constant 0 : i32
    return %arg0, %c0_i32, %c0_i32_0 : i32, i32, i32
  }
}

</mosaic_0001>

<llo_original>
// kernel: tpu_custom_call.1
$region0: #{tpu_custom_call.1}
  #allocation0 [shape = 'u32[]', space=smem, size = 0x4, offset = 0x4, fixed_abs, tag = 'smem constant byte address 0x4 - core index']
  #allocation1 [shape = 'u32[72,128]{1,0:T(1,128)}', space=vmem, size = 0x9000, scoped, tag = 'internal scratch']
  #allocation2 [shape = 'f32[64,32]{1,0:T(8,128)}', space=vmem, size = 0x8000, scoped, tag = 'scratch operand']
  %s0 = inlined_call_operand.hbm [shape: f32[16,8,32], index: 0, kind: input, shape index: {}]
  %s1 = inlined_call_operand.hbm [shape: f32[16,16,32], index: 1, kind: input, shape index: {}]
  %s2 = inlined_call_operand.vmem [shape: f32[32,32], index: 2, kind: input, shape index: {}]
  %s3 = inlined_call_operand.vmem [shape: f32[32,64], index: 3, kind: input, shape index: {}]
  %s4 = inlined_call_operand.vmem [shape: f32[1,32], index: 4, kind: input, shape index: {}]
  %s5 = inlined_call_operand.vmem [shape: f32[1,64], index: 5, kind: input, shape index: {}]
  %s6 = inlined_call_operand.vmem [shape: f32[32,32], index: 6, kind: input, shape index: {}]
  %s7 = inlined_call_operand.vmem [shape: f32[1,32], index: 7, kind: input, shape index: {}]
  %s8 = inlined_call_operand.hbm [shape: f32[32,64], index: 8, kind: input, shape index: {}]
  %s9 = inlined_call_operand.vmem [shape: f32[64,32], index: 9, kind: input, shape index: {}]
  %s10 = inlined_call_operand.vmem [shape: f32[1,32], index: 10, kind: input, shape index: {}]
  %s11 = inlined_call_operand.vmem [shape: f32[1,32], index: 11, kind: input, shape index: {}]
  %s12 = inlined_call_operand.vmem [shape: f32[1,32], index: 12, kind: input, shape index: {}]
  %s13 = inlined_call_operand.vmem [shape: f32[1,32], index: 13, kind: input, shape index: {}]
  %s14 = inlined_call_operand.hbm [shape: f32[16,8,32], index: 14, kind: output, shape index: {}]
  %s15 = sld [smem:[#allocation0]]
  $region101: #{tpu_custom_call.1} parent=0
    _
  %s17 = ssub.s32 1, %s15
  %s18 = scalar_select 0, %s17, %s15
  $region1: #{tpu_custom_call.1} parent=0
    #allocation3 [shape = 'u8[65536]{0}', space=vmem, size = 0x10000, scoped, tag = 'input window, operand 0']
    #allocation4 [shape = 's32[2]{0}', space=sflag, size = 0x8, scoped, tag = 'scoped memory for tpu_custom_call.1']
    #allocation5 [shape = 's32[2]{0}', space=sflag, size = 0x8, scoped, tag = 'scoped memory for tpu_custom_call.1']
    #allocation6 [shape = 'u8[131072]{0}', space=vmem, size = 0x20000, scoped, tag = 'input window, operand 1']
    #allocation7 [shape = 's32[2]{0}', space=sflag, size = 0x8, scoped, tag = 'scoped memory for tpu_custom_call.1']
    #allocation8 [shape = 'u8[16384]{0}', space=vmem, size = 0x4000, scoped, tag = 'input window, operand 8, single buffered']
    #allocation9 [shape = 'u8[65536]{0}', space=vmem, size = 0x10000, scoped, tag = 'output window, operand 0']
    %19 = vsyncpa [#allocation4], 0
    %s20 = scalar_lea.sflag [#allocation4], 1
    %21 = vsyncpa %s20, 0
    %22 = vsyncpa [#allocation7], 0
    %s23 = scalar_lea.sflag [#allocation7], 1
    %24 = vsyncpa %s23, 0
    %25 = vsyncpa [#allocation5], 0
    %s26 = scalar_lea.sflag [#allocation5], 1
    %27 = vsyncpa %s26, 0
    loop: start=0, step=1, limit=4
    $region2: #{tpu_custom_call.1} parent=1 // loop_pre_header
      _
    $region3: #{tpu_custom_call.1} parent=1 // loop_header
      %s29 = sphi 0, %s33
      %p30 = scmp.ge.s32.totalorder %s29, 4
      %s39 = sphi 0, %s41
      %s42 = sphi 0, %s39
      %s43 = sphi 0, %s42
      %s59 = sphi 0, %s43
      %s65 = sphi 0, %s67
      %s68 = sphi 0, %s65
      %s69 = sphi 0, %s68
      %s85 = sphi 0, %s69
      %s89 = sphi 0, %s89
      %s91 = sphi 0, %s89
      %s92 = sphi 0, %s91
      %s106 = sphi 0, %s92
      %s110 = sphi 0, %s110
      %s112 = sphi 0, %s110
      %s113 = sphi 0, %s112
      %s127 = sphi 0, %s113
      %s131 = sphi 0, %s131
      %s133 = sphi 0, %s131
      %s134 = sphi 0, %s133
      %s148 = sphi 0, %s134
      %s152 = sphi 0, %s152
      %s154 = sphi 0, %s152
      %s155 = sphi 0, %s154
      %s169 = sphi 0, %s155
      %s173 = sphi 0, %s173
      %s175 = sphi 0, %s173
      %s176 = sphi 0, %s175
      %s190 = sphi 0, %s176
      %s194 = sphi 0, %s194
      %s196 = sphi 0, %s194
      %s197 = sphi 0, %s196
      %s211 = sphi 0, %s197
      %s215 = sphi 0, %s215
      %s217 = sphi 0, %s215
      %s218 = sphi 0, %s217
      %s232 = sphi 0, %s218
      %s236 = sphi 0, %s236
      %s238 = sphi 0, %s236
      %s239 = sphi 0, %s238
      %s253 = sphi 0, %s239
      %s257 = sphi 0, %s257
      %s259 = sphi 0, %s257
      %s260 = sphi 0, %s259
      %s274 = sphi 0, %s260
      %s278 = sphi 0, %s278
      %s280 = sphi 0, %s278
      %s281 = sphi 0, %s280
      %s295 = sphi 0, %s281
      %s299 = sphi 0, %s299
      %s301 = sphi 0, %s299
      %s302 = sphi 0, %s301
      %s316 = sphi 0, %s302
      %s320 = sphi 0, %s320
      %s322 = sphi 0, %s320
      %s323 = sphi 0, %s322
      %s337 = sphi 0, %s323
      %s343 = sphi 0, %s345
      %s346 = sphi 0, %s343
      %s347 = sphi 0, %s346
      %s363 = sphi 0, %s347
    $region4: #{tpu_custom_call.1} parent=1 // loop_header_branch
      %32 = sbr.rel (%p30) target = $region8
    $region5: #{tpu_custom_call.1} parent=1 // loop_body
      %s34 = ssub.s32 %s29, 1
      %s35 = ssub.s32 %s29, 2
      %s36 = sadd.s32 %s29, 1
      %s37 = ssub.s32 %s29, %s36
      %p38 = scmp.eq.s32.totalorder %s37, 0
      %s40 = sadd.s32 %s39, 1
      %s41 = scalar_select %p38, %s39, %s40
      %p44 = pneg %p38
      %p45 = scmp.eq.s32.totalorder %s29, 1
      %p46 = por %p44, %p45
      %p47 = scmp.ne.s32.totalorder %s39, %s42
      %p48 = scmp.eq.s32.totalorder %s29, 0
      %p49 = por %p47, %p48
      %p50 = scmp.ne.s32.totalorder %s39, %s42
      %p51 = scmp.eq.s32.totalorder %s34, 1
      %p52 = por %p50, %p51
      %p53 = scmp.ne.s32.totalorder %s42, %s43
      %p54 = scmp.eq.s32.totalorder %s34, 0
      %p55 = por %p53, %p54
      %p56 = scmp.ne.s32.totalorder %s42, %s43
      %p57 = scmp.eq.s32.totalorder %s35, 1
      %p58 = por %p56, %p57
      %p60 = scmp.ne.s32.totalorder %s43, %s59
      %p61 = scmp.eq.s32.totalorder %s35, 0
      %p62 = por %p60, %p61
      %s63 = ssub.s32 %s29, %s36
      %p64 = scmp.eq.s32.totalorder %s63, 0
      %s66 = sadd.s32 %s65, 1
      %s67 = scalar_select %p64, %s65, %s66
      %p70 = pneg %p64
      %p71 = scmp.eq.s32.totalorder %s29, 1
      %p72 = por %p70, %p71
      %p73 = scmp.ne.s32.totalorder %s65, %s68
      %p74 = scmp.eq.s32.totalorder %s29, 0
      %p75 = por %p73, %p74
      %p76 = scmp.ne.s32.totalorder %s65, %s68
      %p77 = scmp.eq.s32.totalorder %s34, 1
      %p78 = por %p76, %p77
      %p79 = scmp.ne.s32.totalorder %s68, %s69
      %p80 = scmp.eq.s32.totalorder %s34, 0
      %p81 = por %p79, %p80
      %p82 = scmp.ne.s32.totalorder %s68, %s69
      %p83 = scmp.eq.s32.totalorder %s35, 1
      %p84 = por %p82, %p83
      %p86 = scmp.ne.s32.totalorder %s69, %s85
      %p87 = scmp.eq.s32.totalorder %s35, 0
      %p88 = por %p86, %p87
      %s90 = sadd.s32 %s89, 1
      %p93 = scmp.eq.s32.totalorder %s29, 1
      %p94 = scmp.ne.s32.totalorder %s89, %s91
      %p95 = scmp.eq.s32.totalorder %s29, 0
      %p96 = por %p94, %p95
      %p97 = scmp.ne.s32.totalorder %s89, %s91
      %p98 = scmp.eq.s32.totalorder %s34, 1
      %p99 = por %p97, %p98
      %p100 = scmp.ne.s32.totalorder %s91, %s92
      %p101 = scmp.eq.s32.totalorder %s34, 0
      %p102 = por %p100, %p101
      %p103 = scmp.ne.s32.totalorder %s91, %s92
      %p104 = scmp.eq.s32.totalorder %s35, 1
      %p105 = por %p103, %p104
      %p107 = scmp.ne.s32.totalorder %s92, %s106
      %p108 = scmp.eq.s32.totalorder %s35, 0
      %p109 = por %p107, %p108
      %s111 = sadd.s32 %s110, 1
      %p114 = scmp.eq.s32.totalorder %s29, 1
      %p115 = scmp.ne.s32.totalorder %s110, %s112
      %p116 = scmp.eq.s32.totalorder %s29, 0
      %p117 = por %p115, %p116
      %p118 = scmp.ne.s32.totalorder %s110, %s112
      %p119 = scmp.eq.s32.totalorder %s34, 1
      %p120 = por %p118, %p119
      %p121 = scmp.ne.s32.totalorder %s112, %s113
      %p122 = scmp.eq.s32.totalorder %s34, 0
      %p123 = por %p121, %p122
      %p124 = scmp.ne.s32.totalorder %s112, %s113
      %p125 = scmp.eq.s32.totalorder %s35, 1
      %p126 = por %p124, %p125
      %p128 = scmp.ne.s32.totalorder %s113, %s127
      %p129 = scmp.eq.s32.totalorder %s35, 0
      %p130 = por %p128, %p129
      %s132 = sadd.s32 %s131, 1
      %p135 = scmp.eq.s32.totalorder %s29, 1
      %p136 = scmp.ne.s32.totalorder %s131, %s133
      %p137 = scmp.eq.s32.totalorder %s29, 0
      %p138 = por %p136, %p137
      %p139 = scmp.ne.s32.totalorder %s131, %s133
      %p140 = scmp.eq.s32.totalorder %s34, 1
      %p141 = por %p139, %p140
      %p142 = scmp.ne.s32.totalorder %s133, %s134
      %p143 = scmp.eq.s32.totalorder %s34, 0
      %p144 = por %p142, %p143
      %p145 = scmp.ne.s32.totalorder %s133, %s134
      %p146 = scmp.eq.s32.totalorder %s35, 1
      %p147 = por %p145, %p146
      %p149 = scmp.ne.s32.totalorder %s134, %s148
      %p150 = scmp.eq.s32.totalorder %s35, 0
      %p151 = por %p149, %p150
      %s153 = sadd.s32 %s152, 1
      %p156 = scmp.eq.s32.totalorder %s29, 1
      %p157 = scmp.ne.s32.totalorder %s152, %s154
      %p158 = scmp.eq.s32.totalorder %s29, 0
      %p159 = por %p157, %p158
      %p160 = scmp.ne.s32.totalorder %s152, %s154
      %p161 = scmp.eq.s32.totalorder %s34, 1
      %p162 = por %p160, %p161
      %p163 = scmp.ne.s32.totalorder %s154, %s155
      %p164 = scmp.eq.s32.totalorder %s34, 0
      %p165 = por %p163, %p164
      %p166 = scmp.ne.s32.totalorder %s154, %s155
      %p167 = scmp.eq.s32.totalorder %s35, 1
      %p168 = por %p166, %p167
      %p170 = scmp.ne.s32.totalorder %s155, %s169
      %p171 = scmp.eq.s32.totalorder %s35, 0
      %p172 = por %p170, %p171
      %s174 = sadd.s32 %s173, 1
      %p177 = scmp.eq.s32.totalorder %s29, 1
      %p178 = scmp.ne.s32.totalorder %s173, %s175
      %p179 = scmp.eq.s32.totalorder %s29, 0
      %p180 = por %p178, %p179
      %p181 = scmp.ne.s32.totalorder %s173, %s175
      %p182 = scmp.eq.s32.totalorder %s34, 1
      %p183 = por %p181, %p182
      %p184 = scmp.ne.s32.totalorder %s175, %s176
      %p185 = scmp.eq.s32.totalorder %s34, 0
      %p186 = por %p184, %p185
      %p187 = scmp.ne.s32.totalorder %s175, %s176
      %p188 = scmp.eq.s32.totalorder %s35, 1
      %p189 = por %p187, %p188
      %p191 = scmp.ne.s32.totalorder %s176, %s190
      %p192 = scmp.eq.s32.totalorder %s35, 0
      %p193 = por %p191, %p192
      %s195 = sadd.s32 %s194, 1
      %p198 = scmp.eq.s32.totalorder %s29, 1
      %p199 = scmp.ne.s32.totalorder %s194, %s196
      %p200 = scmp.eq.s32.totalorder %s29, 0
      %p201 = por %p199, %p200
      %p202 = scmp.ne.s32.totalorder %s194, %s196
      %p203 = scmp.eq.s32.totalorder %s34, 1
      %p204 = por %p202, %p203
      %p205 = scmp.ne.s32.totalorder %s196, %s197
      %p206 = scmp.eq.s32.totalorder %s34, 0
      %p207 = por %p205, %p206
      %p208 = scmp.ne.s32.totalorder %s196, %s197
      %p209 = scmp.eq.s32.totalorder %s35, 1
      %p210 = por %p208, %p209
      %p212 = scmp.ne.s32.totalorder %s197, %s211
      %p213 = scmp.eq.s32.totalorder %s35, 0
      %p214 = por %p212, %p213
      %s216 = sadd.s32 %s215, 1
      %p219 = scmp.eq.s32.totalorder %s29, 1
      %p220 = scmp.ne.s32.totalorder %s215, %s217
      %p221 = scmp.eq.s32.totalorder %s29, 0
      %p222 = por %p220, %p221
      %p223 = scmp.ne.s32.totalorder %s215, %s217
      %p224 = scmp.eq.s32.totalorder %s34, 1
      %p225 = por %p223, %p224
      %p226 = scmp.ne.s32.totalorder %s217, %s218
      %p227 = scmp.eq.s32.totalorder %s34, 0
      %p228 = por %p226, %p227
      %p229 = scmp.ne.s32.totalorder %s217, %s218
      %p230 = scmp.eq.s32.totalorder %s35, 1
      %p231 = por %p229, %p230
      %p233 = scmp.ne.s32.totalorder %s218, %s232
      %p234 = scmp.eq.s32.totalorder %s35, 0
      %p235 = por %p233, %p234
      %s237 = sadd.s32 %s236, 1
      %p240 = scmp.eq.s32.totalorder %s29, 1
      %p241 = scmp.ne.s32.totalorder %s236, %s238
      %p242 = scmp.eq.s32.totalorder %s29, 0
      %p243 = por %p241, %p242
      %p244 = scmp.ne.s32.totalorder %s236, %s238
      %p245 = scmp.eq.s32.totalorder %s34, 1
      %p246 = por %p244, %p245
      %p247 = scmp.ne.s32.totalorder %s238, %s239
      %p248 = scmp.eq.s32.totalorder %s34, 0
      %p249 = por %p247, %p248
      %p250 = scmp.ne.s32.totalorder %s238, %s239
      %p251 = scmp.eq.s32.totalorder %s35, 1
      %p252 = por %p250, %p251
      %p254 = scmp.ne.s32.totalorder %s239, %s253
      %p255 = scmp.eq.s32.totalorder %s35, 0
      %p256 = por %p254, %p255
      %s258 = sadd.s32 %s257, 1
      %p261 = scmp.eq.s32.totalorder %s29, 1
      %p262 = scmp.ne.s32.totalorder %s257, %s259
      %p263 = scmp.eq.s32.totalorder %s29, 0
      %p264 = por %p262, %p263
      %p265 = scmp.ne.s32.totalorder %s257, %s259
      %p266 = scmp.eq.s32.totalorder %s34, 1
      %p267 = por %p265, %p266
      %p268 = scmp.ne.s32.totalorder %s259, %s260
      %p269 = scmp.eq.s32.totalorder %s34, 0
      %p270 = por %p268, %p269
      %p271 = scmp.ne.s32.totalorder %s259, %s260
      %p272 = scmp.eq.s32.totalorder %s35, 1
      %p273 = por %p271, %p272
      %p275 = scmp.ne.s32.totalorder %s260, %s274
      %p276 = scmp.eq.s32.totalorder %s35, 0
      %p277 = por %p275, %p276
      %s279 = sadd.s32 %s278, 1
      %p282 = scmp.eq.s32.totalorder %s29, 1
      %p283 = scmp.ne.s32.totalorder %s278, %s280
      %p284 = scmp.eq.s32.totalorder %s29, 0
      %p285 = por %p283, %p284
      %p286 = scmp.ne.s32.totalorder %s278, %s280
      %p287 = scmp.eq.s32.totalorder %s34, 1
      %p288 = por %p286, %p287
      %p289 = scmp.ne.s32.totalorder %s280, %s281
      %p290 = scmp.eq.s32.totalorder %s34, 0
      %p291 = por %p289, %p290
      %p292 = scmp.ne.s32.totalorder %s280, %s281
      %p293 = scmp.eq.s32.totalorder %s35, 1
      %p294 = por %p292, %p293
      %p296 = scmp.ne.s32.totalorder %s281, %s295
      %p297 = scmp.eq.s32.totalorder %s35, 0
      %p298 = por %p296, %p297
      %s300 = sadd.s32 %s299, 1
      %p303 = scmp.eq.s32.totalorder %s29, 1
      %p304 = scmp.ne.s32.totalorder %s299, %s301
      %p305 = scmp.eq.s32.totalorder %s29, 0
      %p306 = por %p304, %p305
      %p307 = scmp.ne.s32.totalorder %s299, %s301
      %p308 = scmp.eq.s32.totalorder %s34, 1
      %p309 = por %p307, %p308
      %p310 = scmp.ne.s32.totalorder %s301, %s302
      %p311 = scmp.eq.s32.totalorder %s34, 0
      %p312 = por %p310, %p311
      %p313 = scmp.ne.s32.totalorder %s301, %s302
      %p314 = scmp.eq.s32.totalorder %s35, 1
      %p315 = por %p313, %p314
      %p317 = scmp.ne.s32.totalorder %s302, %s316
      %p318 = scmp.eq.s32.totalorder %s35, 0
      %p319 = por %p317, %p318
      %s321 = sadd.s32 %s320, 1
      %p324 = scmp.eq.s32.totalorder %s29, 1
      %p325 = scmp.ne.s32.totalorder %s320, %s322
      %p326 = scmp.eq.s32.totalorder %s29, 0
      %p327 = por %p325, %p326
      %p328 = scmp.ne.s32.totalorder %s320, %s322
      %p329 = scmp.eq.s32.totalorder %s34, 1
      %p330 = por %p328, %p329
      %p331 = scmp.ne.s32.totalorder %s322, %s323
      %p332 = scmp.eq.s32.totalorder %s34, 0
      %p333 = por %p331, %p332
      %p334 = scmp.ne.s32.totalorder %s322, %s323
      %p335 = scmp.eq.s32.totalorder %s35, 1
      %p336 = por %p334, %p335
      %p338 = scmp.ne.s32.totalorder %s323, %s337
      %p339 = scmp.eq.s32.totalorder %s35, 0
      %p340 = por %p338, %p339
      %s341 = ssub.s32 %s29, %s36
      %p342 = scmp.eq.s32.totalorder %s341, 0
      %s344 = sadd.s32 %s343, 1
      %s345 = scalar_select %p342, %s343, %s344
      %p348 = pneg %p342
      %p349 = scmp.eq.s32.totalorder %s29, 1
      %p350 = por %p348, %p349
      %p351 = scmp.ne.s32.totalorder %s343, %s346
      %p352 = scmp.eq.s32.totalorder %s29, 0
      %p353 = por %p351, %p352
      %p354 = scmp.ne.s32.totalorder %s343, %s346
      %p355 = scmp.eq.s32.totalorder %s34, 1
      %p356 = por %p354, %p355
      %p357 = scmp.ne.s32.totalorder %s346, %s347
      %p358 = scmp.eq.s32.totalorder %s34, 0
      %p359 = por %p357, %p358
      %p360 = scmp.ne.s32.totalorder %s346, %s347
      %p361 = scmp.eq.s32.totalorder %s35, 1
      %p362 = por %p360, %p361
      %p364 = scmp.ne.s32.totalorder %s347, %s363
      %p365 = scmp.eq.s32.totalorder %s35, 0
      %p366 = por %p364, %p365
      %p367 = scmp.le.s32.totalorder 1, %s29
      %p368 = scmp.lt.s32.totalorder %s29, 3
      %p369 = pnand %p367, %p368
      %p370 = pneg %p369
      // Predicated region
      $region9: #{tpu_custom_call.1} parent=5 // pred_check
        _
      $region10: #{tpu_custom_call.1} parent=5 // pred_check_branch
        %372 = sbr.rel (%p369) target = $region12
      $region11: #{tpu_custom_call.1} parent=5 // pred_region
        %s373 = ssub.s32 %s29, 1
        // Predicated region
        $region13: #{tpu_custom_call.1} parent=11 // pred_check
          %p374 = pneg %p102
        $region14: #{tpu_custom_call.1} parent=11 // pred_check_branch
          %376 = sbr.rel (%p374) target = $region16
        $region15: #{tpu_custom_call.1} parent=11 // pred_region
          _
        $region16: #{tpu_custom_call.1} parent=11 // pred_fallthru
          _
        // Predicated region
        $region17: #{tpu_custom_call.1} parent=11 // pred_check
          %p377 = pneg %p123
        $region18: #{tpu_custom_call.1} parent=11 // pred_check_branch
          %379 = sbr.rel (%p377) target = $region20
        $region19: #{tpu_custom_call.1} parent=11 // pred_region
          _
        $region20: #{tpu_custom_call.1} parent=11 // pred_fallthru
          _
        // Predicated region
        $region21: #{tpu_custom_call.1} parent=11 // pred_check
          %p380 = pneg %p144
        $region22: #{tpu_custom_call.1} parent=11 // pred_check_branch
          %382 = sbr.rel (%p380) target = $region24
        $region23: #{tpu_custom_call.1} parent=11 // pred_region
          _
        $region24: #{tpu_custom_call.1} parent=11 // pred_fallthru
          _
        // Predicated region
        $region25: #{tpu_custom_call.1} parent=11 // pred_check
          %p383 = pneg %p165
        $region26: #{tpu_custom_call.1} parent=11 // pred_check_branch
          %385 = sbr.rel (%p383) target = $region28
        $region27: #{tpu_custom_call.1} parent=11 // pred_region
          _
        $region28: #{tpu_custom_call.1} parent=11 // pred_fallthru
          _
        // Predicated region
        $region29: #{tpu_custom_call.1} parent=11 // pred_check
          %p386 = pneg %p186
        $region30: #{tpu_custom_call.1} parent=11 // pred_check_branch
          %388 = sbr.rel (%p386) target = $region32
        $region31: #{tpu_custom_call.1} parent=11 // pred_region
          _
        $region32: #{tpu_custom_call.1} parent=11 // pred_fallthru
          _
        // Predicated region
        $region33: #{tpu_custom_call.1} parent=11 // pred_check
          %p389 = pneg %p207
        $region34: #{tpu_custom_call.1} parent=11 // pred_check_branch
          %391 = sbr.rel (%p389) target = $region36
        $region35: #{tpu_custom_call.1} parent=11 // pred_region
          _
        $region36: #{tpu_custom_call.1} parent=11 // pred_fallthru
          _
        // Predicated region
        $region37: #{tpu_custom_call.1} parent=11 // pred_check
          %p392 = pneg %p228
        $region38: #{tpu_custom_call.1} parent=11 // pred_check_branch
          %394 = sbr.rel (%p392) target = $region40
        $region39: #{tpu_custom_call.1} parent=11 // pred_region
          %396 = vsyncadd [#allocation7], 0
          %s397 = sshll.u32 %s8, 4
          %s398 = int_to_ptr.hbm [resolvable:$true] %s397
          %s399 = sshll.u32 [#allocation8], 4
          %s400 = int_to_ptr.vmem [resolvable:$true] %s399
          %405 = dma.hbm_to_vmem [thread:$0]  %s398, 512, %s400, [#allocation7], 128, 128, 8
        $region40: #{tpu_custom_call.1} parent=11 // pred_fallthru
          _
        // Predicated region
        $region41: #{tpu_custom_call.1} parent=11 // pred_check
          %p406 = pneg %p249
        $region42: #{tpu_custom_call.1} parent=11 // pred_check_branch
          %408 = sbr.rel (%p406) target = $region44
        $region43: #{tpu_custom_call.1} parent=11 // pred_region
          _
        $region44: #{tpu_custom_call.1} parent=11 // pred_fallthru
          _
        // Predicated region
        $region45: #{tpu_custom_call.1} parent=11 // pred_check
          %p409 = pneg %p270
        $region46: #{tpu_custom_call.1} parent=11 // pred_check_branch
          %411 = sbr.rel (%p409) target = $region48
        $region47: #{tpu_custom_call.1} parent=11 // pred_region
          _
        $region48: #{tpu_custom_call.1} parent=11 // pred_fallthru
          _
        // Predicated region
        $region49: #{tpu_custom_call.1} parent=11 // pred_check
          %p412 = pneg %p291
        $region50: #{tpu_custom_call.1} parent=11 // pred_check_branch
          %414 = sbr.rel (%p412) target = $region52
        $region51: #{tpu_custom_call.1} parent=11 // pred_region
          _
        $region52: #{tpu_custom_call.1} parent=11 // pred_fallthru
          _
        // Predicated region
        $region53: #{tpu_custom_call.1} parent=11 // pred_check
          %p415 = pneg %p312
        $region54: #{tpu_custom_call.1} parent=11 // pred_check_branch
          %417 = sbr.rel (%p415) target = $region56
        $region55: #{tpu_custom_call.1} parent=11 // pred_region
          _
        $region56: #{tpu_custom_call.1} parent=11 // pred_fallthru
          _
        // Predicated region
        $region57: #{tpu_custom_call.1} parent=11 // pred_check
          %p418 = pneg %p333
        $region58: #{tpu_custom_call.1} parent=11 // pred_check_branch
          %420 = sbr.rel (%p418) target = $region60
        $region59: #{tpu_custom_call.1} parent=11 // pred_region
          _
        $region60: #{tpu_custom_call.1} parent=11 // pred_fallthru
          _
      $region12: #{tpu_custom_call.1} parent=5 // pred_fallthru
        _
      %p421 = scmp.lt.s32.totalorder %s29, 2
      // Predicated region
      $region61: #{tpu_custom_call.1} parent=5 // pred_check
        %p422 = pneg %p421
      $region62: #{tpu_custom_call.1} parent=5 // pred_check_branch
        %424 = sbr.rel (%p422) target = $region64
      $region63: #{tpu_custom_call.1} parent=5 // pred_region
        // Predicated region
        $region65: #{tpu_custom_call.1} parent=63 // pred_check
          %p425 = pneg %p49
        $region66: #{tpu_custom_call.1} parent=63 // pred_check_branch
          %427 = sbr.rel (%p425) target = $region68
        $region67: #{tpu_custom_call.1} parent=63 // pred_region
          %s428 = sand.u32 %s39, 1
          %s429 = scalar_lea.sflag [#allocation4], %s428
          %s430 = sand.u32 %s39, 1
          %s431 = smul.addr %s430, 64
          %s432 = scalar_lea.vmem [#allocation3], %s431
          %s433 = smul.u32 8, %s29
          %435 = vsyncadd %s429, 0
          %s436 = smul.addr %s433, 8
          %s437 = scalar_lea.hbm %s0, %s436
          %s438 = sshll.u32 %s437, 4
          %s439 = int_to_ptr.hbm [resolvable:$true] %s438
          %s440 = sshll.u32 %s432, 4
          %s441 = int_to_ptr.vmem [resolvable:$true] %s440
          %446 = dma.hbm_to_vmem [thread:$0]  %s439, 1024, %s441, %s429, 128, 128, 8
        $region68: #{tpu_custom_call.1} parent=63 // pred_fallthru
          _
        // Predicated region
        $region69: #{tpu_custom_call.1} parent=63 // pred_check
          %p447 = pneg %p75
        $region70: #{tpu_custom_call.1} parent=63 // pred_check_branch
          %449 = sbr.rel (%p447) target = $region72
        $region71: #{tpu_custom_call.1} parent=63 // pred_region
          %s450 = sand.u32 %s29, 1
          %s451 = scalar_lea.sflag [#allocation7], %s450
          %s452 = sand.u32 %s65, 1
          %s453 = smul.addr %s452, 128
          %s454 = scalar_lea.vmem [#allocation6], %s453
          %s455 = smul.u32 8, %s29
          %457 = vsyncadd %s451, 0
          %s458 = smul.addr %s455, 2
          %s459 = smul.addr %s458, 8
          %s460 = scalar_lea.hbm %s1, %s459
          %s461 = sshll.u32 %s460, 4
          %s462 = int_to_ptr.hbm [resolvable:$true] %s461
          %s463 = sshll.u32 %s454, 4
          %s464 = int_to_ptr.vmem [resolvable:$true] %s463
          %469 = dma.hbm_to_vmem [thread:$0]  %s462, 2048, %s464, %s451, 128, 128, 8
        $region72: #{tpu_custom_call.1} parent=63 // pred_fallthru
          _
      $region64: #{tpu_custom_call.1} parent=5 // pred_fallthru
        _
      %p470 = scmp.le.s32.totalorder 1, %s29
      %p471 = scmp.lt.s32.totalorder %s29, 3
      %p472 = pnand %p470, %p471
      %p473 = pneg %p472
      // Predicated region
      $region73: #{tpu_custom_call.1} parent=5 // pred_check
        _
      $region74: #{tpu_custom_call.1} parent=5 // pred_check_branch
        %475 = sbr.rel (%p472) target = $region76
      $region75: #{tpu_custom_call.1} parent=5 // pred_region
        %s476 = ssub.s32 %s29, 1
        %s477 = sand.u32 %s42, 1
        %s478 = scalar_lea.sflag [#allocation4], %s477
        %s479 = sand.u32 %s42, 1
        %s480 = smul.addr %s479, 64
        %s481 = scalar_lea.vmem [#allocation3], %s480
        // Predicated region
        $region77: #{tpu_custom_call.1} parent=75 // pred_check
          %p482 = pneg %p55
        $region78: #{tpu_custom_call.1} parent=75 // pred_check_branch
          %484 = sbr.rel (%p482) target = $region80
        $region79: #{tpu_custom_call.1} parent=75 // pred_region
          %486 = dma.done %s478, 1024
        $region80: #{tpu_custom_call.1} parent=75 // pred_fallthru
          _
        %s487 = sand.u32 %s34, 1
        %s488 = scalar_lea.sflag [#allocation7], %s487
        %s489 = sand.u32 %s68, 1
        %s490 = smul.addr %s489, 128
        %s491 = scalar_lea.vmem [#allocation6], %s490
        // Predicated region
        $region81: #{tpu_custom_call.1} parent=75 // pred_check
          %p492 = pneg %p81
        $region82: #{tpu_custom_call.1} parent=75 // pred_check_branch
          %494 = sbr.rel (%p492) target = $region84
        $region83: #{tpu_custom_call.1} parent=75 // pred_region
          %496 = dma.done %s488, 2048
        $region84: #{tpu_custom_call.1} parent=75 // pred_fallthru
          _
        // Predicated region
        $region85: #{tpu_custom_call.1} parent=75 // pred_check
          %p497 = pneg %p228
        $region86: #{tpu_custom_call.1} parent=75 // pred_check_branch
          %499 = sbr.rel (%p497) target = $region88
        $region87: #{tpu_custom_call.1} parent=75 // pred_region
          %501 = dma.done [#allocation7], 512
        $region88: #{tpu_custom_call.1} parent=75 // pred_fallthru
          _
        %s502 = sand.u32 %s42, 1
        %s503 = scalar_lea.sflag [#allocation4], %s502
        %s504 = sand.u32 %s42, 1
        %s505 = smul.addr %s504, 64
        %s506 = scalar_lea.vmem [#allocation3], %s505
        %p507 = pneg %p55
        %p508 = pneg %p52
        %s509 = sand.u32 %s34, 1
        %s510 = scalar_lea.sflag [#allocation7], %s509
        %s511 = sand.u32 %s68, 1
        %s512 = smul.addr %s511, 128
        %s513 = scalar_lea.vmem [#allocation6], %s512
        %p514 = pneg %p81
        %p515 = pneg %p78
        %p516 = pneg %p102
        %p517 = pneg %p99
        %p518 = pneg %p123
        %p519 = pneg %p120
        %p520 = pneg %p144
        %p521 = pneg %p141
        %p522 = pneg %p165
        %p523 = pneg %p162
        %p524 = pneg %p186
        %p525 = pneg %p183
        %p526 = pneg %p207
        %p527 = pneg %p204
        %p528 = pneg %p228
        %p529 = pneg %p225
        %p530 = pneg %p249
        %p531 = pneg %p246
        %p532 = pneg %p270
        %p533 = pneg %p267
        %p534 = pneg %p291
        %p535 = pneg %p288
        %p536 = pneg %p312
        %p537 = pneg %p309
        %p538 = pneg %p333
        %p539 = pneg %p330
        %p540 = pneg %p359
        %p541 = pneg %p356
        %s542 = sand.u32 %s346, 1
        %s543 = scalar_lea.sflag [#allocation5], %s542
        %s544 = sand.u32 %s346, 1
        %s545 = smul.addr %s544, 64
        %s546 = scalar_lea.vmem [#allocation9], %s545
        %s547 = smul.u32 8, %s34
        %s548 = smul.u32 8, %s34
        %s549 = smul.u32 8, %s34
        %v550 = vld [vmem:[%s481] sm:$0xff]
        %v551 = vld [vmem:[%s481 + $0x8] sm:$0xff]
        %v552 = vld [vmem:[%s481 + $0x10] sm:$0xff]
        %v553 = vld [vmem:[%s481 + $0x18] sm:$0xff]
        %v554 = vld [vmem:[%s481 + $0x20] sm:$0xff]
        %v555 = vld [vmem:[%s481 + $0x28] sm:$0xff]
        %v556 = vld [vmem:[%s481 + $0x30] sm:$0xff]
        %v557 = vld [vmem:[%s481 + $0x38] sm:$0xff]
        %v558 = vld [vmem:[%s491] sm:$0xff]
        %v559 = vld [vmem:[%s491 + $0x8] sm:$0xff]
        %v560 = vld [vmem:[%s491 + $0x10] sm:$0xff]
        %v561 = vld [vmem:[%s491 + $0x18] sm:$0xff]
        %v562 = vld [vmem:[%s491 + $0x20] sm:$0xff]
        %v563 = vld [vmem:[%s491 + $0x28] sm:$0xff]
        %v564 = vld [vmem:[%s491 + $0x30] sm:$0xff]
        %v565 = vld [vmem:[%s491 + $0x38] sm:$0xff]
        %v566 = vld [vmem:[%s491 + $0x40] sm:$0xff]
        %v567 = vld [vmem:[%s491 + $0x48] sm:$0xff]
        %v568 = vld [vmem:[%s491 + $0x50] sm:$0xff]
        %v569 = vld [vmem:[%s491 + $0x58] sm:$0xff]
        %v570 = vld [vmem:[%s491 + $0x60] sm:$0xff]
        %v571 = vld [vmem:[%s491 + $0x68] sm:$0xff]
        %v572 = vld [vmem:[%s491 + $0x70] sm:$0xff]
        %v573 = vld [vmem:[%s491 + $0x78] sm:$0xff]
        %v574 = vld [vmem:[%s2] sm:$0xff]
        %v575 = vld [vmem:[%s2 + $0x8] sm:$0xff]
        %v576 = vld [vmem:[%s2 + $0x10] sm:$0xff]
        %v577 = vld [vmem:[%s2 + $0x18] sm:$0xff]
        %v578 = vld [vmem:[%s4] sm:$0x1]
        %v580 = vperm.slane %v578, 0
        %vm582 = vcmask 261120
        %v584 = vsel %vm582, %v550, 0
        %v587 = vsel %vm582, %v551, 0
        %v590 = vsel %vm582, %v552, 0
        %v593 = vsel %vm582, %v553, 0
        %v596 = vsel %vm582, %v554, 0
        %v599 = vsel %vm582, %v555, 0
        %v602 = vsel %vm582, %v556, 0
        %v605 = vsel %vm582, %v557, 0
        %607 = vmatpush.msra.mxu0 0.0
        %608 = vmatpush.msra.mxu0 0.0
        %609 = vmatpush.msra.mxu0 0.0
        %610 = vmatpush.msra.mxu0 0.0
        %611 = vmatpush.msra.mxu0 0.0
        %612 = vmatpush.msra.mxu0 0.0
        %613 = vmatpush.msra.mxu0 0.0
        %614 = vmatpush.msra.mxu0 0.0
        %615 = vmatpush.msra.mxu0 0.0
        %616 = vmatpush.msra.mxu0 0.0
        %617 = vmatpush.msra.mxu0 0.0
        %618 = vmatpush.msra.mxu0 0.0
        %619 = vmatpush.msra.mxu0 %v577
        %620 = vmatpush.msra.mxu0 %v576
        %621 = vmatpush.msra.mxu0 %v575
        %622 = vmatpush.msra.mxu0 %v574
        %623 = vmatmul.f32.gmra.mxu0 %v584
        %v624 = vpop.f32.mrf.mxu0
        %v625 = vadd.f32 %v580, %v624
        %626 = vmatmul.f32.gmra.mxu0 %v587
        %v627 = vpop.f32.mrf.mxu0
        %v628 = vadd.f32 %v580, %v627
        %629 = vmatmul.f32.gmra.mxu0 %v590
        %v630 = vpop.f32.mrf.mxu0
        %v631 = vadd.f32 %v580, %v630
        %632 = vmatmul.f32.gmra.mxu0 %v593
        %v633 = vpop.f32.mrf.mxu0
        %v634 = vadd.f32 %v580, %v633
        %635 = vmatmul.f32.gmra.mxu0 %v596
        %v636 = vpop.f32.mrf.mxu0
        %v637 = vadd.f32 %v580, %v636
        %638 = vmatmul.f32.gmra.mxu0 %v599
        %v639 = vpop.f32.mrf.mxu0
        %v640 = vadd.f32 %v580, %v639
        %641 = vmatmul.f32.gmra.mxu0 %v602
        %v642 = vpop.f32.mrf.mxu0
        %v643 = vadd.f32 %v580, %v642
        %644 = vmatmul.f32.gmra.mxu0 %v605
        %v645 = vpop.f32.mrf.mxu0
        %v646 = vadd.f32 %v580, %v645
        %647 = vdwg.mxu0
        %v648 = vld [vmem:[%s3] sm:$0xff]
        %v649 = vld [vmem:[%s3 + $0x8] sm:$0xff]
        %v650 = vld [vmem:[%s3 + $0x10] sm:$0xff]
        %v651 = vld [vmem:[%s3 + $0x18] sm:$0xff]
        %v652 = vld [vmem:[%s5] sm:$0x1]
        %v654 = vperm.slane %v652, 0
        %v657 = vsel %vm582, %v558, 0
        %v660 = vsel %vm582, %v559, 0
        %v663 = vsel %vm582, %v560, 0
        %v666 = vsel %vm582, %v561, 0
        %v669 = vsel %vm582, %v562, 0
        %v672 = vsel %vm582, %v563, 0
        %v675 = vsel %vm582, %v564, 0
        %v678 = vsel %vm582, %v565, 0
        %v681 = vsel %vm582, %v566, 0
        %v684 = vsel %vm582, %v567, 0
        %v687 = vsel %vm582, %v568, 0
        %v690 = vsel %vm582, %v569, 0
        %v693 = vsel %vm582, %v570, 0
        %v696 = vsel %vm582, %v571, 0
        %v699 = vsel %vm582, %v572, 0
        %v702 = vsel %vm582, %v573, 0
        %704 = vmatpush.msra.mxu0 0.0
        %705 = vmatpush.msra.mxu0 0.0
        %706 = vmatpush.msra.mxu0 0.0
        %707 = vmatpush.msra.mxu0 0.0
        %708 = vmatpush.msra.mxu0 0.0
        %709 = vmatpush.msra.mxu0 0.0
        %710 = vmatpush.msra.mxu0 0.0
        %711 = vmatpush.msra.mxu0 0.0
        %712 = vmatpush.msra.mxu0 0.0
        %713 = vmatpush.msra.mxu0 0.0
        %714 = vmatpush.msra.mxu0 0.0
        %715 = vmatpush.msra.mxu0 0.0
        %716 = vmatpush.msra.mxu0 %v651
        %717 = vmatpush.msra.mxu0 %v650
        %718 = vmatpush.msra.mxu0 %v649
        %719 = vmatpush.msra.mxu0 %v648
        %720 = vmatmul.f32.gmra.mxu0 %v657
        %v721 = vpop.f32.mrf.mxu0
        %v722 = vadd.f32 %v654, %v721
        %723 = vmatmul.f32.gmra.mxu0 %v660
        %v724 = vpop.f32.mrf.mxu0
        %v725 = vadd.f32 %v654, %v724
        %726 = vmatmul.f32.gmra.mxu0 %v663
        %v727 = vpop.f32.mrf.mxu0
        %v728 = vadd.f32 %v654, %v727
        %729 = vmatmul.f32.gmra.mxu0 %v666
        %v730 = vpop.f32.mrf.mxu0
        %v731 = vadd.f32 %v654, %v730
        %732 = vmatmul.f32.gmra.mxu0 %v669
        %v733 = vpop.f32.mrf.mxu0
        %v734 = vadd.f32 %v654, %v733
        %735 = vmatmul.f32.gmra.mxu0 %v672
        %v736 = vpop.f32.mrf.mxu0
        %v737 = vadd.f32 %v654, %v736
        %738 = vmatmul.f32.gmra.mxu0 %v675
        %v739 = vpop.f32.mrf.mxu0
        %v740 = vadd.f32 %v654, %v739
        %741 = vmatmul.f32.gmra.mxu0 %v678
        %v742 = vpop.f32.mrf.mxu0
        %v743 = vadd.f32 %v654, %v742
        %744 = vmatmul.f32.gmra.mxu0 %v681
        %v745 = vpop.f32.mrf.mxu0
        %v746 = vadd.f32 %v654, %v745
        %747 = vmatmul.f32.gmra.mxu0 %v684
        %v748 = vpop.f32.mrf.mxu0
        %v749 = vadd.f32 %v654, %v748
        %750 = vmatmul.f32.gmra.mxu0 %v687
        %v751 = vpop.f32.mrf.mxu0
        %v752 = vadd.f32 %v654, %v751
        %753 = vmatmul.f32.gmra.mxu0 %v690
        %v754 = vpop.f32.mrf.mxu0
        %v755 = vadd.f32 %v654, %v754
        %756 = vmatmul.f32.gmra.mxu0 %v693
        %v757 = vpop.f32.mrf.mxu0
        %v758 = vadd.f32 %v654, %v757
        %759 = vmatmul.f32.gmra.mxu0 %v696
        %v760 = vpop.f32.mrf.mxu0
        %v761 = vadd.f32 %v654, %v760
        %762 = vmatmul.f32.gmra.mxu0 %v699
        %v763 = vpop.f32.mrf.mxu0
        %v764 = vadd.f32 %v654, %v763
        %765 = vmatmul.f32.gmra.mxu0 %v702
        %v766 = vpop.f32.mrf.mxu0
        %v767 = vadd.f32 %v654, %v766
        %768 = vdwg.mxu0
        %vm769 = vcmask 64512
        %v771 = vsel %vm769, %v625, 0
        %v774 = vsel %vm769, %v722, 0
        %v777 = vsel %vm769, %v725, 0
        %779 = vmatpush.xpose.msra.mxu0 0.0
        %780 = vmatpush.xpose.msra.mxu0 0.0
        %781 = vmatpush.xpose.msra.mxu0 0.0
        %782 = vmatpush.xpose.msra.mxu0 0.0
        %783 = vmatpush.xpose.msra.mxu0 0.0
        %784 = vmatpush.xpose.msra.mxu0 0.0
        %785 = vmatpush.xpose.msra.mxu0 0.0
        %786 = vmatpush.xpose.msra.mxu0 0.0
        %787 = vmatpush.xpose.msra.mxu0 0.0
        %788 = vmatpush.xpose.msra.mxu0 0.0
        %789 = vmatpush.xpose.msra.mxu0 0.0
        %790 = vmatpush.xpose.msra.mxu0 0.0
        %791 = vmatpush.xpose.msra.mxu0 0.0
        %792 = vmatpush.xpose.msra.mxu0 0.0
        %793 = vmatpush.xpose.msra.mxu0 %v777
        %794 = vmatpush.xpose.msra.mxu0 %v774
        %795 = vmatmul.f32.gmra.mxu0 %v771
        %v796 = vpop.f32.mrf.mxu0
        %v797 = vadd.f32 0.0, %v796
        %798 = vdwg.mxu0
        %v800 = vsel %vm769, %v628, 0
        %v803 = vsel %vm769, %v728, 0
        %v806 = vsel %vm769, %v731, 0
        %808 = vmatpush.xpose.msra.mxu0 0.0
        %809 = vmatpush.xpose.msra.mxu0 0.0
        %810 = vmatpush.xpose.msra.mxu0 0.0
        %811 = vmatpush.xpose.msra.mxu0 0.0
        %812 = vmatpush.xpose.msra.mxu0 0.0
        %813 = vmatpush.xpose.msra.mxu0 0.0
        %814 = vmatpush.xpose.msra.mxu0 0.0
        %815 = vmatpush.xpose.msra.mxu0 0.0
        %816 = vmatpush.xpose.msra.mxu0 0.0
        %817 = vmatpush.xpose.msra.mxu0 0.0
        %818 = vmatpush.xpose.msra.mxu0 0.0
        %819 = vmatpush.xpose.msra.mxu0 0.0
        %820 = vmatpush.xpose.msra.mxu0 0.0
        %821 = vmatpush.xpose.msra.mxu0 0.0
        %822 = vmatpush.xpose.msra.mxu0 %v806
        %823 = vmatpush.xpose.msra.mxu0 %v803
        %824 = vmatmul.f32.gmra.mxu0 %v800
        %v825 = vpop.f32.mrf.mxu0
        %v826 = vadd.f32 0.0, %v825
        %827 = vdwg.mxu0
        %v829 = vsel %vm769, %v631, 0
        %v832 = vsel %vm769, %v734, 0
        %v835 = vsel %vm769, %v737, 0
        %837 = vmatpush.xpose.msra.mxu0 0.0
        %838 = vmatpush.xpose.msra.mxu0 0.0
        %839 = vmatpush.xpose.msra.mxu0 0.0
        %840 = vmatpush.xpose.msra.mxu0 0.0
        %841 = vmatpush.xpose.msra.mxu0 0.0
        %842 = vmatpush.xpose.msra.mxu0 0.0
        %843 = vmatpush.xpose.msra.mxu0 0.0
        %844 = vmatpush.xpose.msra.mxu0 0.0
        %845 = vmatpush.xpose.msra.mxu0 0.0
        %846 = vmatpush.xpose.msra.mxu0 0.0
        %847 = vmatpush.xpose.msra.mxu0 0.0
        %848 = vmatpush.xpose.msra.mxu0 0.0
        %849 = vmatpush.xpose.msra.mxu0 0.0
        %850 = vmatpush.xpose.msra.mxu0 0.0
        %851 = vmatpush.xpose.msra.mxu0 %v835
        %852 = vmatpush.xpose.msra.mxu0 %v832
        %853 = vmatmul.f32.gmra.mxu0 %v829
        %v854 = vpop.f32.mrf.mxu0
        %v855 = vadd.f32 0.0, %v854
        %856 = vdwg.mxu0
        %v858 = vsel %vm769, %v634, 0
        %v861 = vsel %vm769, %v740, 0
        %v864 = vsel %vm769, %v743, 0
        %866 = vmatpush.xpose.msra.mxu0 0.0
        %867 = vmatpush.xpose.msra.mxu0 0.0
        %868 = vmatpush.xpose.msra.mxu0 0.0
        %869 = vmatpush.xpose.msra.mxu0 0.0
        %870 = vmatpush.xpose.msra.mxu0 0.0
        %871 = vmatpush.xpose.msra.mxu0 0.0
        %872 = vmatpush.xpose.msra.mxu0 0.0
        %873 = vmatpush.xpose.msra.mxu0 0.0
        %874 = vmatpush.xpose.msra.mxu0 0.0
        %875 = vmatpush.xpose.msra.mxu0 0.0
        %876 = vmatpush.xpose.msra.mxu0 0.0
        %877 = vmatpush.xpose.msra.mxu0 0.0
        %878 = vmatpush.xpose.msra.mxu0 0.0
        %879 = vmatpush.xpose.msra.mxu0 0.0
        %880 = vmatpush.xpose.msra.mxu0 %v864
        %881 = vmatpush.xpose.msra.mxu0 %v861
        %882 = vmatmul.f32.gmra.mxu0 %v858
        %v883 = vpop.f32.mrf.mxu0
        %v884 = vadd.f32 0.0, %v883
        %885 = vdwg.mxu0
        %v887 = vsel %vm769, %v637, 0
        %v890 = vsel %vm769, %v746, 0
        %v893 = vsel %vm769, %v749, 0
        %895 = vmatpush.xpose.msra.mxu0 0.0
        %896 = vmatpush.xpose.msra.mxu0 0.0
        %897 = vmatpush.xpose.msra.mxu0 0.0
        %898 = vmatpush.xpose.msra.mxu0 0.0
        %899 = vmatpush.xpose.msra.mxu0 0.0
        %900 = vmatpush.xpose.msra.mxu0 0.0
        %901 = vmatpush.xpose.msra.mxu0 0.0
        %902 = vmatpush.xpose.msra.mxu0 0.0
        %903 = vmatpush.xpose.msra.mxu0 0.0
        %904 = vmatpush.xpose.msra.mxu0 0.0
        %905 = vmatpush.xpose.msra.mxu0 0.0
        %906 = vmatpush.xpose.msra.mxu0 0.0
        %907 = vmatpush.xpose.msra.mxu0 0.0
        %908 = vmatpush.xpose.msra.mxu0 0.0
        %909 = vmatpush.xpose.msra.mxu0 %v893
        %910 = vmatpush.xpose.msra.mxu0 %v890
        %911 = vmatmul.f32.gmra.mxu0 %v887
        %v912 = vpop.f32.mrf.mxu0
        %v913 = vadd.f32 0.0, %v912
        %914 = vdwg.mxu0
        %v916 = vsel %vm769, %v640, 0
        %v919 = vsel %vm769, %v752, 0
        %v922 = vsel %vm769, %v755, 0
        %924 = vmatpush.xpose.msra.mxu0 0.0
        %925 = vmatpush.xpose.msra.mxu0 0.0
        %926 = vmatpush.xpose.msra.mxu0 0.0
        %927 = vmatpush.xpose.msra.mxu0 0.0
        %928 = vmatpush.xpose.msra.mxu0 0.0
        %929 = vmatpush.xpose.msra.mxu0 0.0
        %930 = vmatpush.xpose.msra.mxu0 0.0
        %931 = vmatpush.xpose.msra.mxu0 0.0
        %932 = vmatpush.xpose.msra.mxu0 0.0
        %933 = vmatpush.xpose.msra.mxu0 0.0
        %934 = vmatpush.xpose.msra.mxu0 0.0
        %935 = vmatpush.xpose.msra.mxu0 0.0
        %936 = vmatpush.xpose.msra.mxu0 0.0
        %937 = vmatpush.xpose.msra.mxu0 0.0
        %938 = vmatpush.xpose.msra.mxu0 %v922
        %939 = vmatpush.xpose.msra.mxu0 %v919
        %940 = vmatmul.f32.gmra.mxu0 %v916
        %v941 = vpop.f32.mrf.mxu0
        %v942 = vadd.f32 0.0, %v941
        %943 = vdwg.mxu0
        %v945 = vsel %vm769, %v643, 0
        %v948 = vsel %vm769, %v758, 0
        %v951 = vsel %vm769, %v761, 0
        %953 = vmatpush.xpose.msra.mxu0 0.0
        %954 = vmatpush.xpose.msra.mxu0 0.0
        %955 = vmatpush.xpose.msra.mxu0 0.0
        %956 = vmatpush.xpose.msra.mxu0 0.0
        %957 = vmatpush.xpose.msra.mxu0 0.0
        %958 = vmatpush.xpose.msra.mxu0 0.0
        %959 = vmatpush.xpose.msra.mxu0 0.0
        %960 = vmatpush.xpose.msra.mxu0 0.0
        %961 = vmatpush.xpose.msra.mxu0 0.0
        %962 = vmatpush.xpose.msra.mxu0 0.0
        %963 = vmatpush.xpose.msra.mxu0 0.0
        %964 = vmatpush.xpose.msra.mxu0 0.0
        %965 = vmatpush.xpose.msra.mxu0 0.0
        %966 = vmatpush.xpose.msra.mxu0 0.0
        %967 = vmatpush.xpose.msra.mxu0 %v951
        %968 = vmatpush.xpose.msra.mxu0 %v948
        %969 = vmatmul.f32.gmra.mxu0 %v945
        %v970 = vpop.f32.mrf.mxu0
        %v971 = vadd.f32 0.0, %v970
        %972 = vdwg.mxu0
        %v974 = vsel %vm769, %v646, 0
        %v977 = vsel %vm769, %v764, 0
        %v980 = vsel %vm769, %v767, 0
        %982 = vmatpush.xpose.msra.mxu0 0.0
        %983 = vmatpush.xpose.msra.mxu0 0.0
        %984 = vmatpush.xpose.msra.mxu0 0.0
        %985 = vmatpush.xpose.msra.mxu0 0.0
        %986 = vmatpush.xpose.msra.mxu0 0.0
        %987 = vmatpush.xpose.msra.mxu0 0.0
        %988 = vmatpush.xpose.msra.mxu0 0.0
        %989 = vmatpush.xpose.msra.mxu0 0.0
        %990 = vmatpush.xpose.msra.mxu0 0.0
        %991 = vmatpush.xpose.msra.mxu0 0.0
        %992 = vmatpush.xpose.msra.mxu0 0.0
        %993 = vmatpush.xpose.msra.mxu0 0.0
        %994 = vmatpush.xpose.msra.mxu0 0.0
        %995 = vmatpush.xpose.msra.mxu0 0.0
        %996 = vmatpush.xpose.msra.mxu0 %v980
        %997 = vmatpush.xpose.msra.mxu0 %v977
        %998 = vmatmul.f32.gmra.mxu0 %v974
        %v999 = vpop.f32.mrf.mxu0
        %v1000 = vadd.f32 0.0, %v999
        %1001 = vdwg.mxu0
        %v1002 = vmul.f32 %v797, 0.35355338
        %v1003 = vmul.f32 %v826, 0.35355338
        %v1004 = vmul.f32 %v855, 0.35355338
        %v1005 = vmul.f32 %v884, 0.35355338
        %v1006 = vmul.f32 %v913, 0.35355338
        %v1007 = vmul.f32 %v942, 0.35355338
        %v1008 = vmul.f32 %v971, 0.35355338
        %v1009 = vmul.f32 %v1000, 0.35355338
        %vm1010 = vcmask 130048
        %v1011 = vsel %vm1010, %v1002, -inf
        %1012 = vmax.xlane.f32.xlu0 %v1011
        %v1013 = vpop.xlane.xlu0 %1012
        %v1014 = vsel %vm1010, %v1003, -inf
        %1015 = vmax.xlane.f32.xlu0 %v1014
        %v1016 = vpop.xlane.xlu0 %1015
        %v1017 = vsel %vm1010, %v1004, -inf
        %1018 = vmax.xlane.f32.xlu0 %v1017
        %v1019 = vpop.xlane.xlu0 %1018
        %v1020 = vsel %vm1010, %v1005, -inf
        %1021 = vmax.xlane.f32.xlu0 %v1020
        %v1022 = vpop.xlane.xlu0 %1021
        %v1023 = vsel %vm1010, %v1006, -inf
        %1024 = vmax.xlane.f32.xlu0 %v1023
        %v1025 = vpop.xlane.xlu0 %1024
        %v1026 = vsel %vm1010, %v1007, -inf
        %1027 = vmax.xlane.f32.xlu0 %v1026
        %v1028 = vpop.xlane.xlu0 %1027
        %v1029 = vsel %vm1010, %v1008, -inf
        %1030 = vmax.xlane.f32.xlu0 %v1029
        %v1031 = vpop.xlane.xlu0 %1030
        %v1032 = vsel %vm1010, %v1009, -inf
        %1033 = vmax.xlane.f32.xlu0 %v1032
        %v1034 = vpop.xlane.xlu0 %1033
        %v1035 = vsub.f32 %v1002, %v1013
        %v1036 = vsub.f32 %v1003, %v1016
        %v1037 = vsub.f32 %v1004, %v1019
        %v1038 = vsub.f32 %v1005, %v1022
        %v1039 = vsub.f32 %v1006, %v1025
        %v1040 = vsub.f32 %v1007, %v1028
        %v1041 = vsub.f32 %v1008, %v1031
        %v1042 = vsub.f32 %v1009, %v1034
        %v1043 = vmul.f32 %v1035, 1.442695
        %v1044 = vpow.pop %v1043
        %v1045 = vmul.f32 %v1036, 1.442695
        %v1046 = vpow.pop %v1045
        %v1047 = vmul.f32 %v1037, 1.442695
        %v1048 = vpow.pop %v1047
        %v1049 = vmul.f32 %v1038, 1.442695
        %v1050 = vpow.pop %v1049
        %v1051 = vmul.f32 %v1039, 1.442695
        %v1052 = vpow.pop %v1051
        %v1053 = vmul.f32 %v1040, 1.442695
        %v1054 = vpow.pop %v1053
        %v1055 = vmul.f32 %v1041, 1.442695
        %v1056 = vpow.pop %v1055
        %v1057 = vmul.f32 %v1042, 1.442695
        %v1058 = vpow.pop %v1057
        %v1059 = vsel %vm1010, %v1044, 0.0
        %1060 = vadd.xlane.f32.xlu0 %v1059
        %v1061 = vpop.xlane.xlu0 %1060
        %v1062 = vsel %vm1010, %v1046, 0.0
        %1063 = vadd.xlane.f32.xlu0 %v1062
        %v1064 = vpop.xlane.xlu0 %1063
        %v1065 = vsel %vm1010, %v1048, 0.0
        %1066 = vadd.xlane.f32.xlu0 %v1065
        %v1067 = vpop.xlane.xlu0 %1066
        %v1068 = vsel %vm1010, %v1050, 0.0
        %1069 = vadd.xlane.f32.xlu0 %v1068
        %v1070 = vpop.xlane.xlu0 %1069
        %v1071 = vsel %vm1010, %v1052, 0.0
        %1072 = vadd.xlane.f32.xlu0 %v1071
        %v1073 = vpop.xlane.xlu0 %1072
        %v1074 = vsel %vm1010, %v1054, 0.0
        %1075 = vadd.xlane.f32.xlu0 %v1074
        %v1076 = vpop.xlane.xlu0 %1075
        %v1077 = vsel %vm1010, %v1056, 0.0
        %1078 = vadd.xlane.f32.xlu0 %v1077
        %v1079 = vpop.xlane.xlu0 %1078
        %v1080 = vsel %vm1010, %v1058, 0.0
        %1081 = vadd.xlane.f32.xlu0 %v1080
        %v1082 = vpop.xlane.xlu0 %1081
        %v1083 = vrcp.pop %v1061
        %v1084 = vrcp.pop %v1064
        %v1085 = vrcp.pop %v1067
        %v1086 = vrcp.pop %v1070
        %v1087 = vrcp.pop %v1073
        %v1088 = vrcp.pop %v1076
        %v1089 = vrcp.pop %v1079
        %v1090 = vrcp.pop %v1082
        %v1091 = vmul.f32 %v1044, %v1083
        %v1092 = vmul.f32 %v1046, %v1084
        %v1093 = vmul.f32 %v1048, %v1085
        %v1094 = vmul.f32 %v1050, %v1086
        %v1095 = vmul.f32 %v1052, %v1087
        %v1096 = vmul.f32 %v1054, %v1088
        %v1097 = vmul.f32 %v1056, %v1089
        %v1098 = vmul.f32 %v1058, %v1090
        %1099 = vrot.lane.b32.xlu0 %v722, 96
        %v1100 = vpop.permute.xlu0 %1099
        %1101 = vrot.lane.b32.xlu0 %v725, 96
        %v1102 = vpop.permute.xlu0 %1101
        %v1106 = vsel %vm1010, %v1091, 0
        %1108 = vmatpush.msra.mxu0 0.0
        %1109 = vmatpush.msra.mxu0 0.0
        %1110 = vmatpush.msra.mxu0 0.0
        %1111 = vmatpush.msra.mxu0 0.0
        %1112 = vmatpush.msra.mxu0 0.0
        %1113 = vmatpush.msra.mxu0 0.0
        %1114 = vmatpush.msra.mxu0 0.0
        %1115 = vmatpush.msra.mxu0 0.0
        %1116 = vmatpush.msra.mxu0 0.0
        %1117 = vmatpush.msra.mxu0 0.0
        %1118 = vmatpush.msra.mxu0 0.0
        %1119 = vmatpush.msra.mxu0 0.0
        %1120 = vmatpush.msra.mxu0 0.0
        %1121 = vmatpush.msra.mxu0 0.0
        %1122 = vmatpush.msra.mxu0 %v1102
        %1123 = vmatpush.msra.mxu0 %v1100
        %1124 = vmatmul.f32.gmra.mxu0 %v1106
        %v1125 = vpop.f32.mrf.mxu0
        %v1126 = vadd.f32 0.0, %v1125
        %1127 = vdwg.mxu0
        %1128 = vrot.lane.b32.xlu0 %v728, 96
        %v1129 = vpop.permute.xlu0 %1128
        %1130 = vrot.lane.b32.xlu0 %v731, 96
        %v1131 = vpop.permute.xlu0 %1130
        %v1135 = vsel %vm1010, %v1092, 0
        %1137 = vmatpush.msra.mxu0 0.0
        %1138 = vmatpush.msra.mxu0 0.0
        %1139 = vmatpush.msra.mxu0 0.0
        %1140 = vmatpush.msra.mxu0 0.0
        %1141 = vmatpush.msra.mxu0 0.0
        %1142 = vmatpush.msra.mxu0 0.0
        %1143 = vmatpush.msra.mxu0 0.0
        %1144 = vmatpush.msra.mxu0 0.0
        %1145 = vmatpush.msra.mxu0 0.0
        %1146 = vmatpush.msra.mxu0 0.0
        %1147 = vmatpush.msra.mxu0 0.0
        %1148 = vmatpush.msra.mxu0 0.0
        %1149 = vmatpush.msra.mxu0 0.0
        %1150 = vmatpush.msra.mxu0 0.0
        %1151 = vmatpush.msra.mxu0 %v1131
        %1152 = vmatpush.msra.mxu0 %v1129
        %1153 = vmatmul.f32.gmra.mxu0 %v1135
        %v1154 = vpop.f32.mrf.mxu0
        %v1155 = vadd.f32 0.0, %v1154
        %1156 = vdwg.mxu0
        %1157 = vrot.lane.b32.xlu0 %v734, 96
        %v1158 = vpop.permute.xlu0 %1157
        %1159 = vrot.lane.b32.xlu0 %v737, 96
        %v1160 = vpop.permute.xlu0 %1159
        %v1164 = vsel %vm1010, %v1093, 0
        %1166 = vmatpush.msra.mxu0 0.0
        %1167 = vmatpush.msra.mxu0 0.0
        %1168 = vmatpush.msra.mxu0 0.0
        %1169 = vmatpush.msra.mxu0 0.0
        %1170 = vmatpush.msra.mxu0 0.0
        %1171 = vmatpush.msra.mxu0 0.0
        %1172 = vmatpush.msra.mxu0 0.0
        %1173 = vmatpush.msra.mxu0 0.0
        %1174 = vmatpush.msra.mxu0 0.0
        %1175 = vmatpush.msra.mxu0 0.0
        %1176 = vmatpush.msra.mxu0 0.0
        %1177 = vmatpush.msra.mxu0 0.0
        %1178 = vmatpush.msra.mxu0 0.0
        %1179 = vmatpush.msra.mxu0 0.0
        %1180 = vmatpush.msra.mxu0 %v1160
        %1181 = vmatpush.msra.mxu0 %v1158
        %1182 = vmatmul.f32.gmra.mxu0 %v1164
        %v1183 = vpop.f32.mrf.mxu0
        %v1184 = vadd.f32 0.0, %v1183
        %1185 = vdwg.mxu0
        %1186 = vrot.lane.b32.xlu0 %v740, 96
        %v1187 = vpop.permute.xlu0 %1186
        %1188 = vrot.lane.b32.xlu0 %v743, 96
        %v1189 = vpop.permute.xlu0 %1188
        %v1193 = vsel %vm1010, %v1094, 0
        %1195 = vmatpush.msra.mxu0 0.0
        %1196 = vmatpush.msra.mxu0 0.0
        %1197 = vmatpush.msra.mxu0 0.0
        %1198 = vmatpush.msra.mxu0 0.0
        %1199 = vmatpush.msra.mxu0 0.0
        %1200 = vmatpush.msra.mxu0 0.0
        %1201 = vmatpush.msra.mxu0 0.0
        %1202 = vmatpush.msra.mxu0 0.0
        %1203 = vmatpush.msra.mxu0 0.0
        %1204 = vmatpush.msra.mxu0 0.0
        %1205 = vmatpush.msra.mxu0 0.0
        %1206 = vmatpush.msra.mxu0 0.0
        %1207 = vmatpush.msra.mxu0 0.0
        %1208 = vmatpush.msra.mxu0 0.0
        %1209 = vmatpush.msra.mxu0 %v1189
        %1210 = vmatpush.msra.mxu0 %v1187
        %1211 = vmatmul.f32.gmra.mxu0 %v1193
        %v1212 = vpop.f32.mrf.mxu0
        %v1213 = vadd.f32 0.0, %v1212
        %1214 = vdwg.mxu0
        %1215 = vrot.lane.b32.xlu0 %v746, 96
        %v1216 = vpop.permute.xlu0 %1215
        %1217 = vrot.lane.b32.xlu0 %v749, 96
        %v1218 = vpop.permute.xlu0 %1217
        %v1222 = vsel %vm1010, %v1095, 0
        %1224 = vmatpush.msra.mxu0 0.0
        %1225 = vmatpush.msra.mxu0 0.0
        %1226 = vmatpush.msra.mxu0 0.0
        %1227 = vmatpush.msra.mxu0 0.0
        %1228 = vmatpush.msra.mxu0 0.0
        %1229 = vmatpush.msra.mxu0 0.0
        %1230 = vmatpush.msra.mxu0 0.0
        %1231 = vmatpush.msra.mxu0 0.0
        %1232 = vmatpush.msra.mxu0 0.0
        %1233 = vmatpush.msra.mxu0 0.0
        %1234 = vmatpush.msra.mxu0 0.0
        %1235 = vmatpush.msra.mxu0 0.0
        %1236 = vmatpush.msra.mxu0 0.0
        %1237 = vmatpush.msra.mxu0 0.0
        %1238 = vmatpush.msra.mxu0 %v1218
        %1239 = vmatpush.msra.mxu0 %v1216
        %1240 = vmatmul.f32.gmra.mxu0 %v1222
        %v1241 = vpop.f32.mrf.mxu0
        %v1242 = vadd.f32 0.0, %v1241
        %1243 = vdwg.mxu0
        %1244 = vrot.lane.b32.xlu0 %v752, 96
        %v1245 = vpop.permute.xlu0 %1244
        %1246 = vrot.lane.b32.xlu0 %v755, 96
        %v1247 = vpop.permute.xlu0 %1246
        %v1251 = vsel %vm1010, %v1096, 0
        %1253 = vmatpush.msra.mxu0 0.0
        %1254 = vmatpush.msra.mxu0 0.0
        %1255 = vmatpush.msra.mxu0 0.0
        %1256 = vmatpush.msra.mxu0 0.0
        %1257 = vmatpush.msra.mxu0 0.0
        %1258 = vmatpush.msra.mxu0 0.0
        %1259 = vmatpush.msra.mxu0 0.0
        %1260 = vmatpush.msra.mxu0 0.0
        %1261 = vmatpush.msra.mxu0 0.0
        %1262 = vmatpush.msra.mxu0 0.0
        %1263 = vmatpush.msra.mxu0 0.0
        %1264 = vmatpush.msra.mxu0 0.0
        %1265 = vmatpush.msra.mxu0 0.0
        %1266 = vmatpush.msra.mxu0 0.0
        %1267 = vmatpush.msra.mxu0 %v1247
        %1268 = vmatpush.msra.mxu0 %v1245
        %1269 = vmatmul.f32.gmra.mxu0 %v1251
        %v1270 = vpop.f32.mrf.mxu0
        %v1271 = vadd.f32 0.0, %v1270
        %1272 = vdwg.mxu0
        %1273 = vrot.lane.b32.xlu0 %v758, 96
        %v1274 = vpop.permute.xlu0 %1273
        %1275 = vrot.lane.b32.xlu0 %v761, 96
        %v1276 = vpop.permute.xlu0 %1275
        %v1280 = vsel %vm1010, %v1097, 0
        %1282 = vmatpush.msra.mxu0 0.0
        %1283 = vmatpush.msra.mxu0 0.0
        %1284 = vmatpush.msra.mxu0 0.0
        %1285 = vmatpush.msra.mxu0 0.0
        %1286 = vmatpush.msra.mxu0 0.0
        %1287 = vmatpush.msra.mxu0 0.0
        %1288 = vmatpush.msra.mxu0 0.0
        %1289 = vmatpush.msra.mxu0 0.0
        %1290 = vmatpush.msra.mxu0 0.0
        %1291 = vmatpush.msra.mxu0 0.0
        %1292 = vmatpush.msra.mxu0 0.0
        %1293 = vmatpush.msra.mxu0 0.0
        %1294 = vmatpush.msra.mxu0 0.0
        %1295 = vmatpush.msra.mxu0 0.0
        %1296 = vmatpush.msra.mxu0 %v1276
        %1297 = vmatpush.msra.mxu0 %v1274
        %1298 = vmatmul.f32.gmra.mxu0 %v1280
        %v1299 = vpop.f32.mrf.mxu0
        %v1300 = vadd.f32 0.0, %v1299
        %1301 = vdwg.mxu0
        %1302 = vrot.lane.b32.xlu0 %v764, 96
        %v1303 = vpop.permute.xlu0 %1302
        %1304 = vrot.lane.b32.xlu0 %v767, 96
        %v1305 = vpop.permute.xlu0 %1304
        %v1309 = vsel %vm1010, %v1098, 0
        %1311 = vmatpush.msra.mxu0 0.0
        %1312 = vmatpush.msra.mxu0 0.0
        %1313 = vmatpush.msra.mxu0 0.0
        %1314 = vmatpush.msra.mxu0 0.0
        %1315 = vmatpush.msra.mxu0 0.0
        %1316 = vmatpush.msra.mxu0 0.0
        %1317 = vmatpush.msra.mxu0 0.0
        %1318 = vmatpush.msra.mxu0 0.0
        %1319 = vmatpush.msra.mxu0 0.0
        %1320 = vmatpush.msra.mxu0 0.0
        %1321 = vmatpush.msra.mxu0 0.0
        %1322 = vmatpush.msra.mxu0 0.0
        %1323 = vmatpush.msra.mxu0 0.0
        %1324 = vmatpush.msra.mxu0 0.0
        %1325 = vmatpush.msra.mxu0 %v1305
        %1326 = vmatpush.msra.mxu0 %v1303
        %1327 = vmatmul.f32.gmra.mxu0 %v1309
        %v1328 = vpop.f32.mrf.mxu0
        %v1329 = vadd.f32 0.0, %v1328
        %1330 = vdwg.mxu0
        %1331 = vst.msk [vmem:[#allocation2] sm:$0xff] %vm769, %v1126
        %1332 = vst.msk [vmem:[#allocation2 + $0x8] sm:$0xff] %vm769, %v1155
        %1333 = vst.msk [vmem:[#allocation2 + $0x10] sm:$0xff] %vm769, %v1184
        %1334 = vst.msk [vmem:[#allocation2 + $0x18] sm:$0xff] %vm769, %v1213
        %1335 = vst.msk [vmem:[#allocation2 + $0x20] sm:$0xff] %vm769, %v1242
        %1336 = vst.msk [vmem:[#allocation2 + $0x28] sm:$0xff] %vm769, %v1271
        %1337 = vst.msk [vmem:[#allocation2 + $0x30] sm:$0xff] %vm769, %v1300
        %1338 = vst.msk [vmem:[#allocation2 + $0x38] sm:$0xff] %vm769, %v1329
        %1339 = vrot.lane.b32.xlu0 %v625, 120
        %v1340 = vpop.permute.xlu0 %1339
        %1341 = vrot.lane.b32.xlu0 %v722, 120
        %v1342 = vpop.permute.xlu0 %1341
        %1343 = vrot.lane.b32.xlu0 %v725, 120
        %v1344 = vpop.permute.xlu0 %1343
        %v1345 = vsel %vm769, %v1340, 0
        %v1347 = vsel %vm769, %v1342, 0
        %v1349 = vsel %vm769, %v1344, 0
        %1351 = vmatpush.xpose.msra.mxu0 0.0
        %1352 = vmatpush.xpose.msra.mxu0 0.0
        %1353 = vmatpush.xpose.msra.mxu0 0.0
        %1354 = vmatpush.xpose.msra.mxu0 0.0
        %1355 = vmatpush.xpose.msra.mxu0 0.0
        %1356 = vmatpush.xpose.msra.mxu0 0.0
        %1357 = vmatpush.xpose.msra.mxu0 0.0
        %1358 = vmatpush.xpose.msra.mxu0 0.0
        %1359 = vmatpush.xpose.msra.mxu0 0.0
        %1360 = vmatpush.xpose.msra.mxu0 0.0
        %1361 = vmatpush.xpose.msra.mxu0 0.0
        %1362 = vmatpush.xpose.msra.mxu0 0.0
        %1363 = vmatpush.xpose.msra.mxu0 0.0
        %1364 = vmatpush.xpose.msra.mxu0 0.0
        %1365 = vmatpush.xpose.msra.mxu0 %v1349
        %1366 = vmatpush.xpose.msra.mxu0 %v1347
        %1367 = vmatmul.f32.gmra.mxu0 %v1345
        %v1368 = vpop.f32.mrf.mxu0
        %v1369 = vadd.f32 0.0, %v1368
        %1370 = vdwg.mxu0
        %1371 = vrot.lane.b32.xlu0 %v628, 120
        %v1372 = vpop.permute.xlu0 %1371
        %1373 = vrot.lane.b32.xlu0 %v728, 120
        %v1374 = vpop.permute.xlu0 %1373
        %1375 = vrot.lane.b32.xlu0 %v731, 120
        %v1376 = vpop.permute.xlu0 %1375
        %v1377 = vsel %vm769, %v1372, 0
        %v1379 = vsel %vm769, %v1374, 0
        %v1381 = vsel %vm769, %v1376, 0
        %1383 = vmatpush.xpose.msra.mxu0 0.0
        %1384 = vmatpush.xpose.msra.mxu0 0.0
        %1385 = vmatpush.xpose.msra.mxu0 0.0
        %1386 = vmatpush.xpose.msra.mxu0 0.0
        %1387 = vmatpush.xpose.msra.mxu0 0.0
        %1388 = vmatpush.xpose.msra.mxu0 0.0
        %1389 = vmatpush.xpose.msra.mxu0 0.0
        %1390 = vmatpush.xpose.msra.mxu0 0.0
        %1391 = vmatpush.xpose.msra.mxu0 0.0
        %1392 = vmatpush.xpose.msra.mxu0 0.0
        %1393 = vmatpush.xpose.msra.mxu0 0.0
        %1394 = vmatpush.xpose.msra.mxu0 0.0
        %1395 = vmatpush.xpose.msra.mxu0 0.0
        %1396 = vmatpush.xpose.msra.mxu0 0.0
        %1397 = vmatpush.xpose.msra.mxu0 %v1381
        %1398 = vmatpush.xpose.msra.mxu0 %v1379
        %1399 = vmatmul.f32.gmra.mxu0 %v1377
        %v1400 = vpop.f32.mrf.mxu0
        %v1401 = vadd.f32 0.0, %v1400
        %1402 = vdwg.mxu0
        %1403 = vrot.lane.b32.xlu0 %v631, 120
        %v1404 = vpop.permute.xlu0 %1403
        %1405 = vrot.lane.b32.xlu0 %v734, 120
        %v1406 = vpop.permute.xlu0 %1405
        %1407 = vrot.lane.b32.xlu0 %v737, 120
        %v1408 = vpop.permute.xlu0 %1407
        %v1409 = vsel %vm769, %v1404, 0
        %v1411 = vsel %vm769, %v1406, 0
        %v1413 = vsel %vm769, %v1408, 0
        %1415 = vmatpush.xpose.msra.mxu0 0.0
        %1416 = vmatpush.xpose.msra.mxu0 0.0
        %1417 = vmatpush.xpose.msra.mxu0 0.0
        %1418 = vmatpush.xpose.msra.mxu0 0.0
        %1419 = vmatpush.xpose.msra.mxu0 0.0
        %1420 = vmatpush.xpose.msra.mxu0 0.0
        %1421 = vmatpush.xpose.msra.mxu0 0.0
        %1422 = vmatpush.xpose.msra.mxu0 0.0
        %1423 = vmatpush.xpose.msra.mxu0 0.0
        %1424 = vmatpush.xpose.msra.mxu0 0.0
        %1425 = vmatpush.xpose.msra.mxu0 0.0
        %1426 = vmatpush.xpose.msra.mxu0 0.0
        %1427 = vmatpush.xpose.msra.mxu0 0.0
        %1428 = vmatpush.xpose.msra.mxu0 0.0
        %1429 = vmatpush.xpose.msra.mxu0 %v1413
        %1430 = vmatpush.xpose.msra.mxu0 %v1411
        %1431 = vmatmul.f32.gmra.mxu0 %v1409
        %v1432 = vpop.f32.mrf.mxu0
        %v1433 = vadd.f32 0.0, %v1432
        %1434 = vdwg.mxu0
        %1435 = vrot.lane.b32.xlu0 %v634, 120
        %v1436 = vpop.permute.xlu0 %1435
        %1437 = vrot.lane.b32.xlu0 %v740, 120
        %v1438 = vpop.permute.xlu0 %1437
        %1439 = vrot.lane.b32.xlu0 %v743, 120
        %v1440 = vpop.permute.xlu0 %1439
        %v1441 = vsel %vm769, %v1436, 0
        %v1443 = vsel %vm769, %v1438, 0
        %v1445 = vsel %vm769, %v1440, 0
        %1447 = vmatpush.xpose.msra.mxu0 0.0
        %1448 = vmatpush.xpose.msra.mxu0 0.0
        %1449 = vmatpush.xpose.msra.mxu0 0.0
        %1450 = vmatpush.xpose.msra.mxu0 0.0
        %1451 = vmatpush.xpose.msra.mxu0 0.0
        %1452 = vmatpush.xpose.msra.mxu0 0.0
        %1453 = vmatpush.xpose.msra.mxu0 0.0
        %1454 = vmatpush.xpose.msra.mxu0 0.0
        %1455 = vmatpush.xpose.msra.mxu0 0.0
        %1456 = vmatpush.xpose.msra.mxu0 0.0
        %1457 = vmatpush.xpose.msra.mxu0 0.0
        %1458 = vmatpush.xpose.msra.mxu0 0.0
        %1459 = vmatpush.xpose.msra.mxu0 0.0
        %1460 = vmatpush.xpose.msra.mxu0 0.0
        %1461 = vmatpush.xpose.msra.mxu0 %v1445
        %1462 = vmatpush.xpose.msra.mxu0 %v1443
        %1463 = vmatmul.f32.gmra.mxu0 %v1441
        %v1464 = vpop.f32.mrf.mxu0
        %v1465 = vadd.f32 0.0, %v1464
        %1466 = vdwg.mxu0
        %1467 = vrot.lane.b32.xlu0 %v637, 120
        %v1468 = vpop.permute.xlu0 %1467
        %1469 = vrot.lane.b32.xlu0 %v746, 120
        %v1470 = vpop.permute.xlu0 %1469
        %1471 = vrot.lane.b32.xlu0 %v749, 120
        %v1472 = vpop.permute.xlu0 %1471
        %v1473 = vsel %vm769, %v1468, 0
        %v1475 = vsel %vm769, %v1470, 0
        %v1477 = vsel %vm769, %v1472, 0
        %1479 = vmatpush.xpose.msra.mxu0 0.0
        %1480 = vmatpush.xpose.msra.mxu0 0.0
        %1481 = vmatpush.xpose.msra.mxu0 0.0
        %1482 = vmatpush.xpose.msra.mxu0 0.0
        %1483 = vmatpush.xpose.msra.mxu0 0.0
        %1484 = vmatpush.xpose.msra.mxu0 0.0
        %1485 = vmatpush.xpose.msra.mxu0 0.0
        %1486 = vmatpush.xpose.msra.mxu0 0.0
        %1487 = vmatpush.xpose.msra.mxu0 0.0
        %1488 = vmatpush.xpose.msra.mxu0 0.0
        %1489 = vmatpush.xpose.msra.mxu0 0.0
        %1490 = vmatpush.xpose.msra.mxu0 0.0
        %1491 = vmatpush.xpose.msra.mxu0 0.0
        %1492 = vmatpush.xpose.msra.mxu0 0.0
        %1493 = vmatpush.xpose.msra.mxu0 %v1477
        %1494 = vmatpush.xpose.msra.mxu0 %v1475
        %1495 = vmatmul.f32.gmra.mxu0 %v1473
        %v1496 = vpop.f32.mrf.mxu0
        %v1497 = vadd.f32 0.0, %v1496
        %1498 = vdwg.mxu0
        %1499 = vrot.lane.b32.xlu0 %v640, 120
        %v1500 = vpop.permute.xlu0 %1499
        %1501 = vrot.lane.b32.xlu0 %v752, 120
        %v1502 = vpop.permute.xlu0 %1501
        %1503 = vrot.lane.b32.xlu0 %v755, 120
        %v1504 = vpop.permute.xlu0 %1503
        %v1505 = vsel %vm769, %v1500, 0
        %v1507 = vsel %vm769, %v1502, 0
        %v1509 = vsel %vm769, %v1504, 0
        %1511 = vmatpush.xpose.msra.mxu0 0.0
        %1512 = vmatpush.xpose.msra.mxu0 0.0
        %1513 = vmatpush.xpose.msra.mxu0 0.0
        %1514 = vmatpush.xpose.msra.mxu0 0.0
        %1515 = vmatpush.xpose.msra.mxu0 0.0
        %1516 = vmatpush.xpose.msra.mxu0 0.0
        %1517 = vmatpush.xpose.msra.mxu0 0.0
        %1518 = vmatpush.xpose.msra.mxu0 0.0
        %1519 = vmatpush.xpose.msra.mxu0 0.0
        %1520 = vmatpush.xpose.msra.mxu0 0.0
        %1521 = vmatpush.xpose.msra.mxu0 0.0
        %1522 = vmatpush.xpose.msra.mxu0 0.0
        %1523 = vmatpush.xpose.msra.mxu0 0.0
        %1524 = vmatpush.xpose.msra.mxu0 0.0
        %1525 = vmatpush.xpose.msra.mxu0 %v1509
        %1526 = vmatpush.xpose.msra.mxu0 %v1507
        %1527 = vmatmul.f32.gmra.mxu0 %v1505
        %v1528 = vpop.f32.mrf.mxu0
        %v1529 = vadd.f32 0.0, %v1528
        %1530 = vdwg.mxu0
        %1531 = vrot.lane.b32.xlu0 %v643, 120
        %v1532 = vpop.permute.xlu0 %1531
        %1533 = vrot.lane.b32.xlu0 %v758, 120
        %v1534 = vpop.permute.xlu0 %1533
        %1535 = vrot.lane.b32.xlu0 %v761, 120
        %v1536 = vpop.permute.xlu0 %1535
        %v1537 = vsel %vm769, %v1532, 0
        %v1539 = vsel %vm769, %v1534, 0
        %v1541 = vsel %vm769, %v1536, 0
        %1543 = vmatpush.xpose.msra.mxu0 0.0
        %1544 = vmatpush.xpose.msra.mxu0 0.0
        %1545 = vmatpush.xpose.msra.mxu0 0.0
        %1546 = vmatpush.xpose.msra.mxu0 0.0
        %1547 = vmatpush.xpose.msra.mxu0 0.0
        %1548 = vmatpush.xpose.msra.mxu0 0.0
        %1549 = vmatpush.xpose.msra.mxu0 0.0
        %1550 = vmatpush.xpose.msra.mxu0 0.0
        %1551 = vmatpush.xpose.msra.mxu0 0.0
        %1552 = vmatpush.xpose.msra.mxu0 0.0
        %1553 = vmatpush.xpose.msra.mxu0 0.0
        %1554 = vmatpush.xpose.msra.mxu0 0.0
        %1555 = vmatpush.xpose.msra.mxu0 0.0
        %1556 = vmatpush.xpose.msra.mxu0 0.0
        %1557 = vmatpush.xpose.msra.mxu0 %v1541
        %1558 = vmatpush.xpose.msra.mxu0 %v1539
        %1559 = vmatmul.f32.gmra.mxu0 %v1537
        %v1560 = vpop.f32.mrf.mxu0
        %v1561 = vadd.f32 0.0, %v1560
        %1562 = vdwg.mxu0
        %1563 = vrot.lane.b32.xlu0 %v646, 120
        %v1564 = vpop.permute.xlu0 %1563
        %1565 = vrot.lane.b32.xlu0 %v764, 120
        %v1566 = vpop.permute.xlu0 %1565
        %1567 = vrot.lane.b32.xlu0 %v767, 120
        %v1568 = vpop.permute.xlu0 %1567
        %v1569 = vsel %vm769, %v1564, 0
        %v1571 = vsel %vm769, %v1566, 0
        %v1573 = vsel %vm769, %v1568, 0
        %1575 = vmatpush.xpose.msra.mxu0 0.0
        %1576 = vmatpush.xpose.msra.mxu0 0.0
        %1577 = vmatpush.xpose.msra.mxu0 0.0
        %1578 = vmatpush.xpose.msra.mxu0 0.0
        %1579 = vmatpush.xpose.msra.mxu0 0.0
        %1580 = vmatpush.xpose.msra.mxu0 0.0
        %1581 = vmatpush.xpose.msra.mxu0 0.0
        %1582 = vmatpush.xpose.msra.mxu0 0.0
        %1583 = vmatpush.xpose.msra.mxu0 0.0
        %1584 = vmatpush.xpose.msra.mxu0 0.0
        %1585 = vmatpush.xpose.msra.mxu0 0.0
        %1586 = vmatpush.xpose.msra.mxu0 0.0
        %1587 = vmatpush.xpose.msra.mxu0 0.0
        %1588 = vmatpush.xpose.msra.mxu0 0.0
        %1589 = vmatpush.xpose.msra.mxu0 %v1573
        %1590 = vmatpush.xpose.msra.mxu0 %v1571
        %1591 = vmatmul.f32.gmra.mxu0 %v1569
        %v1592 = vpop.f32.mrf.mxu0
        %v1593 = vadd.f32 0.0, %v1592
        %1594 = vdwg.mxu0
        %v1595 = vmul.f32 %v1369, 0.35355338
        %v1596 = vmul.f32 %v1401, 0.35355338
        %v1597 = vmul.f32 %v1433, 0.35355338
        %v1598 = vmul.f32 %v1465, 0.35355338
        %v1599 = vmul.f32 %v1497, 0.35355338
        %v1600 = vmul.f32 %v1529, 0.35355338
        %v1601 = vmul.f32 %v1561, 0.35355338
        %v1602 = vmul.f32 %v1593, 0.35355338
        %v1603 = vsel %vm1010, %v1595, -inf
        %1604 = vmax.xlane.f32.xlu0 %v1603
        %v1605 = vpop.xlane.xlu0 %1604
        %v1606 = vsel %vm1010, %v1596, -inf
        %1607 = vmax.xlane.f32.xlu0 %v1606
        %v1608 = vpop.xlane.xlu0 %1607
        %v1609 = vsel %vm1010, %v1597, -inf
        %1610 = vmax.xlane.f32.xlu0 %v1609
        %v1611 = vpop.xlane.xlu0 %1610
        %v1612 = vsel %vm1010, %v1598, -inf
        %1613 = vmax.xlane.f32.xlu0 %v1612
        %v1614 = vpop.xlane.xlu0 %1613
        %v1615 = vsel %vm1010, %v1599, -inf
        %1616 = vmax.xlane.f32.xlu0 %v1615
        %v1617 = vpop.xlane.xlu0 %1616
        %v1618 = vsel %vm1010, %v1600, -inf
        %1619 = vmax.xlane.f32.xlu0 %v1618
        %v1620 = vpop.xlane.xlu0 %1619
        %v1621 = vsel %vm1010, %v1601, -inf
        %1622 = vmax.xlane.f32.xlu0 %v1621
        %v1623 = vpop.xlane.xlu0 %1622
        %v1624 = vsel %vm1010, %v1602, -inf
        %1625 = vmax.xlane.f32.xlu0 %v1624
        %v1626 = vpop.xlane.xlu0 %1625
        %v1627 = vsub.f32 %v1595, %v1605
        %v1628 = vsub.f32 %v1596, %v1608
        %v1629 = vsub.f32 %v1597, %v1611
        %v1630 = vsub.f32 %v1598, %v1614
        %v1631 = vsub.f32 %v1599, %v1617
        %v1632 = vsub.f32 %v1600, %v1620
        %v1633 = vsub.f32 %v1601, %v1623
        %v1634 = vsub.f32 %v1602, %v1626
        %v1635 = vmul.f32 %v1627, 1.442695
        %v1636 = vpow.pop %v1635
        %v1637 = vmul.f32 %v1628, 1.442695
        %v1638 = vpow.pop %v1637
        %v1639 = vmul.f32 %v1629, 1.442695
        %v1640 = vpow.pop %v1639
        %v1641 = vmul.f32 %v1630, 1.442695
        %v1642 = vpow.pop %v1641
        %v1643 = vmul.f32 %v1631, 1.442695
        %v1644 = vpow.pop %v1643
        %v1645 = vmul.f32 %v1632, 1.442695
        %v1646 = vpow.pop %v1645
        %v1647 = vmul.f32 %v1633, 1.442695
        %v1648 = vpow.pop %v1647
        %v1649 = vmul.f32 %v1634, 1.442695
        %v1650 = vpow.pop %v1649
        %v1651 = vsel %vm1010, %v1636, 0.0
        %1652 = vadd.xlane.f32.xlu0 %v1651
        %v1653 = vpop.xlane.xlu0 %1652
        %v1654 = vsel %vm1010, %v1638, 0.0
        %1655 = vadd.xlane.f32.xlu0 %v1654
        %v1656 = vpop.xlane.xlu0 %1655
        %v1657 = vsel %vm1010, %v1640, 0.0
        %1658 = vadd.xlane.f32.xlu0 %v1657
        %v1659 = vpop.xlane.xlu0 %1658
        %v1660 = vsel %vm1010, %v1642, 0.0
        %1661 = vadd.xlane.f32.xlu0 %v1660
        %v1662 = vpop.xlane.xlu0 %1661
        %v1663 = vsel %vm1010, %v1644, 0.0
        %1664 = vadd.xlane.f32.xlu0 %v1663
        %v1665 = vpop.xlane.xlu0 %1664
        %v1666 = vsel %vm1010, %v1646, 0.0
        %1667 = vadd.xlane.f32.xlu0 %v1666
        %v1668 = vpop.xlane.xlu0 %1667
        %v1669 = vsel %vm1010, %v1648, 0.0
        %1670 = vadd.xlane.f32.xlu0 %v1669
        %v1671 = vpop.xlane.xlu0 %1670
        %v1672 = vsel %vm1010, %v1650, 0.0
        %1673 = vadd.xlane.f32.xlu0 %v1672
        %v1674 = vpop.xlane.xlu0 %1673
        %v1675 = vrcp.pop %v1653
        %v1676 = vrcp.pop %v1656
        %v1677 = vrcp.pop %v1659
        %v1678 = vrcp.pop %v1662
        %v1679 = vrcp.pop %v1665
        %v1680 = vrcp.pop %v1668
        %v1681 = vrcp.pop %v1671
        %v1682 = vrcp.pop %v1674
        %v1683 = vmul.f32 %v1636, %v1675
        %v1684 = vmul.f32 %v1638, %v1676
        %v1685 = vmul.f32 %v1640, %v1677
        %v1686 = vmul.f32 %v1642, %v1678
        %v1687 = vmul.f32 %v1644, %v1679
        %v1688 = vmul.f32 %v1646, %v1680
        %v1689 = vmul.f32 %v1648, %v1681
        %v1690 = vmul.f32 %v1650, %v1682
        %1691 = vrot.lane.b32.xlu0 %v722, 88
        %v1692 = vpop.permute.xlu0 %1691
        %1693 = vrot.lane.b32.xlu0 %v725, 88
        %v1694 = vpop.permute.xlu0 %1693
        %v1698 = vsel %vm1010, %v1683, 0
        %1700 = vmatpush.msra.mxu0 0.0
        %1701 = vmatpush.msra.mxu0 0.0
        %1702 = vmatpush.msra.mxu0 0.0
        %1703 = vmatpush.msra.mxu0 0.0
        %1704 = vmatpush.msra.mxu0 0.0
        %1705 = vmatpush.msra.mxu0 0.0
        %1706 = vmatpush.msra.mxu0 0.0
        %1707 = vmatpush.msra.mxu0 0.0
        %1708 = vmatpush.msra.mxu0 0.0
        %1709 = vmatpush.msra.mxu0 0.0
        %1710 = vmatpush.msra.mxu0 0.0
        %1711 = vmatpush.msra.mxu0 0.0
        %1712 = vmatpush.msra.mxu0 0.0
        %1713 = vmatpush.msra.mxu0 0.0
        %1714 = vmatpush.msra.mxu0 %v1694
        %1715 = vmatpush.msra.mxu0 %v1692
        %1716 = vmatmul.f32.gmra.mxu0 %v1698
        %v1717 = vpop.f32.mrf.mxu0
        %v1718 = vadd.f32 0.0, %v1717
        %1719 = vdwg.mxu0
        %1720 = vrot.lane.b32.xlu0 %v728, 88
        %v1721 = vpop.permute.xlu0 %1720
        %1722 = vrot.lane.b32.xlu0 %v731, 88
        %v1723 = vpop.permute.xlu0 %1722
        %v1727 = vsel %vm1010, %v1684, 0
        %1729 = vmatpush.msra.mxu0 0.0
        %1730 = vmatpush.msra.mxu0 0.0
        %1731 = vmatpush.msra.mxu0 0.0
        %1732 = vmatpush.msra.mxu0 0.0
        %1733 = vmatpush.msra.mxu0 0.0
        %1734 = vmatpush.msra.mxu0 0.0
        %1735 = vmatpush.msra.mxu0 0.0
        %1736 = vmatpush.msra.mxu0 0.0
        %1737 = vmatpush.msra.mxu0 0.0
        %1738 = vmatpush.msra.mxu0 0.0
        %1739 = vmatpush.msra.mxu0 0.0
        %1740 = vmatpush.msra.mxu0 0.0
        %1741 = vmatpush.msra.mxu0 0.0
        %1742 = vmatpush.msra.mxu0 0.0
        %1743 = vmatpush.msra.mxu0 %v1723
        %1744 = vmatpush.msra.mxu0 %v1721
        %1745 = vmatmul.f32.gmra.mxu0 %v1727
        %v1746 = vpop.f32.mrf.mxu0
        %v1747 = vadd.f32 0.0, %v1746
        %1748 = vdwg.mxu0
        %1749 = vrot.lane.b32.xlu0 %v734, 88
        %v1750 = vpop.permute.xlu0 %1749
        %1751 = vrot.lane.b32.xlu0 %v737, 88
        %v1752 = vpop.permute.xlu0 %1751
        %v1756 = vsel %vm1010, %v1685, 0
        %1758 = vmatpush.msra.mxu0 0.0
        %1759 = vmatpush.msra.mxu0 0.0
        %1760 = vmatpush.msra.mxu0 0.0
        %1761 = vmatpush.msra.mxu0 0.0
        %1762 = vmatpush.msra.mxu0 0.0
        %1763 = vmatpush.msra.mxu0 0.0
        %1764 = vmatpush.msra.mxu0 0.0
        %1765 = vmatpush.msra.mxu0 0.0
        %1766 = vmatpush.msra.mxu0 0.0
        %1767 = vmatpush.msra.mxu0 0.0
        %1768 = vmatpush.msra.mxu0 0.0
        %1769 = vmatpush.msra.mxu0 0.0
        %1770 = vmatpush.msra.mxu0 0.0
        %1771 = vmatpush.msra.mxu0 0.0
        %1772 = vmatpush.msra.mxu0 %v1752
        %1773 = vmatpush.msra.mxu0 %v1750
        %1774 = vmatmul.f32.gmra.mxu0 %v1756
        %v1775 = vpop.f32.mrf.mxu0
        %v1776 = vadd.f32 0.0, %v1775
        %1777 = vdwg.mxu0
        %1778 = vrot.lane.b32.xlu0 %v740, 88
        %v1779 = vpop.permute.xlu0 %1778
        %1780 = vrot.lane.b32.xlu0 %v743, 88
        %v1781 = vpop.permute.xlu0 %1780
        %v1785 = vsel %vm1010, %v1686, 0
        %1787 = vmatpush.msra.mxu0 0.0
        %1788 = vmatpush.msra.mxu0 0.0
        %1789 = vmatpush.msra.mxu0 0.0
        %1790 = vmatpush.msra.mxu0 0.0
        %1791 = vmatpush.msra.mxu0 0.0
        %1792 = vmatpush.msra.mxu0 0.0
        %1793 = vmatpush.msra.mxu0 0.0
        %1794 = vmatpush.msra.mxu0 0.0
        %1795 = vmatpush.msra.mxu0 0.0
        %1796 = vmatpush.msra.mxu0 0.0
        %1797 = vmatpush.msra.mxu0 0.0
        %1798 = vmatpush.msra.mxu0 0.0
        %1799 = vmatpush.msra.mxu0 0.0
        %1800 = vmatpush.msra.mxu0 0.0
        %1801 = vmatpush.msra.mxu0 %v1781
        %1802 = vmatpush.msra.mxu0 %v1779
        %1803 = vmatmul.f32.gmra.mxu0 %v1785
        %v1804 = vpop.f32.mrf.mxu0
        %v1805 = vadd.f32 0.0, %v1804
        %1806 = vdwg.mxu0
        %1807 = vrot.lane.b32.xlu0 %v746, 88
        %v1808 = vpop.permute.xlu0 %1807
        %1809 = vrot.lane.b32.xlu0 %v749, 88
        %v1810 = vpop.permute.xlu0 %1809
        %v1814 = vsel %vm1010, %v1687, 0
        %1816 = vmatpush.msra.mxu0 0.0
        %1817 = vmatpush.msra.mxu0 0.0
        %1818 = vmatpush.msra.mxu0 0.0
        %1819 = vmatpush.msra.mxu0 0.0
        %1820 = vmatpush.msra.mxu0 0.0
        %1821 = vmatpush.msra.mxu0 0.0
        %1822 = vmatpush.msra.mxu0 0.0
        %1823 = vmatpush.msra.mxu0 0.0
        %1824 = vmatpush.msra.mxu0 0.0
        %1825 = vmatpush.msra.mxu0 0.0
        %1826 = vmatpush.msra.mxu0 0.0
        %1827 = vmatpush.msra.mxu0 0.0
        %1828 = vmatpush.msra.mxu0 0.0
        %1829 = vmatpush.msra.mxu0 0.0
        %1830 = vmatpush.msra.mxu0 %v1810
        %1831 = vmatpush.msra.mxu0 %v1808
        %1832 = vmatmul.f32.gmra.mxu0 %v1814
        %v1833 = vpop.f32.mrf.mxu0
        %v1834 = vadd.f32 0.0, %v1833
        %1835 = vdwg.mxu0
        %1836 = vrot.lane.b32.xlu0 %v752, 88
        %v1837 = vpop.permute.xlu0 %1836
        %1838 = vrot.lane.b32.xlu0 %v755, 88
        %v1839 = vpop.permute.xlu0 %1838
        %v1843 = vsel %vm1010, %v1688, 0
        %1845 = vmatpush.msra.mxu0 0.0
        %1846 = vmatpush.msra.mxu0 0.0
        %1847 = vmatpush.msra.mxu0 0.0
        %1848 = vmatpush.msra.mxu0 0.0
        %1849 = vmatpush.msra.mxu0 0.0
        %1850 = vmatpush.msra.mxu0 0.0
        %1851 = vmatpush.msra.mxu0 0.0
        %1852 = vmatpush.msra.mxu0 0.0
        %1853 = vmatpush.msra.mxu0 0.0
        %1854 = vmatpush.msra.mxu0 0.0
        %1855 = vmatpush.msra.mxu0 0.0
        %1856 = vmatpush.msra.mxu0 0.0
        %1857 = vmatpush.msra.mxu0 0.0
        %1858 = vmatpush.msra.mxu0 0.0
        %1859 = vmatpush.msra.mxu0 %v1839
        %1860 = vmatpush.msra.mxu0 %v1837
        %1861 = vmatmul.f32.gmra.mxu0 %v1843
        %v1862 = vpop.f32.mrf.mxu0
        %v1863 = vadd.f32 0.0, %v1862
        %1864 = vdwg.mxu0
        %1865 = vrot.lane.b32.xlu0 %v758, 88
        %v1866 = vpop.permute.xlu0 %1865
        %1867 = vrot.lane.b32.xlu0 %v761, 88
        %v1868 = vpop.permute.xlu0 %1867
        %v1872 = vsel %vm1010, %v1689, 0
        %1874 = vmatpush.msra.mxu0 0.0
        %1875 = vmatpush.msra.mxu0 0.0
        %1876 = vmatpush.msra.mxu0 0.0
        %1877 = vmatpush.msra.mxu0 0.0
        %1878 = vmatpush.msra.mxu0 0.0
        %1879 = vmatpush.msra.mxu0 0.0
        %1880 = vmatpush.msra.mxu0 0.0
        %1881 = vmatpush.msra.mxu0 0.0
        %1882 = vmatpush.msra.mxu0 0.0
        %1883 = vmatpush.msra.mxu0 0.0
        %1884 = vmatpush.msra.mxu0 0.0
        %1885 = vmatpush.msra.mxu0 0.0
        %1886 = vmatpush.msra.mxu0 0.0
        %1887 = vmatpush.msra.mxu0 0.0
        %1888 = vmatpush.msra.mxu0 %v1868
        %1889 = vmatpush.msra.mxu0 %v1866
        %1890 = vmatmul.f32.gmra.mxu0 %v1872
        %v1891 = vpop.f32.mrf.mxu0
        %v1892 = vadd.f32 0.0, %v1891
        %1893 = vdwg.mxu0
        %1894 = vrot.lane.b32.xlu0 %v764, 88
        %v1895 = vpop.permute.xlu0 %1894
        %1896 = vrot.lane.b32.xlu0 %v767, 88
        %v1897 = vpop.permute.xlu0 %1896
        %v1901 = vsel %vm1010, %v1690, 0
        %1903 = vmatpush.msra.mxu0 0.0
        %1904 = vmatpush.msra.mxu0 0.0
        %1905 = vmatpush.msra.mxu0 0.0
        %1906 = vmatpush.msra.mxu0 0.0
        %1907 = vmatpush.msra.mxu0 0.0
        %1908 = vmatpush.msra.mxu0 0.0
        %1909 = vmatpush.msra.mxu0 0.0
        %1910 = vmatpush.msra.mxu0 0.0
        %1911 = vmatpush.msra.mxu0 0.0
        %1912 = vmatpush.msra.mxu0 0.0
        %1913 = vmatpush.msra.mxu0 0.0
        %1914 = vmatpush.msra.mxu0 0.0
        %1915 = vmatpush.msra.mxu0 0.0
        %1916 = vmatpush.msra.mxu0 0.0
        %1917 = vmatpush.msra.mxu0 %v1897
        %1918 = vmatpush.msra.mxu0 %v1895
        %1919 = vmatmul.f32.gmra.mxu0 %v1901
        %v1920 = vpop.f32.mrf.mxu0
        %v1921 = vadd.f32 0.0, %v1920
        %1922 = vdwg.mxu0
        %1931 = vrot.lane.b32.xlu0 %v1718, 8
        %v1932 = vpop.permute.xlu0 %1931
        %1933 = vrot.lane.b32.xlu0 %v1747, 8
        %v1934 = vpop.permute.xlu0 %1933
        %1935 = vrot.lane.b32.xlu0 %v1776, 8
        %v1936 = vpop.permute.xlu0 %1935
        %1937 = vrot.lane.b32.xlu0 %v1805, 8
        %v1938 = vpop.permute.xlu0 %1937
        %1939 = vrot.lane.b32.xlu0 %v1834, 8
        %v1940 = vpop.permute.xlu0 %1939
        %1941 = vrot.lane.b32.xlu0 %v1863, 8
        %v1942 = vpop.permute.xlu0 %1941
        %1943 = vrot.lane.b32.xlu0 %v1892, 8
        %v1944 = vpop.permute.xlu0 %1943
        %1945 = vrot.lane.b32.xlu0 %v1921, 8
        %v1946 = vpop.permute.xlu0 %1945
        %vm1955 = vcmask 130112
        %1956 = vst.msk [vmem:[#allocation2] sm:$0xff] %vm1955, %v1932
        %1957 = vst.msk [vmem:[#allocation2 + $0x8] sm:$0xff] %vm1955, %v1934
        %1958 = vst.msk [vmem:[#allocation2 + $0x10] sm:$0xff] %vm1955, %v1936
        %1959 = vst.msk [vmem:[#allocation2 + $0x18] sm:$0xff] %vm1955, %v1938
        %1960 = vst.msk [vmem:[#allocation2 + $0x20] sm:$0xff] %vm1955, %v1940
        %1961 = vst.msk [vmem:[#allocation2 + $0x28] sm:$0xff] %vm1955, %v1942
        %1962 = vst.msk [vmem:[#allocation2 + $0x30] sm:$0xff] %vm1955, %v1944
        %1963 = vst.msk [vmem:[#allocation2 + $0x38] sm:$0xff] %vm1955, %v1946
        %1964 = vrot.lane.b32.xlu0 %v625, 112
        %v1965 = vpop.permute.xlu0 %1964
        %1966 = vrot.lane.b32.xlu0 %v722, 112
        %v1967 = vpop.permute.xlu0 %1966
        %1968 = vrot.lane.b32.xlu0 %v725, 112
        %v1969 = vpop.permute.xlu0 %1968
        %v1970 = vsel %vm769, %v1965, 0
        %v1972 = vsel %vm769, %v1967, 0
        %v1974 = vsel %vm769, %v1969, 0
        %1976 = vmatpush.xpose.msra.mxu0 0.0
        %1977 = vmatpush.xpose.msra.mxu0 0.0
        %1978 = vmatpush.xpose.msra.mxu0 0.0
        %1979 = vmatpush.xpose.msra.mxu0 0.0
        %1980 = vmatpush.xpose.msra.mxu0 0.0
        %1981 = vmatpush.xpose.msra.mxu0 0.0
        %1982 = vmatpush.xpose.msra.mxu0 0.0
        %1983 = vmatpush.xpose.msra.mxu0 0.0
        %1984 = vmatpush.xpose.msra.mxu0 0.0
        %1985 = vmatpush.xpose.msra.mxu0 0.0
        %1986 = vmatpush.xpose.msra.mxu0 0.0
        %1987 = vmatpush.xpose.msra.mxu0 0.0
        %1988 = vmatpush.xpose.msra.mxu0 0.0
        %1989 = vmatpush.xpose.msra.mxu0 0.0
        %1990 = vmatpush.xpose.msra.mxu0 %v1974
        %1991 = vmatpush.xpose.msra.mxu0 %v1972
        %1992 = vmatmul.f32.gmra.mxu0 %v1970
        %v1993 = vpop.f32.mrf.mxu0
        %v1994 = vadd.f32 0.0, %v1993
        %1995 = vdwg.mxu0
        %1996 = vrot.lane.b32.xlu0 %v628, 112
        %v1997 = vpop.permute.xlu0 %1996
        %1998 = vrot.lane.b32.xlu0 %v728, 112
        %v1999 = vpop.permute.xlu0 %1998
        %2000 = vrot.lane.b32.xlu0 %v731, 112
        %v2001 = vpop.permute.xlu0 %2000
        %v2002 = vsel %vm769, %v1997, 0
        %v2004 = vsel %vm769, %v1999, 0
        %v2006 = vsel %vm769, %v2001, 0
        %2008 = vmatpush.xpose.msra.mxu0 0.0
        %2009 = vmatpush.xpose.msra.mxu0 0.0
        %2010 = vmatpush.xpose.msra.mxu0 0.0
        %2011 = vmatpush.xpose.msra.mxu0 0.0
        %2012 = vmatpush.xpose.msra.mxu0 0.0
        %2013 = vmatpush.xpose.msra.mxu0 0.0
        %2014 = vmatpush.xpose.msra.mxu0 0.0
        %2015 = vmatpush.xpose.msra.mxu0 0.0
        %2016 = vmatpush.xpose.msra.mxu0 0.0
        %2017 = vmatpush.xpose.msra.mxu0 0.0
        %2018 = vmatpush.xpose.msra.mxu0 0.0
        %2019 = vmatpush.xpose.msra.mxu0 0.0
        %2020 = vmatpush.xpose.msra.mxu0 0.0
        %2021 = vmatpush.xpose.msra.mxu0 0.0
        %2022 = vmatpush.xpose.msra.mxu0 %v2006
        %2023 = vmatpush.xpose.msra.mxu0 %v2004
        %2024 = vmatmul.f32.gmra.mxu0 %v2002
        %v2025 = vpop.f32.mrf.mxu0
        %v2026 = vadd.f32 0.0, %v2025
        %2027 = vdwg.mxu0
        %2028 = vrot.lane.b32.xlu0 %v631, 112
        %v2029 = vpop.permute.xlu0 %2028
        %2030 = vrot.lane.b32.xlu0 %v734, 112
        %v2031 = vpop.permute.xlu0 %2030
        %2032 = vrot.lane.b32.xlu0 %v737, 112
        %v2033 = vpop.permute.xlu0 %2032
        %v2034 = vsel %vm769, %v2029, 0
        %v2036 = vsel %vm769, %v2031, 0
        %v2038 = vsel %vm769, %v2033, 0
        %2040 = vmatpush.xpose.msra.mxu0 0.0
        %2041 = vmatpush.xpose.msra.mxu0 0.0
        %2042 = vmatpush.xpose.msra.mxu0 0.0
        %2043 = vmatpush.xpose.msra.mxu0 0.0
        %2044 = vmatpush.xpose.msra.mxu0 0.0
        %2045 = vmatpush.xpose.msra.mxu0 0.0
        %2046 = vmatpush.xpose.msra.mxu0 0.0
        %2047 = vmatpush.xpose.msra.mxu0 0.0
        %2048 = vmatpush.xpose.msra.mxu0 0.0
        %2049 = vmatpush.xpose.msra.mxu0 0.0
        %2050 = vmatpush.xpose.msra.mxu0 0.0
        %2051 = vmatpush.xpose.msra.mxu0 0.0
        %2052 = vmatpush.xpose.msra.mxu0 0.0
        %2053 = vmatpush.xpose.msra.mxu0 0.0
        %2054 = vmatpush.xpose.msra.mxu0 %v2038
        %2055 = vmatpush.xpose.msra.mxu0 %v2036
        %2056 = vmatmul.f32.gmra.mxu0 %v2034
        %v2057 = vpop.f32.mrf.mxu0
        %v2058 = vadd.f32 0.0, %v2057
        %2059 = vdwg.mxu0
        %2060 = vrot.lane.b32.xlu0 %v634, 112
        %v2061 = vpop.permute.xlu0 %2060
        %2062 = vrot.lane.b32.xlu0 %v740, 112
        %v2063 = vpop.permute.xlu0 %2062
        %2064 = vrot.lane.b32.xlu0 %v743, 112
        %v2065 = vpop.permute.xlu0 %2064
        %v2066 = vsel %vm769, %v2061, 0
        %v2068 = vsel %vm769, %v2063, 0
        %v2070 = vsel %vm769, %v2065, 0
        %2072 = vmatpush.xpose.msra.mxu0 0.0
        %2073 = vmatpush.xpose.msra.mxu0 0.0
        %2074 = vmatpush.xpose.msra.mxu0 0.0
        %2075 = vmatpush.xpose.msra.mxu0 0.0
        %2076 = vmatpush.xpose.msra.mxu0 0.0
        %2077 = vmatpush.xpose.msra.mxu0 0.0
        %2078 = vmatpush.xpose.msra.mxu0 0.0
        %2079 = vmatpush.xpose.msra.mxu0 0.0
        %2080 = vmatpush.xpose.msra.mxu0 0.0
        %2081 = vmatpush.xpose.msra.mxu0 0.0
        %2082 = vmatpush.xpose.msra.mxu0 0.0
        %2083 = vmatpush.xpose.msra.mxu0 0.0
        %2084 = vmatpush.xpose.msra.mxu0 0.0
        %2085 = vmatpush.xpose.msra.mxu0 0.0
        %2086 = vmatpush.xpose.msra.mxu0 %v2070
        %2087 = vmatpush.xpose.msra.mxu0 %v2068
        %2088 = vmatmul.f32.gmra.mxu0 %v2066
        %v2089 = vpop.f32.mrf.mxu0
        %v2090 = vadd.f32 0.0, %v2089
        %2091 = vdwg.mxu0
        %2092 = vrot.lane.b32.xlu0 %v637, 112
        %v2093 = vpop.permute.xlu0 %2092
        %2094 = vrot.lane.b32.xlu0 %v746, 112
        %v2095 = vpop.permute.xlu0 %2094
        %2096 = vrot.lane.b32.xlu0 %v749, 112
        %v2097 = vpop.permute.xlu0 %2096
        %v2098 = vsel %vm769, %v2093, 0
        %v2100 = vsel %vm769, %v2095, 0
        %v2102 = vsel %vm769, %v2097, 0
        %2104 = vmatpush.xpose.msra.mxu0 0.0
        %2105 = vmatpush.xpose.msra.mxu0 0.0
        %2106 = vmatpush.xpose.msra.mxu0 0.0
        %2107 = vmatpush.xpose.msra.mxu0 0.0
        %2108 = vmatpush.xpose.msra.mxu0 0.0
        %2109 = vmatpush.xpose.msra.mxu0 0.0
        %2110 = vmatpush.xpose.msra.mxu0 0.0
        %2111 = vmatpush.xpose.msra.mxu0 0.0
        %2112 = vmatpush.xpose.msra.mxu0 0.0
        %2113 = vmatpush.xpose.msra.mxu0 0.0
        %2114 = vmatpush.xpose.msra.mxu0 0.0
        %2115 = vmatpush.xpose.msra.mxu0 0.0
        %2116 = vmatpush.xpose.msra.mxu0 0.0
        %2117 = vmatpush.xpose.msra.mxu0 0.0
        %2118 = vmatpush.xpose.msra.mxu0 %v2102
        %2119 = vmatpush.xpose.msra.mxu0 %v2100
        %2120 = vmatmul.f32.gmra.mxu0 %v2098
        %v2121 = vpop.f32.mrf.mxu0
        %v2122 = vadd.f32 0.0, %v2121
        %2123 = vdwg.mxu0
        %2124 = vrot.lane.b32.xlu0 %v640, 112
        %v2125 = vpop.permute.xlu0 %2124
        %2126 = vrot.lane.b32.xlu0 %v752, 112
        %v2127 = vpop.permute.xlu0 %2126
        %2128 = vrot.lane.b32.xlu0 %v755, 112
        %v2129 = vpop.permute.xlu0 %2128
        %v2130 = vsel %vm769, %v2125, 0
        %v2132 = vsel %vm769, %v2127, 0
        %v2134 = vsel %vm769, %v2129, 0
        %2136 = vmatpush.xpose.msra.mxu0 0.0
        %2137 = vmatpush.xpose.msra.mxu0 0.0
        %2138 = vmatpush.xpose.msra.mxu0 0.0
        %2139 = vmatpush.xpose.msra.mxu0 0.0
        %2140 = vmatpush.xpose.msra.mxu0 0.0
        %2141 = vmatpush.xpose.msra.mxu0 0.0
        %2142 = vmatpush.xpose.msra.mxu0 0.0
        %2143 = vmatpush.xpose.msra.mxu0 0.0
        %2144 = vmatpush.xpose.msra.mxu0 0.0
        %2145 = vmatpush.xpose.msra.mxu0 0.0
        %2146 = vmatpush.xpose.msra.mxu0 0.0
        %2147 = vmatpush.xpose.msra.mxu0 0.0
        %2148 = vmatpush.xpose.msra.mxu0 0.0
        %2149 = vmatpush.xpose.msra.mxu0 0.0
        %2150 = vmatpush.xpose.msra.mxu0 %v2134
        %2151 = vmatpush.xpose.msra.mxu0 %v2132
        %2152 = vmatmul.f32.gmra.mxu0 %v2130
        %v2153 = vpop.f32.mrf.mxu0
        %v2154 = vadd.f32 0.0, %v2153
        %2155 = vdwg.mxu0
        %2156 = vrot.lane.b32.xlu0 %v643, 112
        %v2157 = vpop.permute.xlu0 %2156
        %2158 = vrot.lane.b32.xlu0 %v758, 112
        %v2159 = vpop.permute.xlu0 %2158
        %2160 = vrot.lane.b32.xlu0 %v761, 112
        %v2161 = vpop.permute.xlu0 %2160
        %v2162 = vsel %vm769, %v2157, 0
        %v2164 = vsel %vm769, %v2159, 0
        %v2166 = vsel %vm769, %v2161, 0
        %2168 = vmatpush.xpose.msra.mxu0 0.0
        %2169 = vmatpush.xpose.msra.mxu0 0.0
        %2170 = vmatpush.xpose.msra.mxu0 0.0
        %2171 = vmatpush.xpose.msra.mxu0 0.0
        %2172 = vmatpush.xpose.msra.mxu0 0.0
        %2173 = vmatpush.xpose.msra.mxu0 0.0
        %2174 = vmatpush.xpose.msra.mxu0 0.0
        %2175 = vmatpush.xpose.msra.mxu0 0.0
        %2176 = vmatpush.xpose.msra.mxu0 0.0
        %2177 = vmatpush.xpose.msra.mxu0 0.0
        %2178 = vmatpush.xpose.msra.mxu0 0.0
        %2179 = vmatpush.xpose.msra.mxu0 0.0
        %2180 = vmatpush.xpose.msra.mxu0 0.0
        %2181 = vmatpush.xpose.msra.mxu0 0.0
        %2182 = vmatpush.xpose.msra.mxu0 %v2166
        %2183 = vmatpush.xpose.msra.mxu0 %v2164
        %2184 = vmatmul.f32.gmra.mxu0 %v2162
        %v2185 = vpop.f32.mrf.mxu0
        %v2186 = vadd.f32 0.0, %v2185
        %2187 = vdwg.mxu0
        %2188 = vrot.lane.b32.xlu0 %v646, 112
        %v2189 = vpop.permute.xlu0 %2188
        %2190 = vrot.lane.b32.xlu0 %v764, 112
        %v2191 = vpop.permute.xlu0 %2190
        %2192 = vrot.lane.b32.xlu0 %v767, 112
        %v2193 = vpop.permute.xlu0 %2192
        %v2194 = vsel %vm769, %v2189, 0
        %v2196 = vsel %vm769, %v2191, 0
        %v2198 = vsel %vm769, %v2193, 0
        %2200 = vmatpush.xpose.msra.mxu0 0.0
        %2201 = vmatpush.xpose.msra.mxu0 0.0
        %2202 = vmatpush.xpose.msra.mxu0 0.0
        %2203 = vmatpush.xpose.msra.mxu0 0.0
        %2204 = vmatpush.xpose.msra.mxu0 0.0
        %2205 = vmatpush.xpose.msra.mxu0 0.0
        %2206 = vmatpush.xpose.msra.mxu0 0.0
        %2207 = vmatpush.xpose.msra.mxu0 0.0
        %2208 = vmatpush.xpose.msra.mxu0 0.0
        %2209 = vmatpush.xpose.msra.mxu0 0.0
        %2210 = vmatpush.xpose.msra.mxu0 0.0
        %2211 = vmatpush.xpose.msra.mxu0 0.0
        %2212 = vmatpush.xpose.msra.mxu0 0.0
        %2213 = vmatpush.xpose.msra.mxu0 0.0
        %2214 = vmatpush.xpose.msra.mxu0 %v2198
        %2215 = vmatpush.xpose.msra.mxu0 %v2196
        %2216 = vmatmul.f32.gmra.mxu0 %v2194
        %v2217 = vpop.f32.mrf.mxu0
        %v2218 = vadd.f32 0.0, %v2217
        %2219 = vdwg.mxu0
        %v2220 = vmul.f32 %v1994, 0.35355338
        %v2221 = vmul.f32 %v2026, 0.35355338
        %v2222 = vmul.f32 %v2058, 0.35355338
        %v2223 = vmul.f32 %v2090, 0.35355338
        %v2224 = vmul.f32 %v2122, 0.35355338
        %v2225 = vmul.f32 %v2154, 0.35355338
        %v2226 = vmul.f32 %v2186, 0.35355338
        %v2227 = vmul.f32 %v2218, 0.35355338
        %v2228 = vsel %vm1010, %v2220, -inf
        %2229 = vmax.xlane.f32.xlu0 %v2228
        %v2230 = vpop.xlane.xlu0 %2229
        %v2231 = vsel %vm1010, %v2221, -inf
        %2232 = vmax.xlane.f32.xlu0 %v2231
        %v2233 = vpop.xlane.xlu0 %2232
        %v2234 = vsel %vm1010, %v2222, -inf
        %2235 = vmax.xlane.f32.xlu0 %v2234
        %v2236 = vpop.xlane.xlu0 %2235
        %v2237 = vsel %vm1010, %v2223, -inf
        %2238 = vmax.xlane.f32.xlu0 %v2237
        %v2239 = vpop.xlane.xlu0 %2238
        %v2240 = vsel %vm1010, %v2224, -inf
        %2241 = vmax.xlane.f32.xlu0 %v2240
        %v2242 = vpop.xlane.xlu0 %2241
        %v2243 = vsel %vm1010, %v2225, -inf
        %2244 = vmax.xlane.f32.xlu0 %v2243
        %v2245 = vpop.xlane.xlu0 %2244
        %v2246 = vsel %vm1010, %v2226, -inf
        %2247 = vmax.xlane.f32.xlu0 %v2246
        %v2248 = vpop.xlane.xlu0 %2247
        %v2249 = vsel %vm1010, %v2227, -inf
        %2250 = vmax.xlane.f32.xlu0 %v2249
        %v2251 = vpop.xlane.xlu0 %2250
        %v2252 = vsub.f32 %v2220, %v2230
        %v2253 = vsub.f32 %v2221, %v2233
        %v2254 = vsub.f32 %v2222, %v2236
        %v2255 = vsub.f32 %v2223, %v2239
        %v2256 = vsub.f32 %v2224, %v2242
        %v2257 = vsub.f32 %v2225, %v2245
        %v2258 = vsub.f32 %v2226, %v2248
        %v2259 = vsub.f32 %v2227, %v2251
        %v2260 = vmul.f32 %v2252, 1.442695
        %v2261 = vpow.pop %v2260
        %v2262 = vmul.f32 %v2253, 1.442695
        %v2263 = vpow.pop %v2262
        %v2264 = vmul.f32 %v2254, 1.442695
        %v2265 = vpow.pop %v2264
        %v2266 = vmul.f32 %v2255, 1.442695
        %v2267 = vpow.pop %v2266
        %v2268 = vmul.f32 %v2256, 1.442695
        %v2269 = vpow.pop %v2268
        %v2270 = vmul.f32 %v2257, 1.442695
        %v2271 = vpow.pop %v2270
        %v2272 = vmul.f32 %v2258, 1.442695
        %v2273 = vpow.pop %v2272
        %v2274 = vmul.f32 %v2259, 1.442695
        %v2275 = vpow.pop %v2274
        %v2276 = vsel %vm1010, %v2261, 0.0
        %2277 = vadd.xlane.f32.xlu0 %v2276
        %v2278 = vpop.xlane.xlu0 %2277
        %v2279 = vsel %vm1010, %v2263, 0.0
        %2280 = vadd.xlane.f32.xlu0 %v2279
        %v2281 = vpop.xlane.xlu0 %2280
        %v2282 = vsel %vm1010, %v2265, 0.0
        %2283 = vadd.xlane.f32.xlu0 %v2282
        %v2284 = vpop.xlane.xlu0 %2283
        %v2285 = vsel %vm1010, %v2267, 0.0
        %2286 = vadd.xlane.f32.xlu0 %v2285
        %v2287 = vpop.xlane.xlu0 %2286
        %v2288 = vsel %vm1010, %v2269, 0.0
        %2289 = vadd.xlane.f32.xlu0 %v2288
        %v2290 = vpop.xlane.xlu0 %2289
        %v2291 = vsel %vm1010, %v2271, 0.0
        %2292 = vadd.xlane.f32.xlu0 %v2291
        %v2293 = vpop.xlane.xlu0 %2292
        %v2294 = vsel %vm1010, %v2273, 0.0
        %2295 = vadd.xlane.f32.xlu0 %v2294
        %v2296 = vpop.xlane.xlu0 %2295
        %v2297 = vsel %vm1010, %v2275, 0.0
        %2298 = vadd.xlane.f32.xlu0 %v2297
        %v2299 = vpop.xlane.xlu0 %2298
        %v2300 = vrcp.pop %v2278
        %v2301 = vrcp.pop %v2281
        %v2302 = vrcp.pop %v2284
        %v2303 = vrcp.pop %v2287
        %v2304 = vrcp.pop %v2290
        %v2305 = vrcp.pop %v2293
        %v2306 = vrcp.pop %v2296
        %v2307 = vrcp.pop %v2299
        %v2308 = vmul.f32 %v2261, %v2300
        %v2309 = vmul.f32 %v2263, %v2301
        %v2310 = vmul.f32 %v2265, %v2302
        %v2311 = vmul.f32 %v2267, %v2303
        %v2312 = vmul.f32 %v2269, %v2304
        %v2313 = vmul.f32 %v2271, %v2305
        %v2314 = vmul.f32 %v2273, %v2306
        %v2315 = vmul.f32 %v2275, %v2307
        %2316 = vrot.lane.b32.xlu0 %v722, 80
        %v2317 = vpop.permute.xlu0 %2316
        %2318 = vrot.lane.b32.xlu0 %v725, 80
        %v2319 = vpop.permute.xlu0 %2318
        %v2323 = vsel %vm1010, %v2308, 0
        %2325 = vmatpush.msra.mxu0 0.0
        %2326 = vmatpush.msra.mxu0 0.0
        %2327 = vmatpush.msra.mxu0 0.0
        %2328 = vmatpush.msra.mxu0 0.0
        %2329 = vmatpush.msra.mxu0 0.0
        %2330 = vmatpush.msra.mxu0 0.0
        %2331 = vmatpush.msra.mxu0 0.0
        %2332 = vmatpush.msra.mxu0 0.0
        %2333 = vmatpush.msra.mxu0 0.0
        %2334 = vmatpush.msra.mxu0 0.0
        %2335 = vmatpush.msra.mxu0 0.0
        %2336 = vmatpush.msra.mxu0 0.0
        %2337 = vmatpush.msra.mxu0 0.0
        %2338 = vmatpush.msra.mxu0 0.0
        %2339 = vmatpush.msra.mxu0 %v2319
        %2340 = vmatpush.msra.mxu0 %v2317
        %2341 = vmatmul.f32.gmra.mxu0 %v2323
        %v2342 = vpop.f32.mrf.mxu0
        %v2343 = vadd.f32 0.0, %v2342
        %2344 = vdwg.mxu0
        %2345 = vrot.lane.b32.xlu0 %v728, 80
        %v2346 = vpop.permute.xlu0 %2345
        %2347 = vrot.lane.b32.xlu0 %v731, 80
        %v2348 = vpop.permute.xlu0 %2347
        %v2352 = vsel %vm1010, %v2309, 0
        %2354 = vmatpush.msra.mxu0 0.0
        %2355 = vmatpush.msra.mxu0 0.0
        %2356 = vmatpush.msra.mxu0 0.0
        %2357 = vmatpush.msra.mxu0 0.0
        %2358 = vmatpush.msra.mxu0 0.0
        %2359 = vmatpush.msra.mxu0 0.0
        %2360 = vmatpush.msra.mxu0 0.0
        %2361 = vmatpush.msra.mxu0 0.0
        %2362 = vmatpush.msra.mxu0 0.0
        %2363 = vmatpush.msra.mxu0 0.0
        %2364 = vmatpush.msra.mxu0 0.0
        %2365 = vmatpush.msra.mxu0 0.0
        %2366 = vmatpush.msra.mxu0 0.0
        %2367 = vmatpush.msra.mxu0 0.0
        %2368 = vmatpush.msra.mxu0 %v2348
        %2369 = vmatpush.msra.mxu0 %v2346
        %2370 = vmatmul.f32.gmra.mxu0 %v2352
        %v2371 = vpop.f32.mrf.mxu0
        %v2372 = vadd.f32 0.0, %v2371
        %2373 = vdwg.mxu0
        %2374 = vrot.lane.b32.xlu0 %v734, 80
        %v2375 = vpop.permute.xlu0 %2374
        %2376 = vrot.lane.b32.xlu0 %v737, 80
        %v2377 = vpop.permute.xlu0 %2376
        %v2381 = vsel %vm1010, %v2310, 0
        %2383 = vmatpush.msra.mxu0 0.0
        %2384 = vmatpush.msra.mxu0 0.0
        %2385 = vmatpush.msra.mxu0 0.0
        %2386 = vmatpush.msra.mxu0 0.0
        %2387 = vmatpush.msra.mxu0 0.0
        %2388 = vmatpush.msra.mxu0 0.0
        %2389 = vmatpush.msra.mxu0 0.0
        %2390 = vmatpush.msra.mxu0 0.0
        %2391 = vmatpush.msra.mxu0 0.0
        %2392 = vmatpush.msra.mxu0 0.0
        %2393 = vmatpush.msra.mxu0 0.0
        %2394 = vmatpush.msra.mxu0 0.0
        %2395 = vmatpush.msra.mxu0 0.0
        %2396 = vmatpush.msra.mxu0 0.0
        %2397 = vmatpush.msra.mxu0 %v2377
        %2398 = vmatpush.msra.mxu0 %v2375
        %2399 = vmatmul.f32.gmra.mxu0 %v2381
        %v2400 = vpop.f32.mrf.mxu0
        %v2401 = vadd.f32 0.0, %v2400
        %2402 = vdwg.mxu0
        %2403 = vrot.lane.b32.xlu0 %v740, 80
        %v2404 = vpop.permute.xlu0 %2403
        %2405 = vrot.lane.b32.xlu0 %v743, 80
        %v2406 = vpop.permute.xlu0 %2405
        %v2410 = vsel %vm1010, %v2311, 0
        %2412 = vmatpush.msra.mxu0 0.0
        %2413 = vmatpush.msra.mxu0 0.0
        %2414 = vmatpush.msra.mxu0 0.0
        %2415 = vmatpush.msra.mxu0 0.0
        %2416 = vmatpush.msra.mxu0 0.0
        %2417 = vmatpush.msra.mxu0 0.0
        %2418 = vmatpush.msra.mxu0 0.0
        %2419 = vmatpush.msra.mxu0 0.0
        %2420 = vmatpush.msra.mxu0 0.0
        %2421 = vmatpush.msra.mxu0 0.0
        %2422 = vmatpush.msra.mxu0 0.0
        %2423 = vmatpush.msra.mxu0 0.0
        %2424 = vmatpush.msra.mxu0 0.0
        %2425 = vmatpush.msra.mxu0 0.0
        %2426 = vmatpush.msra.mxu0 %v2406
        %2427 = vmatpush.msra.mxu0 %v2404
        %2428 = vmatmul.f32.gmra.mxu0 %v2410
        %v2429 = vpop.f32.mrf.mxu0
        %v2430 = vadd.f32 0.0, %v2429
        %2431 = vdwg.mxu0
        %2432 = vrot.lane.b32.xlu0 %v746, 80
        %v2433 = vpop.permute.xlu0 %2432
        %2434 = vrot.lane.b32.xlu0 %v749, 80
        %v2435 = vpop.permute.xlu0 %2434
        %v2439 = vsel %vm1010, %v2312, 0
        %2441 = vmatpush.msra.mxu0 0.0
        %2442 = vmatpush.msra.mxu0 0.0
        %2443 = vmatpush.msra.mxu0 0.0
        %2444 = vmatpush.msra.mxu0 0.0
        %2445 = vmatpush.msra.mxu0 0.0
        %2446 = vmatpush.msra.mxu0 0.0
        %2447 = vmatpush.msra.mxu0 0.0
        %2448 = vmatpush.msra.mxu0 0.0
        %2449 = vmatpush.msra.mxu0 0.0
        %2450 = vmatpush.msra.mxu0 0.0
        %2451 = vmatpush.msra.mxu0 0.0
        %2452 = vmatpush.msra.mxu0 0.0
        %2453 = vmatpush.msra.mxu0 0.0
        %2454 = vmatpush.msra.mxu0 0.0
        %2455 = vmatpush.msra.mxu0 %v2435
        %2456 = vmatpush.msra.mxu0 %v2433
        %2457 = vmatmul.f32.gmra.mxu0 %v2439
        %v2458 = vpop.f32.mrf.mxu0
        %v2459 = vadd.f32 0.0, %v2458
        %2460 = vdwg.mxu0
        %2461 = vrot.lane.b32.xlu0 %v752, 80
        %v2462 = vpop.permute.xlu0 %2461
        %2463 = vrot.lane.b32.xlu0 %v755, 80
        %v2464 = vpop.permute.xlu0 %2463
        %v2468 = vsel %vm1010, %v2313, 0
        %2470 = vmatpush.msra.mxu0 0.0
        %2471 = vmatpush.msra.mxu0 0.0
        %2472 = vmatpush.msra.mxu0 0.0
        %2473 = vmatpush.msra.mxu0 0.0
        %2474 = vmatpush.msra.mxu0 0.0
        %2475 = vmatpush.msra.mxu0 0.0
        %2476 = vmatpush.msra.mxu0 0.0
        %2477 = vmatpush.msra.mxu0 0.0
        %2478 = vmatpush.msra.mxu0 0.0
        %2479 = vmatpush.msra.mxu0 0.0
        %2480 = vmatpush.msra.mxu0 0.0
        %2481 = vmatpush.msra.mxu0 0.0
        %2482 = vmatpush.msra.mxu0 0.0
        %2483 = vmatpush.msra.mxu0 0.0
        %2484 = vmatpush.msra.mxu0 %v2464
        %2485 = vmatpush.msra.mxu0 %v2462
        %2486 = vmatmul.f32.gmra.mxu0 %v2468
        %v2487 = vpop.f32.mrf.mxu0
        %v2488 = vadd.f32 0.0, %v2487
        %2489 = vdwg.mxu0
        %2490 = vrot.lane.b32.xlu0 %v758, 80
        %v2491 = vpop.permute.xlu0 %2490
        %2492 = vrot.lane.b32.xlu0 %v761, 80
        %v2493 = vpop.permute.xlu0 %2492
        %v2497 = vsel %vm1010, %v2314, 0
        %2499 = vmatpush.msra.mxu0 0.0
        %2500 = vmatpush.msra.mxu0 0.0
        %2501 = vmatpush.msra.mxu0 0.0
        %2502 = vmatpush.msra.mxu0 0.0
        %2503 = vmatpush.msra.mxu0 0.0
        %2504 = vmatpush.msra.mxu0 0.0
        %2505 = vmatpush.msra.mxu0 0.0
        %2506 = vmatpush.msra.mxu0 0.0
        %2507 = vmatpush.msra.mxu0 0.0
        %2508 = vmatpush.msra.mxu0 0.0
        %2509 = vmatpush.msra.mxu0 0.0
        %2510 = vmatpush.msra.mxu0 0.0
        %2511 = vmatpush.msra.mxu0 0.0
        %2512 = vmatpush.msra.mxu0 0.0
        %2513 = vmatpush.msra.mxu0 %v2493
        %2514 = vmatpush.msra.mxu0 %v2491
        %2515 = vmatmul.f32.gmra.mxu0 %v2497
        %v2516 = vpop.f32.mrf.mxu0
        %v2517 = vadd.f32 0.0, %v2516
        %2518 = vdwg.mxu0
        %2519 = vrot.lane.b32.xlu0 %v764, 80
        %v2520 = vpop.permute.xlu0 %2519
        %2521 = vrot.lane.b32.xlu0 %v767, 80
        %v2522 = vpop.permute.xlu0 %2521
        %v2526 = vsel %vm1010, %v2315, 0
        %2528 = vmatpush.msra.mxu0 0.0
        %2529 = vmatpush.msra.mxu0 0.0
        %2530 = vmatpush.msra.mxu0 0.0
        %2531 = vmatpush.msra.mxu0 0.0
        %2532 = vmatpush.msra.mxu0 0.0
        %2533 = vmatpush.msra.mxu0 0.0
        %2534 = vmatpush.msra.mxu0 0.0
        %2535 = vmatpush.msra.mxu0 0.0
        %2536 = vmatpush.msra.mxu0 0.0
        %2537 = vmatpush.msra.mxu0 0.0
        %2538 = vmatpush.msra.mxu0 0.0
        %2539 = vmatpush.msra.mxu0 0.0
        %2540 = vmatpush.msra.mxu0 0.0
        %2541 = vmatpush.msra.mxu0 0.0
        %2542 = vmatpush.msra.mxu0 %v2522
        %2543 = vmatpush.msra.mxu0 %v2520
        %2544 = vmatmul.f32.gmra.mxu0 %v2526
        %v2545 = vpop.f32.mrf.mxu0
        %v2546 = vadd.f32 0.0, %v2545
        %2547 = vdwg.mxu0
        %2556 = vrot.lane.b32.xlu0 %v2343, 16
        %v2557 = vpop.permute.xlu0 %2556
        %2558 = vrot.lane.b32.xlu0 %v2372, 16
        %v2559 = vpop.permute.xlu0 %2558
        %2560 = vrot.lane.b32.xlu0 %v2401, 16
        %v2561 = vpop.permute.xlu0 %2560
        %2562 = vrot.lane.b32.xlu0 %v2430, 16
        %v2563 = vpop.permute.xlu0 %2562
        %2564 = vrot.lane.b32.xlu0 %v2459, 16
        %v2565 = vpop.permute.xlu0 %2564
        %2566 = vrot.lane.b32.xlu0 %v2488, 16
        %v2567 = vpop.permute.xlu0 %2566
        %2568 = vrot.lane.b32.xlu0 %v2517, 16
        %v2569 = vpop.permute.xlu0 %2568
        %2570 = vrot.lane.b32.xlu0 %v2546, 16
        %v2571 = vpop.permute.xlu0 %2570
        %vm2580 = vcmask 195712
        %2581 = vst.msk [vmem:[#allocation2] sm:$0xff] %vm2580, %v2557
        %2582 = vst.msk [vmem:[#allocation2 + $0x8] sm:$0xff] %vm2580, %v2559
        %2583 = vst.msk [vmem:[#allocation2 + $0x10] sm:$0xff] %vm2580, %v2561
        %2584 = vst.msk [vmem:[#allocation2 + $0x18] sm:$0xff] %vm2580, %v2563
        %2585 = vst.msk [vmem:[#allocation2 + $0x20] sm:$0xff] %vm2580, %v2565
        %2586 = vst.msk [vmem:[#allocation2 + $0x28] sm:$0xff] %vm2580, %v2567
        %2587 = vst.msk [vmem:[#allocation2 + $0x30] sm:$0xff] %vm2580, %v2569
        %2588 = vst.msk [vmem:[#allocation2 + $0x38] sm:$0xff] %vm2580, %v2571
        %2589 = vrot.lane.b32.xlu0 %v625, 104
        %v2590 = vpop.permute.xlu0 %2589
        %2591 = vrot.lane.b32.xlu0 %v722, 104
        %v2592 = vpop.permute.xlu0 %2591
        %2593 = vrot.lane.b32.xlu0 %v725, 104
        %v2594 = vpop.permute.xlu0 %2593
        %v2595 = vsel %vm769, %v2590, 0
        %v2597 = vsel %vm769, %v2592, 0
        %v2599 = vsel %vm769, %v2594, 0
        %2601 = vmatpush.xpose.msra.mxu0 0.0
        %2602 = vmatpush.xpose.msra.mxu0 0.0
        %2603 = vmatpush.xpose.msra.mxu0 0.0
        %2604 = vmatpush.xpose.msra.mxu0 0.0
        %2605 = vmatpush.xpose.msra.mxu0 0.0
        %2606 = vmatpush.xpose.msra.mxu0 0.0
        %2607 = vmatpush.xpose.msra.mxu0 0.0
        %2608 = vmatpush.xpose.msra.mxu0 0.0
        %2609 = vmatpush.xpose.msra.mxu0 0.0
        %2610 = vmatpush.xpose.msra.mxu0 0.0
        %2611 = vmatpush.xpose.msra.mxu0 0.0
        %2612 = vmatpush.xpose.msra.mxu0 0.0
        %2613 = vmatpush.xpose.msra.mxu0 0.0
        %2614 = vmatpush.xpose.msra.mxu0 0.0
        %2615 = vmatpush.xpose.msra.mxu0 %v2599
        %2616 = vmatpush.xpose.msra.mxu0 %v2597
        %2617 = vmatmul.f32.gmra.mxu0 %v2595
        %v2618 = vpop.f32.mrf.mxu0
        %v2619 = vadd.f32 0.0, %v2618
        %2620 = vdwg.mxu0
        %2621 = vrot.lane.b32.xlu0 %v628, 104
        %v2622 = vpop.permute.xlu0 %2621
        %2623 = vrot.lane.b32.xlu0 %v728, 104
        %v2624 = vpop.permute.xlu0 %2623
        %2625 = vrot.lane.b32.xlu0 %v731, 104
        %v2626 = vpop.permute.xlu0 %2625
        %v2627 = vsel %vm769, %v2622, 0
        %v2629 = vsel %vm769, %v2624, 0
        %v2631 = vsel %vm769, %v2626, 0
        %2633 = vmatpush.xpose.msra.mxu0 0.0
        %2634 = vmatpush.xpose.msra.mxu0 0.0
        %2635 = vmatpush.xpose.msra.mxu0 0.0
        %2636 = vmatpush.xpose.msra.mxu0 0.0
        %2637 = vmatpush.xpose.msra.mxu0 0.0
        %2638 = vmatpush.xpose.msra.mxu0 0.0
        %2639 = vmatpush.xpose.msra.mxu0 0.0
        %2640 = vmatpush.xpose.msra.mxu0 0.0
        %2641 = vmatpush.xpose.msra.mxu0 0.0
        %2642 = vmatpush.xpose.msra.mxu0 0.0
        %2643 = vmatpush.xpose.msra.mxu0 0.0
        %2644 = vmatpush.xpose.msra.mxu0 0.0
        %2645 = vmatpush.xpose.msra.mxu0 0.0
        %2646 = vmatpush.xpose.msra.mxu0 0.0
        %2647 = vmatpush.xpose.msra.mxu0 %v2631
        %2648 = vmatpush.xpose.msra.mxu0 %v2629
        %2649 = vmatmul.f32.gmra.mxu0 %v2627
        %v2650 = vpop.f32.mrf.mxu0
        %v2651 = vadd.f32 0.0, %v2650
        %2652 = vdwg.mxu0
        %2653 = vrot.lane.b32.xlu0 %v631, 104
        %v2654 = vpop.permute.xlu0 %2653
        %2655 = vrot.lane.b32.xlu0 %v734, 104
        %v2656 = vpop.permute.xlu0 %2655
        %2657 = vrot.lane.b32.xlu0 %v737, 104
        %v2658 = vpop.permute.xlu0 %2657
        %v2659 = vsel %vm769, %v2654, 0
        %v2661 = vsel %vm769, %v2656, 0
        %v2663 = vsel %vm769, %v2658, 0
        %2665 = vmatpush.xpose.msra.mxu0 0.0
        %2666 = vmatpush.xpose.msra.mxu0 0.0
        %2667 = vmatpush.xpose.msra.mxu0 0.0
        %2668 = vmatpush.xpose.msra.mxu0 0.0
        %2669 = vmatpush.xpose.msra.mxu0 0.0
        %2670 = vmatpush.xpose.msra.mxu0 0.0
        %2671 = vmatpush.xpose.msra.mxu0 0.0
        %2672 = vmatpush.xpose.msra.mxu0 0.0
        %2673 = vmatpush.xpose.msra.mxu0 0.0
        %2674 = vmatpush.xpose.msra.mxu0 0.0
        %2675 = vmatpush.xpose.msra.mxu0 0.0
        %2676 = vmatpush.xpose.msra.mxu0 0.0
        %2677 = vmatpush.xpose.msra.mxu0 0.0
        %2678 = vmatpush.xpose.msra.mxu0 0.0
        %2679 = vmatpush.xpose.msra.mxu0 %v2663
        %2680 = vmatpush.xpose.msra.mxu0 %v2661
        %2681 = vmatmul.f32.gmra.mxu0 %v2659
        %v2682 = vpop.f32.mrf.mxu0
        %v2683 = vadd.f32 0.0, %v2682
        %2684 = vdwg.mxu0
        %2685 = vrot.lane.b32.xlu0 %v634, 104
        %v2686 = vpop.permute.xlu0 %2685
        %2687 = vrot.lane.b32.xlu0 %v740, 104
        %v2688 = vpop.permute.xlu0 %2687
        %2689 = vrot.lane.b32.xlu0 %v743, 104
        %v2690 = vpop.permute.xlu0 %2689
        %v2691 = vsel %vm769, %v2686, 0
        %v2693 = vsel %vm769, %v2688, 0
        %v2695 = vsel %vm769, %v2690, 0
        %2697 = vmatpush.xpose.msra.mxu0 0.0
        %2698 = vmatpush.xpose.msra.mxu0 0.0
        %2699 = vmatpush.xpose.msra.mxu0 0.0
        %2700 = vmatpush.xpose.msra.mxu0 0.0
        %2701 = vmatpush.xpose.msra.mxu0 0.0
        %2702 = vmatpush.xpose.msra.mxu0 0.0
        %2703 = vmatpush.xpose.msra.mxu0 0.0
        %2704 = vmatpush.xpose.msra.mxu0 0.0
        %2705 = vmatpush.xpose.msra.mxu0 0.0
        %2706 = vmatpush.xpose.msra.mxu0 0.0
        %2707 = vmatpush.xpose.msra.mxu0 0.0
        %2708 = vmatpush.xpose.msra.mxu0 0.0
        %2709 = vmatpush.xpose.msra.mxu0 0.0
        %2710 = vmatpush.xpose.msra.mxu0 0.0
        %2711 = vmatpush.xpose.msra.mxu0 %v2695
        %2712 = vmatpush.xpose.msra.mxu0 %v2693
        %2713 = vmatmul.f32.gmra.mxu0 %v2691
        %v2714 = vpop.f32.mrf.mxu0
        %v2715 = vadd.f32 0.0, %v2714
        %2716 = vdwg.mxu0
        %2717 = vrot.lane.b32.xlu0 %v637, 104
        %v2718 = vpop.permute.xlu0 %2717
        %2719 = vrot.lane.b32.xlu0 %v746, 104
        %v2720 = vpop.permute.xlu0 %2719
        %2721 = vrot.lane.b32.xlu0 %v749, 104
        %v2722 = vpop.permute.xlu0 %2721
        %v2723 = vsel %vm769, %v2718, 0
        %v2725 = vsel %vm769, %v2720, 0
        %v2727 = vsel %vm769, %v2722, 0
        %2729 = vmatpush.xpose.msra.mxu0 0.0
        %2730 = vmatpush.xpose.msra.mxu0 0.0
        %2731 = vmatpush.xpose.msra.mxu0 0.0
        %2732 = vmatpush.xpose.msra.mxu0 0.0
        %2733 = vmatpush.xpose.msra.mxu0 0.0
        %2734 = vmatpush.xpose.msra.mxu0 0.0
        %2735 = vmatpush.xpose.msra.mxu0 0.0
        %2736 = vmatpush.xpose.msra.mxu0 0.0
        %2737 = vmatpush.xpose.msra.mxu0 0.0
        %2738 = vmatpush.xpose.msra.mxu0 0.0
        %2739 = vmatpush.xpose.msra.mxu0 0.0
        %2740 = vmatpush.xpose.msra.mxu0 0.0
        %2741 = vmatpush.xpose.msra.mxu0 0.0
        %2742 = vmatpush.xpose.msra.mxu0 0.0
        %2743 = vmatpush.xpose.msra.mxu0 %v2727
        %2744 = vmatpush.xpose.msra.mxu0 %v2725
        %2745 = vmatmul.f32.gmra.mxu0 %v2723
        %v2746 = vpop.f32.mrf.mxu0
        %v2747 = vadd.f32 0.0, %v2746
        %2748 = vdwg.mxu0
        %2749 = vrot.lane.b32.xlu0 %v640, 104
        %v2750 = vpop.permute.xlu0 %2749
        %2751 = vrot.lane.b32.xlu0 %v752, 104
        %v2752 = vpop.permute.xlu0 %2751
        %2753 = vrot.lane.b32.xlu0 %v755, 104
        %v2754 = vpop.permute.xlu0 %2753
        %v2755 = vsel %vm769, %v2750, 0
        %v2757 = vsel %vm769, %v2752, 0
        %v2759 = vsel %vm769, %v2754, 0
        %2761 = vmatpush.xpose.msra.mxu0 0.0
        %2762 = vmatpush.xpose.msra.mxu0 0.0
        %2763 = vmatpush.xpose.msra.mxu0 0.0
        %2764 = vmatpush.xpose.msra.mxu0 0.0
        %2765 = vmatpush.xpose.msra.mxu0 0.0
        %2766 = vmatpush.xpose.msra.mxu0 0.0
        %2767 = vmatpush.xpose.msra.mxu0 0.0
        %2768 = vmatpush.xpose.msra.mxu0 0.0
        %2769 = vmatpush.xpose.msra.mxu0 0.0
        %2770 = vmatpush.xpose.msra.mxu0 0.0
        %2771 = vmatpush.xpose.msra.mxu0 0.0
        %2772 = vmatpush.xpose.msra.mxu0 0.0
        %2773 = vmatpush.xpose.msra.mxu0 0.0
        %2774 = vmatpush.xpose.msra.mxu0 0.0
        %2775 = vmatpush.xpose.msra.mxu0 %v2759
        %2776 = vmatpush.xpose.msra.mxu0 %v2757
        %2777 = vmatmul.f32.gmra.mxu0 %v2755
        %v2778 = vpop.f32.mrf.mxu0
        %v2779 = vadd.f32 0.0, %v2778
        %2780 = vdwg.mxu0
        %2781 = vrot.lane.b32.xlu0 %v643, 104
        %v2782 = vpop.permute.xlu0 %2781
        %2783 = vrot.lane.b32.xlu0 %v758, 104
        %v2784 = vpop.permute.xlu0 %2783
        %2785 = vrot.lane.b32.xlu0 %v761, 104
        %v2786 = vpop.permute.xlu0 %2785
        %v2787 = vsel %vm769, %v2782, 0
        %v2789 = vsel %vm769, %v2784, 0
        %v2791 = vsel %vm769, %v2786, 0
        %2793 = vmatpush.xpose.msra.mxu0 0.0
        %2794 = vmatpush.xpose.msra.mxu0 0.0
        %2795 = vmatpush.xpose.msra.mxu0 0.0
        %2796 = vmatpush.xpose.msra.mxu0 0.0
        %2797 = vmatpush.xpose.msra.mxu0 0.0
        %2798 = vmatpush.xpose.msra.mxu0 0.0
        %2799 = vmatpush.xpose.msra.mxu0 0.0
        %2800 = vmatpush.xpose.msra.mxu0 0.0
        %2801 = vmatpush.xpose.msra.mxu0 0.0
        %2802 = vmatpush.xpose.msra.mxu0 0.0
        %2803 = vmatpush.xpose.msra.mxu0 0.0
        %2804 = vmatpush.xpose.msra.mxu0 0.0
        %2805 = vmatpush.xpose.msra.mxu0 0.0
        %2806 = vmatpush.xpose.msra.mxu0 0.0
        %2807 = vmatpush.xpose.msra.mxu0 %v2791
        %2808 = vmatpush.xpose.msra.mxu0 %v2789
        %2809 = vmatmul.f32.gmra.mxu0 %v2787
        %v2810 = vpop.f32.mrf.mxu0
        %v2811 = vadd.f32 0.0, %v2810
        %2812 = vdwg.mxu0
        %2813 = vrot.lane.b32.xlu0 %v646, 104
        %v2814 = vpop.permute.xlu0 %2813
        %2815 = vrot.lane.b32.xlu0 %v764, 104
        %v2816 = vpop.permute.xlu0 %2815
        %2817 = vrot.lane.b32.xlu0 %v767, 104
        %v2818 = vpop.permute.xlu0 %2817
        %v2819 = vsel %vm769, %v2814, 0
        %v2821 = vsel %vm769, %v2816, 0
        %v2823 = vsel %vm769, %v2818, 0
        %2825 = vmatpush.xpose.msra.mxu0 0.0
        %2826 = vmatpush.xpose.msra.mxu0 0.0
        %2827 = vmatpush.xpose.msra.mxu0 0.0
        %2828 = vmatpush.xpose.msra.mxu0 0.0
        %2829 = vmatpush.xpose.msra.mxu0 0.0
        %2830 = vmatpush.xpose.msra.mxu0 0.0
        %2831 = vmatpush.xpose.msra.mxu0 0.0
        %2832 = vmatpush.xpose.msra.mxu0 0.0
        %2833 = vmatpush.xpose.msra.mxu0 0.0
        %2834 = vmatpush.xpose.msra.mxu0 0.0
        %2835 = vmatpush.xpose.msra.mxu0 0.0
        %2836 = vmatpush.xpose.msra.mxu0 0.0
        %2837 = vmatpush.xpose.msra.mxu0 0.0
        %2838 = vmatpush.xpose.msra.mxu0 0.0
        %2839 = vmatpush.xpose.msra.mxu0 %v2823
        %2840 = vmatpush.xpose.msra.mxu0 %v2821
        %2841 = vmatmul.f32.gmra.mxu0 %v2819
        %v2842 = vpop.f32.mrf.mxu0
        %v2843 = vadd.f32 0.0, %v2842
        %2844 = vdwg.mxu0
        %v2845 = vmul.f32 %v2619, 0.35355338
        %v2846 = vmul.f32 %v2651, 0.35355338
        %v2847 = vmul.f32 %v2683, 0.35355338
        %v2848 = vmul.f32 %v2715, 0.35355338
        %v2849 = vmul.f32 %v2747, 0.35355338
        %v2850 = vmul.f32 %v2779, 0.35355338
        %v2851 = vmul.f32 %v2811, 0.35355338
        %v2852 = vmul.f32 %v2843, 0.35355338
        %v2853 = vsel %vm1010, %v2845, -inf
        %2854 = vmax.xlane.f32.xlu0 %v2853
        %v2855 = vpop.xlane.xlu0 %2854
        %v2856 = vsel %vm1010, %v2846, -inf
        %2857 = vmax.xlane.f32.xlu0 %v2856
        %v2858 = vpop.xlane.xlu0 %2857
        %v2859 = vsel %vm1010, %v2847, -inf
        %2860 = vmax.xlane.f32.xlu0 %v2859
        %v2861 = vpop.xlane.xlu0 %2860
        %v2862 = vsel %vm1010, %v2848, -inf
        %2863 = vmax.xlane.f32.xlu0 %v2862
        %v2864 = vpop.xlane.xlu0 %2863
        %v2865 = vsel %vm1010, %v2849, -inf
        %2866 = vmax.xlane.f32.xlu0 %v2865
        %v2867 = vpop.xlane.xlu0 %2866
        %v2868 = vsel %vm1010, %v2850, -inf
        %2869 = vmax.xlane.f32.xlu0 %v2868
        %v2870 = vpop.xlane.xlu0 %2869
        %v2871 = vsel %vm1010, %v2851, -inf
        %2872 = vmax.xlane.f32.xlu0 %v2871
        %v2873 = vpop.xlane.xlu0 %2872
        %v2874 = vsel %vm1010, %v2852, -inf
        %2875 = vmax.xlane.f32.xlu0 %v2874
        %v2876 = vpop.xlane.xlu0 %2875
        %v2877 = vsub.f32 %v2845, %v2855
        %v2878 = vsub.f32 %v2846, %v2858
        %v2879 = vsub.f32 %v2847, %v2861
        %v2880 = vsub.f32 %v2848, %v2864
        %v2881 = vsub.f32 %v2849, %v2867
        %v2882 = vsub.f32 %v2850, %v2870
        %v2883 = vsub.f32 %v2851, %v2873
        %v2884 = vsub.f32 %v2852, %v2876
        %v2885 = vmul.f32 %v2877, 1.442695
        %v2886 = vpow.pop %v2885
        %v2887 = vmul.f32 %v2878, 1.442695
        %v2888 = vpow.pop %v2887
        %v2889 = vmul.f32 %v2879, 1.442695
        %v2890 = vpow.pop %v2889
        %v2891 = vmul.f32 %v2880, 1.442695
        %v2892 = vpow.pop %v2891
        %v2893 = vmul.f32 %v2881, 1.442695
        %v2894 = vpow.pop %v2893
        %v2895 = vmul.f32 %v2882, 1.442695
        %v2896 = vpow.pop %v2895
        %v2897 = vmul.f32 %v2883, 1.442695
        %v2898 = vpow.pop %v2897
        %v2899 = vmul.f32 %v2884, 1.442695
        %v2900 = vpow.pop %v2899
        %v2901 = vsel %vm1010, %v2886, 0.0
        %2902 = vadd.xlane.f32.xlu0 %v2901
        %v2903 = vpop.xlane.xlu0 %2902
        %v2904 = vsel %vm1010, %v2888, 0.0
        %2905 = vadd.xlane.f32.xlu0 %v2904
        %v2906 = vpop.xlane.xlu0 %2905
        %v2907 = vsel %vm1010, %v2890, 0.0
        %2908 = vadd.xlane.f32.xlu0 %v2907
        %v2909 = vpop.xlane.xlu0 %2908
        %v2910 = vsel %vm1010, %v2892, 0.0
        %2911 = vadd.xlane.f32.xlu0 %v2910
        %v2912 = vpop.xlane.xlu0 %2911
        %v2913 = vsel %vm1010, %v2894, 0.0
        %2914 = vadd.xlane.f32.xlu0 %v2913
        %v2915 = vpop.xlane.xlu0 %2914
        %v2916 = vsel %vm1010, %v2896, 0.0
        %2917 = vadd.xlane.f32.xlu0 %v2916
        %v2918 = vpop.xlane.xlu0 %2917
        %v2919 = vsel %vm1010, %v2898, 0.0
        %2920 = vadd.xlane.f32.xlu0 %v2919
        %v2921 = vpop.xlane.xlu0 %2920
        %v2922 = vsel %vm1010, %v2900, 0.0
        %2923 = vadd.xlane.f32.xlu0 %v2922
        %v2924 = vpop.xlane.xlu0 %2923
        %v2925 = vrcp.pop %v2903
        %v2926 = vrcp.pop %v2906
        %v2927 = vrcp.pop %v2909
        %v2928 = vrcp.pop %v2912
        %v2929 = vrcp.pop %v2915
        %v2930 = vrcp.pop %v2918
        %v2931 = vrcp.pop %v2921
        %v2932 = vrcp.pop %v2924
        %v2933 = vmul.f32 %v2886, %v2925
        %v2934 = vmul.f32 %v2888, %v2926
        %v2935 = vmul.f32 %v2890, %v2927
        %v2936 = vmul.f32 %v2892, %v2928
        %v2937 = vmul.f32 %v2894, %v2929
        %v2938 = vmul.f32 %v2896, %v2930
        %v2939 = vmul.f32 %v2898, %v2931
        %v2940 = vmul.f32 %v2900, %v2932
        %2941 = vrot.lane.b32.xlu0 %v722, 72
        %v2942 = vpop.permute.xlu0 %2941
        %2943 = vrot.lane.b32.xlu0 %v725, 72
        %v2944 = vpop.permute.xlu0 %2943
        %v2948 = vsel %vm1010, %v2933, 0
        %2950 = vmatpush.msra.mxu0 0.0
        %2951 = vmatpush.msra.mxu0 0.0
        %2952 = vmatpush.msra.mxu0 0.0
        %2953 = vmatpush.msra.mxu0 0.0
        %2954 = vmatpush.msra.mxu0 0.0
        %2955 = vmatpush.msra.mxu0 0.0
        %2956 = vmatpush.msra.mxu0 0.0
        %2957 = vmatpush.msra.mxu0 0.0
        %2958 = vmatpush.msra.mxu0 0.0
        %2959 = vmatpush.msra.mxu0 0.0
        %2960 = vmatpush.msra.mxu0 0.0
        %2961 = vmatpush.msra.mxu0 0.0
        %2962 = vmatpush.msra.mxu0 0.0
        %2963 = vmatpush.msra.mxu0 0.0
        %2964 = vmatpush.msra.mxu0 %v2944
        %2965 = vmatpush.msra.mxu0 %v2942
        %2966 = vmatmul.f32.gmra.mxu0 %v2948
        %v2967 = vpop.f32.mrf.mxu0
        %v2968 = vadd.f32 0.0, %v2967
        %2969 = vdwg.mxu0
        %2970 = vrot.lane.b32.xlu0 %v728, 72
        %v2971 = vpop.permute.xlu0 %2970
        %2972 = vrot.lane.b32.xlu0 %v731, 72
        %v2973 = vpop.permute.xlu0 %2972
        %v2977 = vsel %vm1010, %v2934, 0
        %2979 = vmatpush.msra.mxu0 0.0
        %2980 = vmatpush.msra.mxu0 0.0
        %2981 = vmatpush.msra.mxu0 0.0
        %2982 = vmatpush.msra.mxu0 0.0
        %2983 = vmatpush.msra.mxu0 0.0
        %2984 = vmatpush.msra.mxu0 0.0
        %2985 = vmatpush.msra.mxu0 0.0
        %2986 = vmatpush.msra.mxu0 0.0
        %2987 = vmatpush.msra.mxu0 0.0
        %2988 = vmatpush.msra.mxu0 0.0
        %2989 = vmatpush.msra.mxu0 0.0
        %2990 = vmatpush.msra.mxu0 0.0
        %2991 = vmatpush.msra.mxu0 0.0
        %2992 = vmatpush.msra.mxu0 0.0
        %2993 = vmatpush.msra.mxu0 %v2973
        %2994 = vmatpush.msra.mxu0 %v2971
        %2995 = vmatmul.f32.gmra.mxu0 %v2977
        %v2996 = vpop.f32.mrf.mxu0
        %v2997 = vadd.f32 0.0, %v2996
        %2998 = vdwg.mxu0
        %2999 = vrot.lane.b32.xlu0 %v734, 72
        %v3000 = vpop.permute.xlu0 %2999
        %3001 = vrot.lane.b32.xlu0 %v737, 72
        %v3002 = vpop.permute.xlu0 %3001
        %v3006 = vsel %vm1010, %v2935, 0
        %3008 = vmatpush.msra.mxu0 0.0
        %3009 = vmatpush.msra.mxu0 0.0
        %3010 = vmatpush.msra.mxu0 0.0
        %3011 = vmatpush.msra.mxu0 0.0
        %3012 = vmatpush.msra.mxu0 0.0
        %3013 = vmatpush.msra.mxu0 0.0
        %3014 = vmatpush.msra.mxu0 0.0
        %3015 = vmatpush.msra.mxu0 0.0
        %3016 = vmatpush.msra.mxu0 0.0
        %3017 = vmatpush.msra.mxu0 0.0
        %3018 = vmatpush.msra.mxu0 0.0
        %3019 = vmatpush.msra.mxu0 0.0
        %3020 = vmatpush.msra.mxu0 0.0
        %3021 = vmatpush.msra.mxu0 0.0
        %3022 = vmatpush.msra.mxu0 %v3002
        %3023 = vmatpush.msra.mxu0 %v3000
        %3024 = vmatmul.f32.gmra.mxu0 %v3006
        %v3025 = vpop.f32.mrf.mxu0
        %v3026 = vadd.f32 0.0, %v3025
        %3027 = vdwg.mxu0
        %3028 = vrot.lane.b32.xlu0 %v740, 72
        %v3029 = vpop.permute.xlu0 %3028
        %3030 = vrot.lane.b32.xlu0 %v743, 72
        %v3031 = vpop.permute.xlu0 %3030
        %v3035 = vsel %vm1010, %v2936, 0
        %3037 = vmatpush.msra.mxu0 0.0
        %3038 = vmatpush.msra.mxu0 0.0
        %3039 = vmatpush.msra.mxu0 0.0
        %3040 = vmatpush.msra.mxu0 0.0
        %3041 = vmatpush.msra.mxu0 0.0
        %3042 = vmatpush.msra.mxu0 0.0
        %3043 = vmatpush.msra.mxu0 0.0
        %3044 = vmatpush.msra.mxu0 0.0
        %3045 = vmatpush.msra.mxu0 0.0
        %3046 = vmatpush.msra.mxu0 0.0
        %3047 = vmatpush.msra.mxu0 0.0
        %3048 = vmatpush.msra.mxu0 0.0
        %3049 = vmatpush.msra.mxu0 0.0
        %3050 = vmatpush.msra.mxu0 0.0
        %3051 = vmatpush.msra.mxu0 %v3031
        %3052 = vmatpush.msra.mxu0 %v3029
        %3053 = vmatmul.f32.gmra.mxu0 %v3035
        %v3054 = vpop.f32.mrf.mxu0
        %v3055 = vadd.f32 0.0, %v3054
        %3056 = vdwg.mxu0
        %3057 = vrot.lane.b32.xlu0 %v746, 72
        %v3058 = vpop.permute.xlu0 %3057
        %3059 = vrot.lane.b32.xlu0 %v749, 72
        %v3060 = vpop.permute.xlu0 %3059
        %v3064 = vsel %vm1010, %v2937, 0
        %3066 = vmatpush.msra.mxu0 0.0
        %3067 = vmatpush.msra.mxu0 0.0
        %3068 = vmatpush.msra.mxu0 0.0
        %3069 = vmatpush.msra.mxu0 0.0
        %3070 = vmatpush.msra.mxu0 0.0
        %3071 = vmatpush.msra.mxu0 0.0
        %3072 = vmatpush.msra.mxu0 0.0
        %3073 = vmatpush.msra.mxu0 0.0
        %3074 = vmatpush.msra.mxu0 0.0
        %3075 = vmatpush.msra.mxu0 0.0
        %3076 = vmatpush.msra.mxu0 0.0
        %3077 = vmatpush.msra.mxu0 0.0
        %3078 = vmatpush.msra.mxu0 0.0
        %3079 = vmatpush.msra.mxu0 0.0
        %3080 = vmatpush.msra.mxu0 %v3060
        %3081 = vmatpush.msra.mxu0 %v3058
        %3082 = vmatmul.f32.gmra.mxu0 %v3064
        %v3083 = vpop.f32.mrf.mxu0
        %v3084 = vadd.f32 0.0, %v3083
        %3085 = vdwg.mxu0
        %3086 = vrot.lane.b32.xlu0 %v752, 72
        %v3087 = vpop.permute.xlu0 %3086
        %3088 = vrot.lane.b32.xlu0 %v755, 72
        %v3089 = vpop.permute.xlu0 %3088
        %v3093 = vsel %vm1010, %v2938, 0
        %3095 = vmatpush.msra.mxu0 0.0
        %3096 = vmatpush.msra.mxu0 0.0
        %3097 = vmatpush.msra.mxu0 0.0
        %3098 = vmatpush.msra.mxu0 0.0
        %3099 = vmatpush.msra.mxu0 0.0
        %3100 = vmatpush.msra.mxu0 0.0
        %3101 = vmatpush.msra.mxu0 0.0
        %3102 = vmatpush.msra.mxu0 0.0
        %3103 = vmatpush.msra.mxu0 0.0
        %3104 = vmatpush.msra.mxu0 0.0
        %3105 = vmatpush.msra.mxu0 0.0
        %3106 = vmatpush.msra.mxu0 0.0
        %3107 = vmatpush.msra.mxu0 0.0
        %3108 = vmatpush.msra.mxu0 0.0
        %3109 = vmatpush.msra.mxu0 %v3089
        %3110 = vmatpush.msra.mxu0 %v3087
        %3111 = vmatmul.f32.gmra.mxu0 %v3093
        %v3112 = vpop.f32.mrf.mxu0
        %v3113 = vadd.f32 0.0, %v3112
        %3114 = vdwg.mxu0
        %3115 = vrot.lane.b32.xlu0 %v758, 72
        %v3116 = vpop.permute.xlu0 %3115
        %3117 = vrot.lane.b32.xlu0 %v761, 72
        %v3118 = vpop.permute.xlu0 %3117
        %v3122 = vsel %vm1010, %v2939, 0
        %3124 = vmatpush.msra.mxu0 0.0
        %3125 = vmatpush.msra.mxu0 0.0
        %3126 = vmatpush.msra.mxu0 0.0
        %3127 = vmatpush.msra.mxu0 0.0
        %3128 = vmatpush.msra.mxu0 0.0
        %3129 = vmatpush.msra.mxu0 0.0
        %3130 = vmatpush.msra.mxu0 0.0
        %3131 = vmatpush.msra.mxu0 0.0
        %3132 = vmatpush.msra.mxu0 0.0
        %3133 = vmatpush.msra.mxu0 0.0
        %3134 = vmatpush.msra.mxu0 0.0
        %3135 = vmatpush.msra.mxu0 0.0
        %3136 = vmatpush.msra.mxu0 0.0
        %3137 = vmatpush.msra.mxu0 0.0
        %3138 = vmatpush.msra.mxu0 %v3118
        %3139 = vmatpush.msra.mxu0 %v3116
        %3140 = vmatmul.f32.gmra.mxu0 %v3122
        %v3141 = vpop.f32.mrf.mxu0
        %v3142 = vadd.f32 0.0, %v3141
        %3143 = vdwg.mxu0
        %3144 = vrot.lane.b32.xlu0 %v764, 72
        %v3145 = vpop.permute.xlu0 %3144
        %3146 = vrot.lane.b32.xlu0 %v767, 72
        %v3147 = vpop.permute.xlu0 %3146
        %v3151 = vsel %vm1010, %v2940, 0
        %3153 = vmatpush.msra.mxu0 0.0
        %3154 = vmatpush.msra.mxu0 0.0
        %3155 = vmatpush.msra.mxu0 0.0
        %3156 = vmatpush.msra.mxu0 0.0
        %3157 = vmatpush.msra.mxu0 0.0
        %3158 = vmatpush.msra.mxu0 0.0
        %3159 = vmatpush.msra.mxu0 0.0
        %3160 = vmatpush.msra.mxu0 0.0
        %3161 = vmatpush.msra.mxu0 0.0
        %3162 = vmatpush.msra.mxu0 0.0
        %3163 = vmatpush.msra.mxu0 0.0
        %3164 = vmatpush.msra.mxu0 0.0
        %3165 = vmatpush.msra.mxu0 0.0
        %3166 = vmatpush.msra.mxu0 0.0
        %3167 = vmatpush.msra.mxu0 %v3147
        %3168 = vmatpush.msra.mxu0 %v3145
        %3169 = vmatmul.f32.gmra.mxu0 %v3151
        %v3170 = vpop.f32.mrf.mxu0
        %v3171 = vadd.f32 0.0, %v3170
        %3172 = vdwg.mxu0
        %3181 = vrot.lane.b32.xlu0 %v2968, 24
        %v3182 = vpop.permute.xlu0 %3181
        %3183 = vrot.lane.b32.xlu0 %v2997, 24
        %v3184 = vpop.permute.xlu0 %3183
        %3185 = vrot.lane.b32.xlu0 %v3026, 24
        %v3186 = vpop.permute.xlu0 %3185
        %3187 = vrot.lane.b32.xlu0 %v3055, 24
        %v3188 = vpop.permute.xlu0 %3187
        %3189 = vrot.lane.b32.xlu0 %v3084, 24
        %v3190 = vpop.permute.xlu0 %3189
        %3191 = vrot.lane.b32.xlu0 %v3113, 24
        %v3192 = vpop.permute.xlu0 %3191
        %3193 = vrot.lane.b32.xlu0 %v3142, 24
        %v3194 = vpop.permute.xlu0 %3193
        %3195 = vrot.lane.b32.xlu0 %v3171, 24
        %v3196 = vpop.permute.xlu0 %3195
        %vm3205 = vcmask 261312
        %3206 = vst.msk [vmem:[#allocation2] sm:$0xff] %vm3205, %v3182
        %3207 = vst.msk [vmem:[#allocation2 + $0x8] sm:$0xff] %vm3205, %v3184
        %3208 = vst.msk [vmem:[#allocation2 + $0x10] sm:$0xff] %vm3205, %v3186
        %3209 = vst.msk [vmem:[#allocation2 + $0x18] sm:$0xff] %vm3205, %v3188
        %3210 = vst.msk [vmem:[#allocation2 + $0x20] sm:$0xff] %vm3205, %v3190
        %3211 = vst.msk [vmem:[#allocation2 + $0x28] sm:$0xff] %vm3205, %v3192
        %3212 = vst.msk [vmem:[#allocation2 + $0x30] sm:$0xff] %vm3205, %v3194
        %3213 = vst.msk [vmem:[#allocation2 + $0x38] sm:$0xff] %vm3205, %v3196
        %v3214 = vld [vmem:[#allocation2] sm:$0xff]
        %v3215 = vld [vmem:[#allocation2 + $0x8] sm:$0xff]
        %v3216 = vld [vmem:[#allocation2 + $0x10] sm:$0xff]
        %v3217 = vld [vmem:[#allocation2 + $0x18] sm:$0xff]
        %v3218 = vld [vmem:[#allocation2 + $0x20] sm:$0xff]
        %v3219 = vld [vmem:[#allocation2 + $0x28] sm:$0xff]
        %v3220 = vld [vmem:[#allocation2 + $0x30] sm:$0xff]
        %v3221 = vld [vmem:[#allocation2 + $0x38] sm:$0xff]
        %v3222 = vld [vmem:[%s6] sm:$0xff]
        %v3223 = vld [vmem:[%s6 + $0x8] sm:$0xff]
        %v3224 = vld [vmem:[%s6 + $0x10] sm:$0xff]
        %v3225 = vld [vmem:[%s6 + $0x18] sm:$0xff]
        %v3226 = vld [vmem:[%s7] sm:$0x1]
        %v3228 = vperm.slane %v3226, 0
        %v3231 = vsel %vm582, %v3214, 0
        %v3234 = vsel %vm582, %v3215, 0
        %v3237 = vsel %vm582, %v3216, 0
        %v3240 = vsel %vm582, %v3217, 0
        %v3243 = vsel %vm582, %v3218, 0
        %v3246 = vsel %vm582, %v3219, 0
        %v3249 = vsel %vm582, %v3220, 0
        %v3252 = vsel %vm582, %v3221, 0
        %3254 = vmatpush.msra.mxu0 0.0
        %3255 = vmatpush.msra.mxu0 0.0
        %3256 = vmatpush.msra.mxu0 0.0
        %3257 = vmatpush.msra.mxu0 0.0
        %3258 = vmatpush.msra.mxu0 0.0
        %3259 = vmatpush.msra.mxu0 0.0
        %3260 = vmatpush.msra.mxu0 0.0
        %3261 = vmatpush.msra.mxu0 0.0
        %3262 = vmatpush.msra.mxu0 0.0
        %3263 = vmatpush.msra.mxu0 0.0
        %3264 = vmatpush.msra.mxu0 0.0
        %3265 = vmatpush.msra.mxu0 0.0
        %3266 = vmatpush.msra.mxu0 %v3225
        %3267 = vmatpush.msra.mxu0 %v3224
        %3268 = vmatpush.msra.mxu0 %v3223
        %3269 = vmatpush.msra.mxu0 %v3222
        %3270 = vmatmul.f32.gmra.mxu0 %v3231
        %v3271 = vpop.f32.mrf.mxu0
        %v3272 = vadd.f32 %v3228, %v3271
        %3273 = vmatmul.f32.gmra.mxu0 %v3234
        %v3274 = vpop.f32.mrf.mxu0
        %v3275 = vadd.f32 %v3228, %v3274
        %3276 = vmatmul.f32.gmra.mxu0 %v3237
        %v3277 = vpop.f32.mrf.mxu0
        %v3278 = vadd.f32 %v3228, %v3277
        %3279 = vmatmul.f32.gmra.mxu0 %v3240
        %v3280 = vpop.f32.mrf.mxu0
        %v3281 = vadd.f32 %v3228, %v3280
        %3282 = vmatmul.f32.gmra.mxu0 %v3243
        %v3283 = vpop.f32.mrf.mxu0
        %v3284 = vadd.f32 %v3228, %v3283
        %3285 = vmatmul.f32.gmra.mxu0 %v3246
        %v3286 = vpop.f32.mrf.mxu0
        %v3287 = vadd.f32 %v3228, %v3286
        %3288 = vmatmul.f32.gmra.mxu0 %v3249
        %v3289 = vpop.f32.mrf.mxu0
        %v3290 = vadd.f32 %v3228, %v3289
        %3291 = vmatmul.f32.gmra.mxu0 %v3252
        %v3292 = vpop.f32.mrf.mxu0
        %v3293 = vadd.f32 %v3228, %v3292
        %3294 = vdwg.mxu0
        %v3295 = vadd.f32 %v550, %v3272
        %v3296 = vadd.f32 %v551, %v3275
        %v3297 = vadd.f32 %v552, %v3278
        %v3298 = vadd.f32 %v553, %v3281
        %v3299 = vadd.f32 %v554, %v3284
        %v3300 = vadd.f32 %v555, %v3287
        %v3301 = vadd.f32 %v556, %v3290
        %v3302 = vadd.f32 %v557, %v3293
        %v3303 = vld [vmem:[%s10] sm:$0x1]
        %v3304 = vld [vmem:[%s11] sm:$0x1]
        %v3305 = vsel %vm582, %v3295, 0.0
        %3306 = vadd.xlane.f32.xlu0 %v3305
        %v3307 = vpop.xlane.xlu0 %3306
        %v3308 = vsel %vm582, %v3296, 0.0
        %3309 = vadd.xlane.f32.xlu0 %v3308
        %v3310 = vpop.xlane.xlu0 %3309
        %v3311 = vsel %vm582, %v3297, 0.0
        %3312 = vadd.xlane.f32.xlu0 %v3311
        %v3313 = vpop.xlane.xlu0 %3312
        %v3314 = vsel %vm582, %v3298, 0.0
        %3315 = vadd.xlane.f32.xlu0 %v3314
        %v3316 = vpop.xlane.xlu0 %3315
        %v3317 = vsel %vm582, %v3299, 0.0
        %3318 = vadd.xlane.f32.xlu0 %v3317
        %v3319 = vpop.xlane.xlu0 %3318
        %v3320 = vsel %vm582, %v3300, 0.0
        %3321 = vadd.xlane.f32.xlu0 %v3320
        %v3322 = vpop.xlane.xlu0 %3321
        %v3323 = vsel %vm582, %v3301, 0.0
        %3324 = vadd.xlane.f32.xlu0 %v3323
        %v3325 = vpop.xlane.xlu0 %3324
        %v3326 = vsel %vm582, %v3302, 0.0
        %3327 = vadd.xlane.f32.xlu0 %v3326
        %v3328 = vpop.xlane.xlu0 %3327
        %v3329 = vrcp.pop 32.0
        %v3330 = vmul.f32 32.0, %v3329
        %v3331 = vsub.f32 1.0, %v3330
        %v3332 = vmul.f32 %v3329, %v3331
        %v3333 = vadd.f32 %v3329, %v3332
        %vm3334 = vweird.f32 %v3329
        %v3335 = vsel %vm3334, %v3329, %v3333
        %v3336 = vmul.f32 %v3307, %v3335
        %v3337 = vmul.f32 %v3310, %v3335
        %v3338 = vmul.f32 %v3313, %v3335
        %v3339 = vmul.f32 %v3316, %v3335
        %v3340 = vmul.f32 %v3319, %v3335
        %v3341 = vmul.f32 %v3322, %v3335
        %v3342 = vmul.f32 %v3325, %v3335
        %v3343 = vmul.f32 %v3328, %v3335
        %v3344 = vsub.f32 %v3295, %v3336
        %v3345 = vsub.f32 %v3296, %v3337
        %v3346 = vsub.f32 %v3297, %v3338
        %v3347 = vsub.f32 %v3298, %v3339
        %v3348 = vsub.f32 %v3299, %v3340
        %v3349 = vsub.f32 %v3300, %v3341
        %v3350 = vsub.f32 %v3301, %v3342
        %v3351 = vsub.f32 %v3302, %v3343
        %v3352 = vmul.f32 %v3344, %v3344
        %v3353 = vmul.f32 %v3345, %v3345
        %v3354 = vmul.f32 %v3346, %v3346
        %v3355 = vmul.f32 %v3347, %v3347
        %v3356 = vmul.f32 %v3348, %v3348
        %v3357 = vmul.f32 %v3349, %v3349
        %v3358 = vmul.f32 %v3350, %v3350
        %v3359 = vmul.f32 %v3351, %v3351
        %v3360 = vsel %vm582, %v3352, 0.0
        %3361 = vadd.xlane.f32.xlu0 %v3360
        %v3362 = vpop.xlane.xlu0 %3361
        %v3363 = vsel %vm582, %v3353, 0.0
        %3364 = vadd.xlane.f32.xlu0 %v3363
        %v3365 = vpop.xlane.xlu0 %3364
        %v3366 = vsel %vm582, %v3354, 0.0
        %3367 = vadd.xlane.f32.xlu0 %v3366
        %v3368 = vpop.xlane.xlu0 %3367
        %v3369 = vsel %vm582, %v3355, 0.0
        %3370 = vadd.xlane.f32.xlu0 %v3369
        %v3371 = vpop.xlane.xlu0 %3370
        %v3372 = vsel %vm582, %v3356, 0.0
        %3373 = vadd.xlane.f32.xlu0 %v3372
        %v3374 = vpop.xlane.xlu0 %3373
        %v3375 = vsel %vm582, %v3357, 0.0
        %3376 = vadd.xlane.f32.xlu0 %v3375
        %v3377 = vpop.xlane.xlu0 %3376
        %v3378 = vsel %vm582, %v3358, 0.0
        %3379 = vadd.xlane.f32.xlu0 %v3378
        %v3380 = vpop.xlane.xlu0 %3379
        %v3381 = vsel %vm582, %v3359, 0.0
        %3382 = vadd.xlane.f32.xlu0 %v3381
        %v3383 = vpop.xlane.xlu0 %3382
        %v3384 = vmul.f32 %v3362, %v3335
        %v3385 = vmul.f32 %v3365, %v3335
        %v3386 = vmul.f32 %v3368, %v3335
        %v3387 = vmul.f32 %v3371, %v3335
        %v3388 = vmul.f32 %v3374, %v3335
        %v3389 = vmul.f32 %v3377, %v3335
        %v3390 = vmul.f32 %v3380, %v3335
        %v3391 = vmul.f32 %v3383, %v3335
        %v3392 = vadd.f32 %v3384, 1e-05
        %v3393 = vadd.f32 %v3385, 1e-05
        %v3394 = vadd.f32 %v3386, 1e-05
        %v3395 = vadd.f32 %v3387, 1e-05
        %v3396 = vadd.f32 %v3388, 1e-05
        %v3397 = vadd.f32 %v3389, 1e-05
        %v3398 = vadd.f32 %v3390, 1e-05
        %v3399 = vadd.f32 %v3391, 1e-05
        %v3400 = vrsqrt.pop %v3392
        %v3401 = vmul.f32 %v3400, %v3392
        %v3402 = vmul.f32 %v3401, %v3400
        %v3403 = vmul.f32 0.5, %v3402
        %v3404 = vsub.f32 1.5, %v3403
        %v3405 = vmul.f32 %v3400, %v3404
        %vm3406 = vweird.f32 %v3392
        %vm3407 = vweird.f32 %v3400
        %vm3408 = vmor %vm3406, %vm3407
        %v3409 = vsel %vm3408, %v3400, %v3405
        %v3410 = vrsqrt.pop %v3393
        %v3411 = vmul.f32 %v3410, %v3393
        %v3412 = vmul.f32 %v3411, %v3410
        %v3413 = vmul.f32 0.5, %v3412
        %v3414 = vsub.f32 1.5, %v3413
        %v3415 = vmul.f32 %v3410, %v3414
        %vm3416 = vweird.f32 %v3393
        %vm3417 = vweird.f32 %v3410
        %vm3418 = vmor %vm3416, %vm3417
        %v3419 = vsel %vm3418, %v3410, %v3415
        %v3420 = vrsqrt.pop %v3394
        %v3421 = vmul.f32 %v3420, %v3394
        %v3422 = vmul.f32 %v3421, %v3420
        %v3423 = vmul.f32 0.5, %v3422
        %v3424 = vsub.f32 1.5, %v3423
        %v3425 = vmul.f32 %v3420, %v3424
        %vm3426 = vweird.f32 %v3394
        %vm3427 = vweird.f32 %v3420
        %vm3428 = vmor %vm3426, %vm3427
        %v3429 = vsel %vm3428, %v3420, %v3425
        %v3430 = vrsqrt.pop %v3395
        %v3431 = vmul.f32 %v3430, %v3395
        %v3432 = vmul.f32 %v3431, %v3430
        %v3433 = vmul.f32 0.5, %v3432
        %v3434 = vsub.f32 1.5, %v3433
        %v3435 = vmul.f32 %v3430, %v3434
        %vm3436 = vweird.f32 %v3395
        %vm3437 = vweird.f32 %v3430
        %vm3438 = vmor %vm3436, %vm3437
        %v3439 = vsel %vm3438, %v3430, %v3435
        %v3440 = vrsqrt.pop %v3396
        %v3441 = vmul.f32 %v3440, %v3396
        %v3442 = vmul.f32 %v3441, %v3440
        %v3443 = vmul.f32 0.5, %v3442
        %v3444 = vsub.f32 1.5, %v3443
        %v3445 = vmul.f32 %v3440, %v3444
        %vm3446 = vweird.f32 %v3396
        %vm3447 = vweird.f32 %v3440
        %vm3448 = vmor %vm3446, %vm3447
        %v3449 = vsel %vm3448, %v3440, %v3445
        %v3450 = vrsqrt.pop %v3397
        %v3451 = vmul.f32 %v3450, %v3397
        %v3452 = vmul.f32 %v3451, %v3450
        %v3453 = vmul.f32 0.5, %v3452
        %v3454 = vsub.f32 1.5, %v3453
        %v3455 = vmul.f32 %v3450, %v3454
        %vm3456 = vweird.f32 %v3397
        %vm3457 = vweird.f32 %v3450
        %vm3458 = vmor %vm3456, %vm3457
        %v3459 = vsel %vm3458, %v3450, %v3455
        %v3460 = vrsqrt.pop %v3398
        %v3461 = vmul.f32 %v3460, %v3398
        %v3462 = vmul.f32 %v3461, %v3460
        %v3463 = vmul.f32 0.5, %v3462
        %v3464 = vsub.f32 1.5, %v3463
        %v3465 = vmul.f32 %v3460, %v3464
        %vm3466 = vweird.f32 %v3398
        %vm3467 = vweird.f32 %v3460
        %vm3468 = vmor %vm3466, %vm3467
        %v3469 = vsel %vm3468, %v3460, %v3465
        %v3470 = vrsqrt.pop %v3399
        %v3471 = vmul.f32 %v3470, %v3399
        %v3472 = vmul.f32 %v3471, %v3470
        %v3473 = vmul.f32 0.5, %v3472
        %v3474 = vsub.f32 1.5, %v3473
        %v3475 = vmul.f32 %v3470, %v3474
        %vm3476 = vweird.f32 %v3399
        %vm3477 = vweird.f32 %v3470
        %vm3478 = vmor %vm3476, %vm3477
        %v3479 = vsel %vm3478, %v3470, %v3475
        %v3480 = vmul.f32 %v3344, %v3409
        %v3481 = vmul.f32 %v3345, %v3419
        %v3482 = vmul.f32 %v3346, %v3429
        %v3483 = vmul.f32 %v3347, %v3439
        %v3484 = vmul.f32 %v3348, %v3449
        %v3485 = vmul.f32 %v3349, %v3459
        %v3486 = vmul.f32 %v3350, %v3469
        %v3487 = vmul.f32 %v3351, %v3479
        %v3489 = vperm.slane %v3303, 0
        %v3491 = vmul.f32 %v3480, %v3489
        %v3492 = vmul.f32 %v3481, %v3489
        %v3493 = vmul.f32 %v3482, %v3489
        %v3494 = vmul.f32 %v3483, %v3489
        %v3495 = vmul.f32 %v3484, %v3489
        %v3496 = vmul.f32 %v3485, %v3489
        %v3497 = vmul.f32 %v3486, %v3489
        %v3498 = vmul.f32 %v3487, %v3489
        %v3500 = vperm.slane %v3304, 0
        %v3502 = vadd.f32 %v3491, %v3500
        %v3503 = vadd.f32 %v3492, %v3500
        %v3504 = vadd.f32 %v3493, %v3500
        %v3505 = vadd.f32 %v3494, %v3500
        %v3506 = vadd.f32 %v3495, %v3500
        %v3507 = vadd.f32 %v3496, %v3500
        %v3508 = vadd.f32 %v3497, %v3500
        %v3509 = vadd.f32 %v3498, %v3500
        %v3510 = vld [vmem:[#allocation8] sm:$0xff]
        %v3511 = vld [vmem:[#allocation8 + $0x8] sm:$0xff]
        %v3512 = vld [vmem:[#allocation8 + $0x10] sm:$0xff]
        %v3513 = vld [vmem:[#allocation8 + $0x18] sm:$0xff]
        %v3515 = vsel %vm582, %v3502, 0
        %v3518 = vsel %vm582, %v3503, 0
        %v3521 = vsel %vm582, %v3504, 0
        %v3524 = vsel %vm582, %v3505, 0
        %v3527 = vsel %vm582, %v3506, 0
        %v3530 = vsel %vm582, %v3507, 0
        %v3533 = vsel %vm582, %v3508, 0
        %v3536 = vsel %vm582, %v3509, 0
        %3538 = vmatpush.msra.mxu0 0.0
        %3539 = vmatpush.msra.mxu0 0.0
        %3540 = vmatpush.msra.mxu0 0.0
        %3541 = vmatpush.msra.mxu0 0.0
        %3542 = vmatpush.msra.mxu0 0.0
        %3543 = vmatpush.msra.mxu0 0.0
        %3544 = vmatpush.msra.mxu0 0.0
        %3545 = vmatpush.msra.mxu0 0.0
        %3546 = vmatpush.msra.mxu0 0.0
        %3547 = vmatpush.msra.mxu0 0.0
        %3548 = vmatpush.msra.mxu0 0.0
        %3549 = vmatpush.msra.mxu0 0.0
        %3550 = vmatpush.msra.mxu0 %v3513
        %3551 = vmatpush.msra.mxu0 %v3512
        %3552 = vmatpush.msra.mxu0 %v3511
        %3553 = vmatpush.msra.mxu0 %v3510
        %3554 = vmatmul.f32.gmra.mxu0 %v3515
        %v3555 = vpop.f32.mrf.mxu0
        %v3556 = vadd.f32 0.0, %v3555
        %3557 = vmatmul.f32.gmra.mxu0 %v3518
        %v3558 = vpop.f32.mrf.mxu0
        %v3559 = vadd.f32 0.0, %v3558
        %3560 = vmatmul.f32.gmra.mxu0 %v3521
        %v3561 = vpop.f32.mrf.mxu0
        %v3562 = vadd.f32 0.0, %v3561
        %3563 = vmatmul.f32.gmra.mxu0 %v3524
        %v3564 = vpop.f32.mrf.mxu0
        %v3565 = vadd.f32 0.0, %v3564
        %3566 = vmatmul.f32.gmra.mxu0 %v3527
        %v3567 = vpop.f32.mrf.mxu0
        %v3568 = vadd.f32 0.0, %v3567
        %3569 = vmatmul.f32.gmra.mxu0 %v3530
        %v3570 = vpop.f32.mrf.mxu0
        %v3571 = vadd.f32 0.0, %v3570
        %3572 = vmatmul.f32.gmra.mxu0 %v3533
        %v3573 = vpop.f32.mrf.mxu0
        %v3574 = vadd.f32 0.0, %v3573
        %3575 = vmatmul.f32.gmra.mxu0 %v3536
        %v3576 = vpop.f32.mrf.mxu0
        %v3577 = vadd.f32 0.0, %v3576
        %3578 = vdwg.mxu0
        %v3579 = vmul.f32 %v3556, 0.5
        %v3580 = vmul.f32 %v3559, 0.5
        %v3581 = vmul.f32 %v3562, 0.5
        %v3582 = vmul.f32 %v3565, 0.5
        %v3583 = vmul.f32 %v3568, 0.5
        %v3584 = vmul.f32 %v3571, 0.5
        %v3585 = vmul.f32 %v3574, 0.5
        %v3586 = vmul.f32 %v3577, 0.5
        %v3587 = vmul.f32 %v3556, 0.70710677
        %v3588 = vmul.f32 %v3559, 0.70710677
        %v3589 = vmul.f32 %v3562, 0.70710677
        %v3590 = vmul.f32 %v3565, 0.70710677
        %v3591 = vmul.f32 %v3568, 0.70710677
        %v3592 = vmul.f32 %v3571, 0.70710677
        %v3593 = vmul.f32 %v3574, 0.70710677
        %v3594 = vmul.f32 %v3577, 0.70710677
        %v3595 = vmul.f32 %v3587, %v3587
        %v3596 = vmin.f32 16.0, %v3595
        %v3597 = vmul.f32 %v3596, 2.1237322e-06
        %v3598 = vadd.f32 %v3597, 0.00028619796
        %v3599 = vmul.f32 %v3596, %v3598
        %v3600 = vadd.f32 %v3599, 0.0036580483
        %v3601 = vmul.f32 %v3596, %v3600
        %v3602 = vadd.f32 %v3601, 0.05243302
        %v3603 = vmul.f32 %v3596, %v3602
        %v3604 = vadd.f32 %v3603, 0.18741608
        %v3605 = vmul.f32 %v3596, %v3604
        %v3606 = vadd.f32 %v3605, 1.1283791
        %v3607 = vmul.f32 %v3587, %v3606
        %v3608 = vmul.f32 %v3596, 3.8918573e-05
        %v3609 = vadd.f32 %v3608, 0.001143296
        %v3610 = vmul.f32 %v3596, %v3609
        %v3611 = vadd.f32 %v3610, 0.014752088
        %v3612 = vmul.f32 %v3596, %v3611
        %v3613 = vadd.f32 %v3612, 0.112945676
        %v3614 = vmul.f32 %v3596, %v3613
        %v3615 = vadd.f32 %v3614, 0.4994258
        %v3616 = vmul.f32 %v3596, %v3615
        %v3617 = vadd.f32 %v3616, 1.0
        %v3618 = vrcp.pop %v3617
        %v3619 = vmul.f32 %v3617, %v3618
        %v3620 = vsub.f32 1.0, %v3619
        %v3621 = vmul.f32 %v3618, %v3620
        %v3622 = vadd.f32 %v3618, %v3621
        %vm3623 = vweird.f32 %v3617
        %vm3624 = vweird.f32 %v3618
        %vm3625 = vmor %vm3623, %vm3624
        %v3626 = vsel %vm3625, %v3618, %v3622
        %v3627 = vand.u32 2147483647, %v3617
        %vm3628 = vcmp.eq.f32.partialorder %v3627, 8.507059e+37
        %v3629 = vand.u32 %v3617, 2147483648
        %v3630 = vor.u32 1.1754944e-38, %v3629
        %v3631 = vsel %vm3628, %v3630, %v3626
        %v3632 = vmul.f32 %v3607, %v3631
        %v3633 = vmin.f32 %v3632, 1.0
        %v3634 = vmax.f32 %v3633, -1.0
        %v3635 = vmul.f32 %v3588, %v3588
        %v3636 = vmin.f32 16.0, %v3635
        %v3637 = vmul.f32 %v3636, 2.1237322e-06
        %v3638 = vadd.f32 %v3637, 0.00028619796
        %v3639 = vmul.f32 %v3636, %v3638
        %v3640 = vadd.f32 %v3639, 0.0036580483
        %v3641 = vmul.f32 %v3636, %v3640
        %v3642 = vadd.f32 %v3641, 0.05243302
        %v3643 = vmul.f32 %v3636, %v3642
        %v3644 = vadd.f32 %v3643, 0.18741608
        %v3645 = vmul.f32 %v3636, %v3644
        %v3646 = vadd.f32 %v3645, 1.1283791
        %v3647 = vmul.f32 %v3588, %v3646
        %v3648 = vmul.f32 %v3636, 3.8918573e-05
        %v3649 = vadd.f32 %v3648, 0.001143296
        %v3650 = vmul.f32 %v3636, %v3649
        %v3651 = vadd.f32 %v3650, 0.014752088
        %v3652 = vmul.f32 %v3636, %v3651
        %v3653 = vadd.f32 %v3652, 0.112945676
        %v3654 = vmul.f32 %v3636, %v3653
        %v3655 = vadd.f32 %v3654, 0.4994258
        %v3656 = vmul.f32 %v3636, %v3655
        %v3657 = vadd.f32 %v3656, 1.0
        %v3658 = vrcp.pop %v3657
        %v3659 = vmul.f32 %v3657, %v3658
        %v3660 = vsub.f32 1.0, %v3659
        %v3661 = vmul.f32 %v3658, %v3660
        %v3662 = vadd.f32 %v3658, %v3661
        %vm3663 = vweird.f32 %v3657
        %vm3664 = vweird.f32 %v3658
        %vm3665 = vmor %vm3663, %vm3664
        %v3666 = vsel %vm3665, %v3658, %v3662
        %v3667 = vand.u32 2147483647, %v3657
        %vm3668 = vcmp.eq.f32.partialorder %v3667, 8.507059e+37
        %v3669 = vand.u32 %v3657, 2147483648
        %v3670 = vor.u32 1.1754944e-38, %v3669
        %v3671 = vsel %vm3668, %v3670, %v3666
        %v3672 = vmul.f32 %v3647, %v3671
        %v3673 = vmin.f32 %v3672, 1.0
        %v3674 = vmax.f32 %v3673, -1.0
        %v3675 = vmul.f32 %v3589, %v3589
        %v3676 = vmin.f32 16.0, %v3675
        %v3677 = vmul.f32 %v3676, 2.1237322e-06
        %v3678 = vadd.f32 %v3677, 0.00028619796
        %v3679 = vmul.f32 %v3676, %v3678
        %v3680 = vadd.f32 %v3679, 0.0036580483
        %v3681 = vmul.f32 %v3676, %v3680
        %v3682 = vadd.f32 %v3681, 0.05243302
        %v3683 = vmul.f32 %v3676, %v3682
        %v3684 = vadd.f32 %v3683, 0.18741608
        %v3685 = vmul.f32 %v3676, %v3684
        %v3686 = vadd.f32 %v3685, 1.1283791
        %v3687 = vmul.f32 %v3589, %v3686
        %v3688 = vmul.f32 %v3676, 3.8918573e-05
        %v3689 = vadd.f32 %v3688, 0.001143296
        %v3690 = vmul.f32 %v3676, %v3689
        %v3691 = vadd.f32 %v3690, 0.014752088
        %v3692 = vmul.f32 %v3676, %v3691
        %v3693 = vadd.f32 %v3692, 0.112945676
        %v3694 = vmul.f32 %v3676, %v3693
        %v3695 = vadd.f32 %v3694, 0.4994258
        %v3696 = vmul.f32 %v3676, %v3695
        %v3697 = vadd.f32 %v3696, 1.0
        %v3698 = vrcp.pop %v3697
        %v3699 = vmul.f32 %v3697, %v3698
        %v3700 = vsub.f32 1.0, %v3699
        %v3701 = vmul.f32 %v3698, %v3700
        %v3702 = vadd.f32 %v3698, %v3701
        %vm3703 = vweird.f32 %v3697
        %vm3704 = vweird.f32 %v3698
        %vm3705 = vmor %vm3703, %vm3704
        %v3706 = vsel %vm3705, %v3698, %v3702
        %v3707 = vand.u32 2147483647, %v3697
        %vm3708 = vcmp.eq.f32.partialorder %v3707, 8.507059e+37
        %v3709 = vand.u32 %v3697, 2147483648
        %v3710 = vor.u32 1.1754944e-38, %v3709
        %v3711 = vsel %vm3708, %v3710, %v3706
        %v3712 = vmul.f32 %v3687, %v3711
        %v3713 = vmin.f32 %v3712, 1.0
        %v3714 = vmax.f32 %v3713, -1.0
        %v3715 = vmul.f32 %v3590, %v3590
        %v3716 = vmin.f32 16.0, %v3715
        %v3717 = vmul.f32 %v3716, 2.1237322e-06
        %v3718 = vadd.f32 %v3717, 0.00028619796
        %v3719 = vmul.f32 %v3716, %v3718
        %v3720 = vadd.f32 %v3719, 0.0036580483
        %v3721 = vmul.f32 %v3716, %v3720
        %v3722 = vadd.f32 %v3721, 0.05243302
        %v3723 = vmul.f32 %v3716, %v3722
        %v3724 = vadd.f32 %v3723, 0.18741608
        %v3725 = vmul.f32 %v3716, %v3724
        %v3726 = vadd.f32 %v3725, 1.1283791
        %v3727 = vmul.f32 %v3590, %v3726
        %v3728 = vmul.f32 %v3716, 3.8918573e-05
        %v3729 = vadd.f32 %v3728, 0.001143296
        %v3730 = vmul.f32 %v3716, %v3729
        %v3731 = vadd.f32 %v3730, 0.014752088
        %v3732 = vmul.f32 %v3716, %v3731
        %v3733 = vadd.f32 %v3732, 0.112945676
        %v3734 = vmul.f32 %v3716, %v3733
        %v3735 = vadd.f32 %v3734, 0.4994258
        %v3736 = vmul.f32 %v3716, %v3735
        %v3737 = vadd.f32 %v3736, 1.0
        %v3738 = vrcp.pop %v3737
        %v3739 = vmul.f32 %v3737, %v3738
        %v3740 = vsub.f32 1.0, %v3739
        %v3741 = vmul.f32 %v3738, %v3740
        %v3742 = vadd.f32 %v3738, %v3741
        %vm3743 = vweird.f32 %v3737
        %vm3744 = vweird.f32 %v3738
        %vm3745 = vmor %vm3743, %vm3744
        %v3746 = vsel %vm3745, %v3738, %v3742
        %v3747 = vand.u32 2147483647, %v3737
        %vm3748 = vcmp.eq.f32.partialorder %v3747, 8.507059e+37
        %v3749 = vand.u32 %v3737, 2147483648
        %v3750 = vor.u32 1.1754944e-38, %v3749
        %v3751 = vsel %vm3748, %v3750, %v3746
        %v3752 = vmul.f32 %v3727, %v3751
        %v3753 = vmin.f32 %v3752, 1.0
        %v3754 = vmax.f32 %v3753, -1.0
        %v3755 = vmul.f32 %v3591, %v3591
        %v3756 = vmin.f32 16.0, %v3755
        %v3757 = vmul.f32 %v3756, 2.1237322e-06
        %v3758 = vadd.f32 %v3757, 0.00028619796
        %v3759 = vmul.f32 %v3756, %v3758
        %v3760 = vadd.f32 %v3759, 0.0036580483
        %v3761 = vmul.f32 %v3756, %v3760
        %v3762 = vadd.f32 %v3761, 0.05243302
        %v3763 = vmul.f32 %v3756, %v3762
        %v3764 = vadd.f32 %v3763, 0.18741608
        %v3765 = vmul.f32 %v3756, %v3764
        %v3766 = vadd.f32 %v3765, 1.1283791
        %v3767 = vmul.f32 %v3591, %v3766
        %v3768 = vmul.f32 %v3756, 3.8918573e-05
        %v3769 = vadd.f32 %v3768, 0.001143296
        %v3770 = vmul.f32 %v3756, %v3769
        %v3771 = vadd.f32 %v3770, 0.014752088
        %v3772 = vmul.f32 %v3756, %v3771
        %v3773 = vadd.f32 %v3772, 0.112945676
        %v3774 = vmul.f32 %v3756, %v3773
        %v3775 = vadd.f32 %v3774, 0.4994258
        %v3776 = vmul.f32 %v3756, %v3775
        %v3777 = vadd.f32 %v3776, 1.0
        %v3778 = vrcp.pop %v3777
        %v3779 = vmul.f32 %v3777, %v3778
        %v3780 = vsub.f32 1.0, %v3779
        %v3781 = vmul.f32 %v3778, %v3780
        %v3782 = vadd.f32 %v3778, %v3781
        %vm3783 = vweird.f32 %v3777
        %vm3784 = vweird.f32 %v3778
        %vm3785 = vmor %vm3783, %vm3784
        %v3786 = vsel %vm3785, %v3778, %v3782
        %v3787 = vand.u32 2147483647, %v3777
        %vm3788 = vcmp.eq.f32.partialorder %v3787, 8.507059e+37
        %v3789 = vand.u32 %v3777, 2147483648
        %v3790 = vor.u32 1.1754944e-38, %v3789
        %v3791 = vsel %vm3788, %v3790, %v3786
        %v3792 = vmul.f32 %v3767, %v3791
        %v3793 = vmin.f32 %v3792, 1.0
        %v3794 = vmax.f32 %v3793, -1.0
        %v3795 = vmul.f32 %v3592, %v3592
        %v3796 = vmin.f32 16.0, %v3795
        %v3797 = vmul.f32 %v3796, 2.1237322e-06
        %v3798 = vadd.f32 %v3797, 0.00028619796
        %v3799 = vmul.f32 %v3796, %v3798
        %v3800 = vadd.f32 %v3799, 0.0036580483
        %v3801 = vmul.f32 %v3796, %v3800
        %v3802 = vadd.f32 %v3801, 0.05243302
        %v3803 = vmul.f32 %v3796, %v3802
        %v3804 = vadd.f32 %v3803, 0.18741608
        %v3805 = vmul.f32 %v3796, %v3804
        %v3806 = vadd.f32 %v3805, 1.1283791
        %v3807 = vmul.f32 %v3592, %v3806
        %v3808 = vmul.f32 %v3796, 3.8918573e-05
        %v3809 = vadd.f32 %v3808, 0.001143296
        %v3810 = vmul.f32 %v3796, %v3809
        %v3811 = vadd.f32 %v3810, 0.014752088
        %v3812 = vmul.f32 %v3796, %v3811
        %v3813 = vadd.f32 %v3812, 0.112945676
        %v3814 = vmul.f32 %v3796, %v3813
        %v3815 = vadd.f32 %v3814, 0.4994258
        %v3816 = vmul.f32 %v3796, %v3815
        %v3817 = vadd.f32 %v3816, 1.0
        %v3818 = vrcp.pop %v3817
        %v3819 = vmul.f32 %v3817, %v3818
        %v3820 = vsub.f32 1.0, %v3819
        %v3821 = vmul.f32 %v3818, %v3820
        %v3822 = vadd.f32 %v3818, %v3821
        %vm3823 = vweird.f32 %v3817
        %vm3824 = vweird.f32 %v3818
        %vm3825 = vmor %vm3823, %vm3824
        %v3826 = vsel %vm3825, %v3818, %v3822
        %v3827 = vand.u32 2147483647, %v3817
        %vm3828 = vcmp.eq.f32.partialorder %v3827, 8.507059e+37
        %v3829 = vand.u32 %v3817, 2147483648
        %v3830 = vor.u32 1.1754944e-38, %v3829
        %v3831 = vsel %vm3828, %v3830, %v3826
        %v3832 = vmul.f32 %v3807, %v3831
        %v3833 = vmin.f32 %v3832, 1.0
        %v3834 = vmax.f32 %v3833, -1.0
        %v3835 = vmul.f32 %v3593, %v3593
        %v3836 = vmin.f32 16.0, %v3835
        %v3837 = vmul.f32 %v3836, 2.1237322e-06
        %v3838 = vadd.f32 %v3837, 0.00028619796
        %v3839 = vmul.f32 %v3836, %v3838
        %v3840 = vadd.f32 %v3839, 0.0036580483
        %v3841 = vmul.f32 %v3836, %v3840
        %v3842 = vadd.f32 %v3841, 0.05243302
        %v3843 = vmul.f32 %v3836, %v3842
        %v3844 = vadd.f32 %v3843, 0.18741608
        %v3845 = vmul.f32 %v3836, %v3844
        %v3846 = vadd.f32 %v3845, 1.1283791
        %v3847 = vmul.f32 %v3593, %v3846
        %v3848 = vmul.f32 %v3836, 3.8918573e-05
        %v3849 = vadd.f32 %v3848, 0.001143296
        %v3850 = vmul.f32 %v3836, %v3849
        %v3851 = vadd.f32 %v3850, 0.014752088
        %v3852 = vmul.f32 %v3836, %v3851
        %v3853 = vadd.f32 %v3852, 0.112945676
        %v3854 = vmul.f32 %v3836, %v3853
        %v3855 = vadd.f32 %v3854, 0.4994258
        %v3856 = vmul.f32 %v3836, %v3855
        %v3857 = vadd.f32 %v3856, 1.0
        %v3858 = vrcp.pop %v3857
        %v3859 = vmul.f32 %v3857, %v3858
        %v3860 = vsub.f32 1.0, %v3859
        %v3861 = vmul.f32 %v3858, %v3860
        %v3862 = vadd.f32 %v3858, %v3861
        %vm3863 = vweird.f32 %v3857
        %vm3864 = vweird.f32 %v3858
        %vm3865 = vmor %vm3863, %vm3864
        %v3866 = vsel %vm3865, %v3858, %v3862
        %v3867 = vand.u32 2147483647, %v3857
        %vm3868 = vcmp.eq.f32.partialorder %v3867, 8.507059e+37
        %v3869 = vand.u32 %v3857, 2147483648
        %v3870 = vor.u32 1.1754944e-38, %v3869
        %v3871 = vsel %vm3868, %v3870, %v3866
        %v3872 = vmul.f32 %v3847, %v3871
        %v3873 = vmin.f32 %v3872, 1.0
        %v3874 = vmax.f32 %v3873, -1.0
        %v3875 = vmul.f32 %v3594, %v3594
        %v3876 = vmin.f32 16.0, %v3875
        %v3877 = vmul.f32 %v3876, 2.1237322e-06
        %v3878 = vadd.f32 %v3877, 0.00028619796
        %v3879 = vmul.f32 %v3876, %v3878
        %v3880 = vadd.f32 %v3879, 0.0036580483
        %v3881 = vmul.f32 %v3876, %v3880
        %v3882 = vadd.f32 %v3881, 0.05243302
        %v3883 = vmul.f32 %v3876, %v3882
        %v3884 = vadd.f32 %v3883, 0.18741608
        %v3885 = vmul.f32 %v3876, %v3884
        %v3886 = vadd.f32 %v3885, 1.1283791
        %v3887 = vmul.f32 %v3594, %v3886
        %v3888 = vmul.f32 %v3876, 3.8918573e-05
        %v3889 = vadd.f32 %v3888, 0.001143296
        %v3890 = vmul.f32 %v3876, %v3889
        %v3891 = vadd.f32 %v3890, 0.014752088
        %v3892 = vmul.f32 %v3876, %v3891
        %v3893 = vadd.f32 %v3892, 0.112945676
        %v3894 = vmul.f32 %v3876, %v3893
        %v3895 = vadd.f32 %v3894, 0.4994258
        %v3896 = vmul.f32 %v3876, %v3895
        %v3897 = vadd.f32 %v3896, 1.0
        %v3898 = vrcp.pop %v3897
        %v3899 = vmul.f32 %v3897, %v3898
        %v3900 = vsub.f32 1.0, %v3899
        %v3901 = vmul.f32 %v3898, %v3900
        %v3902 = vadd.f32 %v3898, %v3901
        %vm3903 = vweird.f32 %v3897
        %vm3904 = vweird.f32 %v3898
        %vm3905 = vmor %vm3903, %vm3904
        %v3906 = vsel %vm3905, %v3898, %v3902
        %v3907 = vand.u32 2147483647, %v3897
        %vm3908 = vcmp.eq.f32.partialorder %v3907, 8.507059e+37
        %v3909 = vand.u32 %v3897, 2147483648
        %v3910 = vor.u32 1.1754944e-38, %v3909
        %v3911 = vsel %vm3908, %v3910, %v3906
        %v3912 = vmul.f32 %v3887, %v3911
        %v3913 = vmin.f32 %v3912, 1.0
        %v3914 = vmax.f32 %v3913, -1.0
        %v3915 = vadd.f32 %v3634, 1.0
        %v3916 = vadd.f32 %v3674, 1.0
        %v3917 = vadd.f32 %v3714, 1.0
        %v3918 = vadd.f32 %v3754, 1.0
        %v3919 = vadd.f32 %v3794, 1.0
        %v3920 = vadd.f32 %v3834, 1.0
        %v3921 = vadd.f32 %v3874, 1.0
        %v3922 = vadd.f32 %v3914, 1.0
        %v3923 = vmul.f32 %v3579, %v3915
        %v3924 = vmul.f32 %v3580, %v3916
        %v3925 = vmul.f32 %v3581, %v3917
        %v3926 = vmul.f32 %v3582, %v3918
        %v3927 = vmul.f32 %v3583, %v3919
        %v3928 = vmul.f32 %v3584, %v3920
        %v3929 = vmul.f32 %v3585, %v3921
        %v3930 = vmul.f32 %v3586, %v3922
        %v3931 = vld [vmem:[%s9] sm:$0xff]
        %v3932 = vld [vmem:[%s9 + $0x8] sm:$0xff]
        %v3933 = vld [vmem:[%s9 + $0x10] sm:$0xff]
        %v3934 = vld [vmem:[%s9 + $0x18] sm:$0xff]
        %v3935 = vld [vmem:[%s9 + $0x20] sm:$0xff]
        %v3936 = vld [vmem:[%s9 + $0x28] sm:$0xff]
        %v3937 = vld [vmem:[%s9 + $0x30] sm:$0xff]
        %v3938 = vld [vmem:[%s9 + $0x38] sm:$0xff]
        %vm3939 = vcmask 523264
        %v3941 = vsel %vm3939, %v3923, 0
        %v3944 = vsel %vm3939, %v3924, 0
        %v3947 = vsel %vm3939, %v3925, 0
        %v3950 = vsel %vm3939, %v3926, 0
        %v3953 = vsel %vm3939, %v3927, 0
        %v3956 = vsel %vm3939, %v3928, 0
        %v3959 = vsel %vm3939, %v3929, 0
        %v3962 = vsel %vm3939, %v3930, 0
        %3964 = vmatpush.msra.mxu0 0.0
        %3965 = vmatpush.msra.mxu0 0.0
        %3966 = vmatpush.msra.mxu0 0.0
        %3967 = vmatpush.msra.mxu0 0.0
        %3968 = vmatpush.msra.mxu0 0.0
        %3969 = vmatpush.msra.mxu0 0.0
        %3970 = vmatpush.msra.mxu0 0.0
        %3971 = vmatpush.msra.mxu0 0.0
        %3972 = vmatpush.msra.mxu0 %v3938
        %3973 = vmatpush.msra.mxu0 %v3937
        %3974 = vmatpush.msra.mxu0 %v3936
        %3975 = vmatpush.msra.mxu0 %v3935
        %3976 = vmatpush.msra.mxu0 %v3934
        %3977 = vmatpush.msra.mxu0 %v3933
        %3978 = vmatpush.msra.mxu0 %v3932
        %3979 = vmatpush.msra.mxu0 %v3931
        %3980 = vmatmul.f32.gmra.mxu0 %v3941
        %v3981 = vpop.f32.mrf.mxu0
        %v3982 = vadd.f32 0.0, %v3981
        %3983 = vmatmul.f32.gmra.mxu0 %v3944
        %v3984 = vpop.f32.mrf.mxu0
        %v3985 = vadd.f32 0.0, %v3984
        %3986 = vmatmul.f32.gmra.mxu0 %v3947
        %v3987 = vpop.f32.mrf.mxu0
        %v3988 = vadd.f32 0.0, %v3987
        %3989 = vmatmul.f32.gmra.mxu0 %v3950
        %v3990 = vpop.f32.mrf.mxu0
        %v3991 = vadd.f32 0.0, %v3990
        %3992 = vmatmul.f32.gmra.mxu0 %v3953
        %v3993 = vpop.f32.mrf.mxu0
        %v3994 = vadd.f32 0.0, %v3993
        %3995 = vmatmul.f32.gmra.mxu0 %v3956
        %v3996 = vpop.f32.mrf.mxu0
        %v3997 = vadd.f32 0.0, %v3996
        %3998 = vmatmul.f32.gmra.mxu0 %v3959
        %v3999 = vpop.f32.mrf.mxu0
        %v4000 = vadd.f32 0.0, %v3999
        %4001 = vmatmul.f32.gmra.mxu0 %v3962
        %v4002 = vpop.f32.mrf.mxu0
        %v4003 = vadd.f32 0.0, %v4002
        %4004 = vdwg.mxu0
        %v4005 = vadd.f32 %v3502, %v3982
        %v4006 = vadd.f32 %v3503, %v3985
        %v4007 = vadd.f32 %v3504, %v3988
        %v4008 = vadd.f32 %v3505, %v3991
        %v4009 = vadd.f32 %v3506, %v3994
        %v4010 = vadd.f32 %v3507, %v3997
        %v4011 = vadd.f32 %v3508, %v4000
        %v4012 = vadd.f32 %v3509, %v4003
        %v4013 = vld [vmem:[%s12] sm:$0x1]
        %v4014 = vld [vmem:[%s13] sm:$0x1]
        %v4015 = vsel %vm582, %v4005, 0.0
        %4016 = vadd.xlane.f32.xlu0 %v4015
        %v4017 = vpop.xlane.xlu0 %4016
        %v4018 = vsel %vm582, %v4006, 0.0
        %4019 = vadd.xlane.f32.xlu0 %v4018
        %v4020 = vpop.xlane.xlu0 %4019
        %v4021 = vsel %vm582, %v4007, 0.0
        %4022 = vadd.xlane.f32.xlu0 %v4021
        %v4023 = vpop.xlane.xlu0 %4022
        %v4024 = vsel %vm582, %v4008, 0.0
        %4025 = vadd.xlane.f32.xlu0 %v4024
        %v4026 = vpop.xlane.xlu0 %4025
        %v4027 = vsel %vm582, %v4009, 0.0
        %4028 = vadd.xlane.f32.xlu0 %v4027
        %v4029 = vpop.xlane.xlu0 %4028
        %v4030 = vsel %vm582, %v4010, 0.0
        %4031 = vadd.xlane.f32.xlu0 %v4030
        %v4032 = vpop.xlane.xlu0 %4031
        %v4033 = vsel %vm582, %v4011, 0.0
        %4034 = vadd.xlane.f32.xlu0 %v4033
        %v4035 = vpop.xlane.xlu0 %4034
        %v4036 = vsel %vm582, %v4012, 0.0
        %4037 = vadd.xlane.f32.xlu0 %v4036
        %v4038 = vpop.xlane.xlu0 %4037
        %v4039 = vmul.f32 %v4017, %v3335
        %v4040 = vmul.f32 %v4020, %v3335
        %v4041 = vmul.f32 %v4023, %v3335
        %v4042 = vmul.f32 %v4026, %v3335
        %v4043 = vmul.f32 %v4029, %v3335
        %v4044 = vmul.f32 %v4032, %v3335
        %v4045 = vmul.f32 %v4035, %v3335
        %v4046 = vmul.f32 %v4038, %v3335
        %v4047 = vsub.f32 %v4005, %v4039
        %v4048 = vsub.f32 %v4006, %v4040
        %v4049 = vsub.f32 %v4007, %v4041
        %v4050 = vsub.f32 %v4008, %v4042
        %v4051 = vsub.f32 %v4009, %v4043
        %v4052 = vsub.f32 %v4010, %v4044
        %v4053 = vsub.f32 %v4011, %v4045
        %v4054 = vsub.f32 %v4012, %v4046
        %v4055 = vmul.f32 %v4047, %v4047
        %v4056 = vmul.f32 %v4048, %v4048
        %v4057 = vmul.f32 %v4049, %v4049
        %v4058 = vmul.f32 %v4050, %v4050
        %v4059 = vmul.f32 %v4051, %v4051
        %v4060 = vmul.f32 %v4052, %v4052
        %v4061 = vmul.f32 %v4053, %v4053
        %v4062 = vmul.f32 %v4054, %v4054
        %v4063 = vsel %vm582, %v4055, 0.0
        %4064 = vadd.xlane.f32.xlu0 %v4063
        %v4065 = vpop.xlane.xlu0 %4064
        %v4066 = vsel %vm582, %v4056, 0.0
        %4067 = vadd.xlane.f32.xlu0 %v4066
        %v4068 = vpop.xlane.xlu0 %4067
        %v4069 = vsel %vm582, %v4057, 0.0
        %4070 = vadd.xlane.f32.xlu0 %v4069
        %v4071 = vpop.xlane.xlu0 %4070
        %v4072 = vsel %vm582, %v4058, 0.0
        %4073 = vadd.xlane.f32.xlu0 %v4072
        %v4074 = vpop.xlane.xlu0 %4073
        %v4075 = vsel %vm582, %v4059, 0.0
        %4076 = vadd.xlane.f32.xlu0 %v4075
        %v4077 = vpop.xlane.xlu0 %4076
        %v4078 = vsel %vm582, %v4060, 0.0
        %4079 = vadd.xlane.f32.xlu0 %v4078
        %v4080 = vpop.xlane.xlu0 %4079
        %v4081 = vsel %vm582, %v4061, 0.0
        %4082 = vadd.xlane.f32.xlu0 %v4081
        %v4083 = vpop.xlane.xlu0 %4082
        %v4084 = vsel %vm582, %v4062, 0.0
        %4085 = vadd.xlane.f32.xlu0 %v4084
        %v4086 = vpop.xlane.xlu0 %4085
        %v4087 = vmul.f32 %v4065, %v3335
        %v4088 = vmul.f32 %v4068, %v3335
        %v4089 = vmul.f32 %v4071, %v3335
        %v4090 = vmul.f32 %v4074, %v3335
        %v4091 = vmul.f32 %v4077, %v3335
        %v4092 = vmul.f32 %v4080, %v3335
        %v4093 = vmul.f32 %v4083, %v3335
        %v4094 = vmul.f32 %v4086, %v3335
        %v4095 = vadd.f32 %v4087, 1e-05
        %v4096 = vadd.f32 %v4088, 1e-05
        %v4097 = vadd.f32 %v4089, 1e-05
        %v4098 = vadd.f32 %v4090, 1e-05
        %v4099 = vadd.f32 %v4091, 1e-05
        %v4100 = vadd.f32 %v4092, 1e-05
        %v4101 = vadd.f32 %v4093, 1e-05
        %v4102 = vadd.f32 %v4094, 1e-05
        %v4103 = vrsqrt.pop %v4095
        %v4104 = vmul.f32 %v4103, %v4095
        %v4105 = vmul.f32 %v4104, %v4103
        %v4106 = vmul.f32 0.5, %v4105
        %v4107 = vsub.f32 1.5, %v4106
        %v4108 = vmul.f32 %v4103, %v4107
        %vm4109 = vweird.f32 %v4095
        %vm4110 = vweird.f32 %v4103
        %vm4111 = vmor %vm4109, %vm4110
        %v4112 = vsel %vm4111, %v4103, %v4108
        %v4113 = vrsqrt.pop %v4096
        %v4114 = vmul.f32 %v4113, %v4096
        %v4115 = vmul.f32 %v4114, %v4113
        %v4116 = vmul.f32 0.5, %v4115
        %v4117 = vsub.f32 1.5, %v4116
        %v4118 = vmul.f32 %v4113, %v4117
        %vm4119 = vweird.f32 %v4096
        %vm4120 = vweird.f32 %v4113
        %vm4121 = vmor %vm4119, %vm4120
        %v4122 = vsel %vm4121, %v4113, %v4118
        %v4123 = vrsqrt.pop %v4097
        %v4124 = vmul.f32 %v4123, %v4097
        %v4125 = vmul.f32 %v4124, %v4123
        %v4126 = vmul.f32 0.5, %v4125
        %v4127 = vsub.f32 1.5, %v4126
        %v4128 = vmul.f32 %v4123, %v4127
        %vm4129 = vweird.f32 %v4097
        %vm4130 = vweird.f32 %v4123
        %vm4131 = vmor %vm4129, %vm4130
        %v4132 = vsel %vm4131, %v4123, %v4128
        %v4133 = vrsqrt.pop %v4098
        %v4134 = vmul.f32 %v4133, %v4098
        %v4135 = vmul.f32 %v4134, %v4133
        %v4136 = vmul.f32 0.5, %v4135
        %v4137 = vsub.f32 1.5, %v4136
        %v4138 = vmul.f32 %v4133, %v4137
        %vm4139 = vweird.f32 %v4098
        %vm4140 = vweird.f32 %v4133
        %vm4141 = vmor %vm4139, %vm4140
        %v4142 = vsel %vm4141, %v4133, %v4138
        %v4143 = vrsqrt.pop %v4099
        %v4144 = vmul.f32 %v4143, %v4099
        %v4145 = vmul.f32 %v4144, %v4143
        %v4146 = vmul.f32 0.5, %v4145
        %v4147 = vsub.f32 1.5, %v4146
        %v4148 = vmul.f32 %v4143, %v4147
        %vm4149 = vweird.f32 %v4099
        %vm4150 = vweird.f32 %v4143
        %vm4151 = vmor %vm4149, %vm4150
        %v4152 = vsel %vm4151, %v4143, %v4148
        %v4153 = vrsqrt.pop %v4100
        %v4154 = vmul.f32 %v4153, %v4100
        %v4155 = vmul.f32 %v4154, %v4153
        %v4156 = vmul.f32 0.5, %v4155
        %v4157 = vsub.f32 1.5, %v4156
        %v4158 = vmul.f32 %v4153, %v4157
        %vm4159 = vweird.f32 %v4100
        %vm4160 = vweird.f32 %v4153
        %vm4161 = vmor %vm4159, %vm4160
        %v4162 = vsel %vm4161, %v4153, %v4158
        %v4163 = vrsqrt.pop %v4101
        %v4164 = vmul.f32 %v4163, %v4101
        %v4165 = vmul.f32 %v4164, %v4163
        %v4166 = vmul.f32 0.5, %v4165
        %v4167 = vsub.f32 1.5, %v4166
        %v4168 = vmul.f32 %v4163, %v4167
        %vm4169 = vweird.f32 %v4101
        %vm4170 = vweird.f32 %v4163
        %vm4171 = vmor %vm4169, %vm4170
        %v4172 = vsel %vm4171, %v4163, %v4168
        %v4173 = vrsqrt.pop %v4102
        %v4174 = vmul.f32 %v4173, %v4102
        %v4175 = vmul.f32 %v4174, %v4173
        %v4176 = vmul.f32 0.5, %v4175
        %v4177 = vsub.f32 1.5, %v4176
        %v4178 = vmul.f32 %v4173, %v4177
        %vm4179 = vweird.f32 %v4102
        %vm4180 = vweird.f32 %v4173
        %vm4181 = vmor %vm4179, %vm4180
        %v4182 = vsel %vm4181, %v4173, %v4178
        %v4183 = vmul.f32 %v4047, %v4112
        %v4184 = vmul.f32 %v4048, %v4122
        %v4185 = vmul.f32 %v4049, %v4132
        %v4186 = vmul.f32 %v4050, %v4142
        %v4187 = vmul.f32 %v4051, %v4152
        %v4188 = vmul.f32 %v4052, %v4162
        %v4189 = vmul.f32 %v4053, %v4172
        %v4190 = vmul.f32 %v4054, %v4182
        %v4192 = vperm.slane %v4013, 0
        %v4194 = vmul.f32 %v4183, %v4192
        %v4195 = vmul.f32 %v4184, %v4192
        %v4196 = vmul.f32 %v4185, %v4192
        %v4197 = vmul.f32 %v4186, %v4192
        %v4198 = vmul.f32 %v4187, %v4192
        %v4199 = vmul.f32 %v4188, %v4192
        %v4200 = vmul.f32 %v4189, %v4192
        %v4201 = vmul.f32 %v4190, %v4192
        %v4203 = vperm.slane %v4014, 0
        %v4205 = vadd.f32 %v4194, %v4203
        %v4206 = vadd.f32 %v4195, %v4203
        %v4207 = vadd.f32 %v4196, %v4203
        %v4208 = vadd.f32 %v4197, %v4203
        %v4209 = vadd.f32 %v4198, %v4203
        %v4210 = vadd.f32 %v4199, %v4203
        %v4211 = vadd.f32 %v4200, %v4203
        %v4212 = vadd.f32 %v4201, %v4203
        %4213 = vst.msk [vmem:[%s546] sm:$0xff] %vm582, %v4205
        %4214 = vst.msk [vmem:[%s546 + $0x8] sm:$0xff] %vm582, %v4206
        %4215 = vst.msk [vmem:[%s546 + $0x10] sm:$0xff] %vm582, %v4207
        %4216 = vst.msk [vmem:[%s546 + $0x18] sm:$0xff] %vm582, %v4208
        %4217 = vst.msk [vmem:[%s546 + $0x20] sm:$0xff] %vm582, %v4209
        %4218 = vst.msk [vmem:[%s546 + $0x28] sm:$0xff] %vm582, %v4210
        %4219 = vst.msk [vmem:[%s546 + $0x30] sm:$0xff] %vm582, %v4211
        %4220 = vst.msk [vmem:[%s546 + $0x38] sm:$0xff] %vm582, %v4212
        %s4221 = sand.u32 %s346, 1
        %s4222 = scalar_lea.sflag [#allocation5], %s4221
        %s4223 = sand.u32 %s346, 1
        %s4224 = smul.addr %s4223, 64
        %s4225 = scalar_lea.vmem [#allocation9], %s4224
        // Predicated region
        $region89: #{tpu_custom_call.1} parent=75 // pred_check
          %p4226 = pneg %p356
        $region90: #{tpu_custom_call.1} parent=75 // pred_check_branch
          %4228 = sbr.rel (%p4226) target = $region92
        $region91: #{tpu_custom_call.1} parent=75 // pred_region
          %s4229 = smul.u32 8, %s34
          %4231 = vsyncadd %s4222, 0
          %s4232 = smul.addr %s4229, 8
          %s4233 = scalar_lea.hbm %s14, %s4232
          %s4234 = sshll.u32 %s4225, 4
          %s4235 = int_to_ptr.vmem [resolvable:$true] %s4234
          %s4236 = sshll.u32 %s4233, 4
          %s4237 = int_to_ptr.hbm [resolvable:$true] %s4236
          %4242 = dma.vmem_to_hbm [thread:$0]  %s4235, 1024, %s4237, %s4222, 128, 128, 8
        $region92: #{tpu_custom_call.1} parent=75 // pred_fallthru
          _
      $region76: #{tpu_custom_call.1} parent=5 // pred_fallthru
        _
      %p4243 = scmp.le.s32.totalorder 2, %s29
      // Predicated region
      $region93: #{tpu_custom_call.1} parent=5 // pred_check
        %p4244 = pneg %p4243
      $region94: #{tpu_custom_call.1} parent=5 // pred_check_branch
        %4246 = sbr.rel (%p4244) target = $region96
      $region95: #{tpu_custom_call.1} parent=5 // pred_region
        %s4247 = ssub.s32 %s29, 2
        // Predicated region
        $region97: #{tpu_custom_call.1} parent=95 // pred_check
          %p4248 = pneg %p362
        $region98: #{tpu_custom_call.1} parent=95 // pred_check_branch
          %4250 = sbr.rel (%p4248) target = $region100
        $region99: #{tpu_custom_call.1} parent=95 // pred_region
          %s4251 = sand.u32 %s347, 1
          %s4252 = scalar_lea.sflag [#allocation5], %s4251
          %s4253 = sand.u32 %s347, 1
          %s4254 = smul.addr %s4253, 64
          %s4255 = scalar_lea.vmem [#allocation9], %s4254
          %4257 = dma.done %s4252, 1024
        $region100: #{tpu_custom_call.1} parent=95 // pred_fallthru
          _
      $region96: #{tpu_custom_call.1} parent=5 // pred_fallthru
        _
    $region6: #{tpu_custom_call.1} parent=1 // loop_footer
      %s33 = sadd.s32 1, %s29
    $region7: #{tpu_custom_call.1} parent=1 // loop_footer_branch
      %28 = sbr.rel target = $region3
    $region8: #{tpu_custom_call.1} parent=1 // loop_exit
      _
    %4258 = vsyncpa [#allocation4], 1
    %s4259 = scalar_lea.sflag [#allocation4], 1
    %4260 = vsyncpa %s4259, 1
    %4261 = vsyncpa [#allocation7], 1
    %s4262 = scalar_lea.sflag [#allocation7], 1
    %4263 = vsyncpa %s4262, 1
    %4264 = vsyncpa [#allocation5], 1
    %s4265 = scalar_lea.sflag [#allocation5], 1
    %4266 = vsyncpa %s4265, 1

</llo_original>
